<compile_context>
chip_gen: v7x
topology: tpu7x:2x2x1
jax: 0.10.0
libtpu: 0.0.40
codegen_flags: <defaults>
</compile_context>

<pallas_src>
import functools
import math

import jax
import jax.numpy as jnp
from jax.experimental import pallas as pl
from jax.experimental.pallas import tpu as pltpu

EPS = 1e-6
NEG_INF = -1e9


# ----------------------------- kernel helpers -------------------------------

def _layernorm(x, a, b):
    # torch: mean over last dim, std with Bessel correction (n-1), eps on std.
    n = x.shape[-1]
    mean = jnp.mean(x, axis=-1, keepdims=True)
    var = jnp.sum((x - mean) ** 2, axis=-1, keepdims=True) * (1.0 / (n - 1))
    std = jnp.sqrt(var)
    inv = pl.reciprocal(std + EPS, approx=True)       # EUP, frees the VALU slot
    return a * (x - mean) * inv + b


def _attention(q, k, v, keep, wo_ref, bo, bb, tq, tk, n_heads):
    """Multi-head attention core.

    q: [bb*tq, D] f32, k/v: [bb*tk, D] f32, keep: bool broadcastable to
    [bb, tq, tk] (True = attend). wo_ref: [H, dk, D] bf16 output projection.
    Returns [bb*tq, D] f32.
    """
    d_model = q.shape[-1]
    dk = d_model // n_heads
    scale = 1.0 / math.sqrt(dk)

    qb = q.astype(jnp.bfloat16).reshape(bb, tq, d_model)
    kb = k.astype(jnp.bfloat16).reshape(bb, tk, d_model)
    vb = v.astype(jnp.bfloat16).reshape(bb, tk, d_model)

    out = jnp.zeros((bb * tq, d_model), jnp.float32)
    for h in range(n_heads):  # static unroll; each iter is batched over `bb`
        sl = slice(h * dk, (h + 1) * dk)
        s = jnp.einsum("btd,bsd->bts", qb[:, :, sl], kb[:, :, sl],
                       preferred_element_type=jnp.float32) * scale
        s = jnp.where(keep, s, NEG_INF)
        s = s - jnp.max(s, axis=-1, keepdims=True)
        p = jnp.exp(s)
        p = p * pl.reciprocal(jnp.sum(p, axis=-1, keepdims=True), approx=True)
        ctx = jnp.einsum("bts,bsd->btd", p.astype(jnp.bfloat16), vb[:, :, sl],
                         preferred_element_type=jnp.float32)      # [bb, tq, dk]
        # Accumulate through this head's slice of W_o (no lane-axis concat).
        out = out + jnp.dot(ctx.reshape(bb * tq, dk).astype(jnp.bfloat16),
                            wo_ref[h],
                            preferred_element_type=jnp.float32)
    return out + bo


# --------------------------------- kernel -----------------------------------

def decoder_layer_kernel(x_ref, mem_ref, srcm_ref,
                         wqkv_s_ref, bqkv_s_ref, wo_s_ref, bo_s_ref,
                         wq_c_ref, bq_c_ref, wkv_c_ref, bkv_c_ref,
                         wo_c_ref, bo_c_ref,
                         w1_ref, b1_ref, w2_ref, b2_ref,
                         lna_ref, lnb_ref,
                         o_ref, *, n_heads):
    bb, t, d = x_ref.shape
    s_len = mem_ref.shape[1]

    x = x_ref[...].reshape(bb * t, d)            # f32 residual stream
    mem = mem_ref[...].reshape(bb * s_len, d)    # encoder memory (raw)
    src_keep = srcm_ref[...] > 0.0               # [bb, 1, S] -> broadcast over T

    # -- sublayer 0: x + self_attn(norm(x), norm(x), norm(x), causal_mask) ----
    xn = _layernorm(x, lna_ref[0], lnb_ref[0])
    qkv = (jnp.dot(xn.astype(jnp.bfloat16), wqkv_s_ref[...],
                   preferred_element_type=jnp.float32) + bqkv_s_ref[...])
    row = jax.lax.broadcasted_iota(jnp.int32, (t, t), 0)
    col = jax.lax.broadcasted_iota(jnp.int32, (t, t), 1)
    causal_keep = (row >= col)[None, :, :]       # [1, T, T], generated in-kernel
    x = x + _attention(qkv[:, :d], qkv[:, d:2 * d], qkv[:, 2 * d:],
                       causal_keep, wo_s_ref, bo_s_ref[...],
                       bb, t, t, n_heads)

    # -- sublayer 1: x + src_attn(norm(x), mem, mem, src_mask) ----------------
    xn = _layernorm(x, lna_ref[1], lnb_ref[1])
    q = (jnp.dot(xn.astype(jnp.bfloat16), wq_c_ref[...],
                 preferred_element_type=jnp.float32) + bq_c_ref[...])
    kv = (jnp.dot(mem.astype(jnp.bfloat16), wkv_c_ref[...],
                  preferred_element_type=jnp.float32) + bkv_c_ref[...])
    x = x + _attention(q, kv[:, :d], kv[:, d:],
                       src_keep, wo_c_ref, bo_c_ref[...],
                       bb, t, s_len, n_heads)

    # -- sublayer 2: x + feed_forward(norm(x)) --------------------------------
    xn = _layernorm(x, lna_ref[2], lnb_ref[2])
    hdn = jnp.maximum(jnp.dot(xn.astype(jnp.bfloat16), w1_ref[...],
                              preferred_element_type=jnp.float32) + b1_ref[...],
                      0.0)
    ff = jnp.dot(hdn.astype(jnp.bfloat16), w2_ref[...],
                 preferred_element_type=jnp.float32) + b2_ref[...]
    o_ref[...] = (x + ff).reshape(bb, t, d)


# -------------------------------- wrapper ------------------------------------

def _pick_block_b(batch, t):
    """Pick a batch-block size: smallest divisor of `batch` with >= 256 rows
    per block (fills the MXU M dim, keeps the grid long so it can be split
    across v7x's two TensorCores); falls back to the whole batch for tiny
    problems."""
    for bb in range(1, batch + 1):
        if batch % bb == 0 and bb * t >= 256:
            return bb
    return batch


@functools.partial(jax.jit, static_argnames=("n_heads",))
def decoder_layer(x, memory, src_mask, params, n_heads=4):
    B, T, D = x.shape
    S = memory.shape[1]
    F = params["w1"].shape[1]
    H = n_heads
    dk = D // H
    bf16 = jnp.bfloat16

    # --- fuse / repack weights in the wrapper (outside the kernel) -----------
    sw, sb = params["self_w"], params["self_b"]
    cw, cb = params["src_w"], params["src_b"]
    wqkv_s = jnp.concatenate([sw[0], sw[1], sw[2]], axis=1).astype(bf16)  # [D,3D]
    bqkv_s = jnp.concatenate([sb[0], sb[1], sb[2]])[None, :]              # [1,3D]
    wo_s = sw[3].reshape(H, dk, D).astype(bf16)                           # [H,dk,D]
    bo_s = sb[3][None, :]                                                 # [1,D]
    wq_c = cw[0].astype(bf16)                                             # [D,D]
    bq_c = cb[0][None, :]
    wkv_c = jnp.concatenate([cw[1], cw[2]], axis=1).astype(bf16)          # [D,2D]
    bkv_c = jnp.concatenate([cb[1], cb[2]])[None, :]                      # [1,2D]
    wo_c = cw[3].reshape(H, dk, D).astype(bf16)
    bo_c = cb[3][None, :]
    w1 = params["w1"].astype(bf16)
    b1 = params["b1"]
    w2 = params["w2"].astype(bf16)
    b2 = params["b2"]
    lna, lnb = params["ln_a"], params["ln_b"]

    block_b = _pick_block_b(B, T)
    grid = (B // block_b,)

    kernel = functools.partial(decoder_layer_kernel, n_heads=n_heads)

    def _full(shape):  # whole-array (grid-invariant) spec
        nd = len(shape)
        return pl.BlockSpec(shape, lambda b, _nd=nd: (0,) * _nd)

    grid_spec = pltpu.PrefetchScalarGridSpec(
        num_scalar_prefetch=0,
        grid=grid,
        in_specs=[
            pl.BlockSpec((block_b, T, D), lambda b: (b, 0, 0)),   # x block
            pl.BlockSpec((block_b, S, D), lambda b: (b, 0, 0)),   # memory block
            pl.BlockSpec((block_b, 1, S), lambda b: (b, 0, 0)),   # compact src key mask
            _full((D, 3 * D)), _full((1, 3 * D)),                 # self QKV
            _full((H, dk, D)), _full((1, D)),                     # self out proj
            _full((D, D)), _full((1, D)),                         # cross Q
            _full((D, 2 * D)), _full((1, 2 * D)),                 # cross KV
            _full((H, dk, D)), _full((1, D)),                     # cross out proj
            _full((D, F)), _full((1, F)),                         # FFN layer 1
            _full((F, D)), _full((1, D)),                         # FFN layer 2
            _full((3, D)), _full((3, D)),                         # LayerNorm a_2 / b_2
        ],
        out_specs=pl.BlockSpec((block_b, T, D), lambda b: (b, 0, 0)),
    )
    return pl.pallas_call(
        kernel,
        out_shape=jax.ShapeDtypeStruct((B, T, D), jnp.float32),
        grid_spec=grid_spec,
        compiler_params=pltpu.CompilerParams(
            dimension_semantics=("parallel",),
            vmem_limit_bytes=48 * 1024 * 1024,   # explicit; v7x only has 64 MiB
        ),
    )(x, memory, src_mask,
      wqkv_s, bqkv_s, wo_s, bo_s,
      wq_c, bq_c, wkv_c, bkv_c, wo_c, bo_c,
      w1, b1, w2, b2, lna, lnb)


# ------------------------- pure-JAX f32 reference ----------------------------

def _layernorm_ref(x, a, b):
    n = x.shape[-1]
    mean = jnp.mean(x, axis=-1, keepdims=True)
    var = jnp.sum((x - mean) ** 2, axis=-1, keepdims=True) / (n - 1)
    std = jnp.sqrt(var)
    return a * (x - mean) / (std + EPS) + b


def _mha_ref(q_in, k_in, v_in, mask, w, bias, n_heads):
    D = q_in.shape[-1]
    dk = D // n_heads
    scale = 1.0 / math.sqrt(dk)
    q = q_in @ w[0] + bias[0]
    k = k_in @ w[1] + bias[1]
    v = v_in @ w[2] + bias[2]
    outs = []
    for h in range(n_heads):
        sl = slice(h * dk, (h + 1) * dk)
        s = (q[:, sl] @ k[:, sl].T) * scale
        s = jnp.where(mask > 0.0, s, NEG_INF)
        p = jax.nn.softmax(s, axis=-1)
        outs.append(p @ v[:, sl])
    return jnp.concatenate(outs, axis=-1) @ w[3] + bias[3]


def _reference(x, memory, src_mask, params, n_heads):
    T = x.shape[1]
    causal = jnp.tril(jnp.ones((T, T), jnp.float32))

    def one(xb, mb, sm):
        lna, lnb = params["ln_a"], params["ln_b"]
        xn = _layernorm_ref(xb, lna[0], lnb[0])
        xb = xb + _mha_ref(xn, xn, xn, causal,
                           params["self_w"], params["self_b"], n_heads)
        xn = _layernorm_ref(xb, lna[1], lnb[1])
        xb = xb + _mha_ref(xn, mb, mb, sm,
                           params["src_w"], params["src_b"], n_heads)
        xn = _layernorm_ref(xb, lna[2], lnb[2])
        hid = jnp.maximum(xn @ params["w1"] + params["b1"], 0.0)
        return xb + hid @ params["w2"] + params["b2"]

    return jax.vmap(one)(x, memory, src_mask)


# ----------------------------------- test ------------------------------------

if __name__ == "__main__":
    B, T, S, D, F, H = 2, 8, 8, 32, 64, 4
    key = jax.random.PRNGKey(0)
    keys = jax.random.split(key, 10)
    scale = 0.02
    params = {
        "self_w": jax.random.normal(keys[0], (4, D, D), jnp.float32) * scale,
        "self_b": jax.random.normal(keys[1], (4, D), jnp.float32) * scale,
        "src_w":  jax.random.normal(keys[2], (4, D, D), jnp.float32) * scale,
        "src_b":  jax.random.normal(keys[3], (4, D), jnp.float32) * scale,
        "w1":     jax.random.normal(keys[4], (D, F), jnp.float32) * scale,
        "b1":     jax.random.normal(keys[5], (1, F), jnp.float32) * scale,
        "w2":     jax.random.normal(keys[6], (F, D), jnp.float32) * scale,
        "b2":     jax.random.normal(keys[7], (1, D), jnp.float32) * scale,
        "ln_a":   jnp.ones((3, D), jnp.float32),   # LayerNorm a_2 init = ones
        "ln_b":   jnp.zeros((3, D), jnp.float32),  # LayerNorm b_2 init = zeros
    }
    x = jax.random.normal(keys[8], (B, T, D), jnp.float32)
    memory = jax.random.normal(keys[9], (B, S, D), jnp.float32)
    # compact source key mask [B, 1, S]; mask out the last 2 keys of batch 1
    src_mask = jnp.ones((B, 1, S), jnp.float32)
    src_mask = src_mask.at[1, 0, 6:].set(0.0)

    out = decoder_layer(x, memory, src_mask, params, n_heads=H)
    out = jax.block_until_ready(out)

    ref = _reference(x, memory, src_mask, params, H)
    assert out.shape == (B, T, D)
    # bf16 matmuls + approx reciprocals -> relaxed tolerance vs the f32 reference
    assert jnp.allclose(out, ref, atol=2e-2, rtol=2e-2), \
        float(jnp.max(jnp.abs(out - ref)))
    print("KERNEL_OK")
</pallas_src>

<mosaic_0001>
module attributes {stable_mosaic.version = 11 : i64} {
  func.func @decoder_layer_kernel(%arg0: i32, %arg1: memref<2x8x32xf32, #tpu.memory_space<vmem>>, %arg2: memref<2x8x32xf32, #tpu.memory_space<vmem>>, %arg3: memref<2x1x8xf32, #tpu.memory_space<vmem>>, %arg4: memref<32x96xbf16, #tpu.memory_space<vmem>>, %arg5: memref<1x96xf32, #tpu.memory_space<vmem>>, %arg6: memref<4x8x32xbf16, #tpu.memory_space<vmem>>, %arg7: memref<1x32xf32, #tpu.memory_space<vmem>>, %arg8: memref<32x32xbf16, #tpu.memory_space<vmem>>, %arg9: memref<1x32xf32, #tpu.memory_space<vmem>>, %arg10: memref<32x64xbf16, #tpu.memory_space<vmem>>, %arg11: memref<1x64xf32, #tpu.memory_space<vmem>>, %arg12: memref<4x8x32xbf16, #tpu.memory_space<vmem>>, %arg13: memref<1x32xf32, #tpu.memory_space<vmem>>, %arg14: memref<32x64xbf16, #tpu.memory_space<vmem>>, %arg15: memref<1x64xf32, #tpu.memory_space<vmem>>, %arg16: memref<64x32xbf16, #tpu.memory_space<vmem>>, %arg17: memref<1x32xf32, #tpu.memory_space<vmem>>, %arg18: memref<3x32xf32, #tpu.memory_space<vmem>>, %arg19: memref<3x32xf32, #tpu.memory_space<vmem>>, %arg20: memref<2x8x32xf32, #tpu.memory_space<vmem>>) attributes {dimension_semantics = [#tpu.dimension_semantics<parallel>], iteration_bounds = array<i64: 1>, scalar_prefetch = 0 : i64, scratch_operands = 0 : i64, tpu.core_type = #tpu.core_type<tc>, window_params = [{transform_indices = @transform_0, window_bounds = array<i64: 2, 8, 32>}, {transform_indices = @transform_1, window_bounds = array<i64: 2, 8, 32>}, {transform_indices = @transform_2, window_bounds = array<i64: 2, 1, 8>}, {pipeline_mode = #tpu.pipeline_mode<synchronous>, transform_indices = @transform_3, window_bounds = array<i64: 32, 96>}, {pipeline_mode = #tpu.pipeline_mode<synchronous>, transform_indices = @transform_4, window_bounds = array<i64: 1, 96>}, {pipeline_mode = #tpu.pipeline_mode<synchronous>, transform_indices = @transform_5, window_bounds = array<i64: 4, 8, 32>}, {pipeline_mode = #tpu.pipeline_mode<synchronous>, transform_indices = @transform_6, window_bounds = array<i64: 1, 32>}, {pipeline_mode = #tpu.pipeline_mode<synchronous>, transform_indices = @transform_7, window_bounds = array<i64: 32, 32>}, {pipeline_mode = #tpu.pipeline_mode<synchronous>, transform_indices = @transform_8, window_bounds = array<i64: 1, 32>}, {pipeline_mode = #tpu.pipeline_mode<synchronous>, transform_indices = @transform_9, window_bounds = array<i64: 32, 64>}, {pipeline_mode = #tpu.pipeline_mode<synchronous>, transform_indices = @transform_10, window_bounds = array<i64: 1, 64>}, {pipeline_mode = #tpu.pipeline_mode<synchronous>, transform_indices = @transform_11, window_bounds = array<i64: 4, 8, 32>}, {pipeline_mode = #tpu.pipeline_mode<synchronous>, transform_indices = @transform_12, window_bounds = array<i64: 1, 32>}, {pipeline_mode = #tpu.pipeline_mode<synchronous>, transform_indices = @transform_13, window_bounds = array<i64: 32, 64>}, {pipeline_mode = #tpu.pipeline_mode<synchronous>, transform_indices = @transform_14, window_bounds = array<i64: 1, 64>}, {pipeline_mode = #tpu.pipeline_mode<synchronous>, transform_indices = @transform_15, window_bounds = array<i64: 64, 32>}, {pipeline_mode = #tpu.pipeline_mode<synchronous>, transform_indices = @transform_16, window_bounds = array<i64: 1, 32>}, {pipeline_mode = #tpu.pipeline_mode<synchronous>, transform_indices = @transform_17, window_bounds = array<i64: 3, 32>}, {pipeline_mode = #tpu.pipeline_mode<synchronous>, transform_indices = @transform_18, window_bounds = array<i64: 3, 32>}, {transform_indices = @transform_19, window_bounds = array<i64: 2, 8, 32>}]} {
    %c0 = arith.constant 0 : index
    %c0_0 = arith.constant 0 : index
    %c0_1 = arith.constant 0 : index
    %0 = vector.load %arg1[%c0, %c0_0, %c0_1] : memref<2x8x32xf32, #tpu.memory_space<vmem>>, vector<2x8x32xf32>
    %1 = vector.shape_cast %0 : vector<2x8x32xf32> to vector<16x32xf32>
    %c0_2 = arith.constant 0 : index
    %c0_3 = arith.constant 0 : index
    %c0_4 = arith.constant 0 : index
    %2 = vector.load %arg2[%c0_2, %c0_3, %c0_4] : memref<2x8x32xf32, #tpu.memory_space<vmem>>, vector<2x8x32xf32>
    %3 = vector.shape_cast %2 : vector<2x8x32xf32> to vector<16x32xf32>
    %c0_5 = arith.constant 0 : index
    %c0_6 = arith.constant 0 : index
    %c0_7 = arith.constant 0 : index
    %4 = vector.load %arg3[%c0_5, %c0_6, %c0_7] : memref<2x1x8xf32, #tpu.memory_space<vmem>>, vector<2x1x8xf32>
    %cst = arith.constant 0.000000e+00 : f32
    %5 = vector.broadcast %cst : f32 to vector<2x1x8xf32>
    %6 = arith.cmpf ogt, %4, %5 : vector<2x1x8xf32>
    %c0_8 = arith.constant 0 : index
    %c0_9 = arith.constant 0 : index
    %7 = vector.load %arg18[%c0_8, %c0_9] : memref<3x32xf32, #tpu.memory_space<vmem>>, vector<1x32xf32>
    %8 = vector.shape_cast %7 : vector<1x32xf32> to vector<32xf32>
    %c0_10 = arith.constant 0 : index
    %c0_11 = arith.constant 0 : index
    %9 = vector.load %arg19[%c0_10, %c0_11] : memref<3x32xf32, #tpu.memory_space<vmem>>, vector<1x32xf32>
    %10 = vector.shape_cast %9 : vector<1x32xf32> to vector<32xf32>
    %cst_12 = arith.constant dense<0.000000e+00> : vector<16xf32>
    %11 = vector.multi_reduction <add>, %1, %cst_12 [1] : vector<16x32xf32> to vector<16xf32>
    %12 = vector.shape_cast %11 : vector<16xf32> to vector<16x1xf32>
    %cst_13 = arith.constant 3.200000e+01 : f32
    %13 = vector.broadcast %cst_13 : f32 to vector<16x1xf32>
    %14 = arith.divf %12, %13 : vector<16x1xf32>
    %15 = vector.broadcast %14 : vector<16x1xf32> to vector<16x32xf32>
    %16 = arith.subf %1, %15 : vector<16x32xf32>
    %17 = arith.mulf %16, %16 : vector<16x32xf32>
    %cst_14 = arith.constant dense<0.000000e+00> : vector<16xf32>
    %18 = vector.multi_reduction <add>, %17, %cst_14 [1] : vector<16x32xf32> to vector<16xf32>
    %19 = vector.shape_cast %18 : vector<16xf32> to vector<16x1xf32>
    %cst_15 = arith.constant 0.0322580636 : f32
    %20 = vector.broadcast %cst_15 : f32 to vector<16x1xf32>
    %21 = arith.mulf %19, %20 : vector<16x1xf32>
    %22 = math.sqrt %21 : vector<16x1xf32>
    %cst_16 = arith.constant 9.99999997E-7 : f32
    %23 = vector.broadcast %cst_16 : f32 to vector<16x1xf32>
    %24 = arith.addf %22, %23 : vector<16x1xf32>
    %25 = tpu.reciprocal %24 {approx = true} : vector<16x1xf32> -> vector<16x1xf32>
    %26 = vector.broadcast %14 : vector<16x1xf32> to vector<16x32xf32>
    %27 = arith.subf %1, %26 : vector<16x32xf32>
    %28 = vector.shape_cast %8 : vector<32xf32> to vector<1x32xf32>
    %29 = vector.broadcast %28 : vector<1x32xf32> to vector<16x32xf32>
    %30 = arith.mulf %29, %27 : vector<16x32xf32>
    %31 = vector.broadcast %25 : vector<16x1xf32> to vector<16x32xf32>
    %32 = arith.mulf %30, %31 : vector<16x32xf32>
    %33 = vector.shape_cast %10 : vector<32xf32> to vector<1x32xf32>
    %34 = vector.broadcast %33 : vector<1x32xf32> to vector<16x32xf32>
    %35 = arith.addf %32, %34 : vector<16x32xf32>
    %36 = arith.truncf %35 : vector<16x32xf32> to vector<16x32xbf16>
    %c0_17 = arith.constant 0 : index
    %c0_18 = arith.constant 0 : index
    %37 = vector.load %arg4[%c0_17, %c0_18] : memref<32x96xbf16, #tpu.memory_space<vmem>>, vector<32x96xbf16>
    %cst_19 = arith.constant dense<0.000000e+00> : vector<16x96xf32>
    %38 = tpu.matmul %36, %37, %cst_19 {dimension_numbers = #tpu.dot_dimension_numbers<[1], [0], [0], [1], [0, 0, 1, 1], [], []>} : vector<16x32xbf16>, vector<32x96xbf16>, vector<16x96xf32> -> vector<16x96xf32>
    %c0_20 = arith.constant 0 : index
    %c0_21 = arith.constant 0 : index
    %39 = vector.load %arg5[%c0_20, %c0_21] : memref<1x96xf32, #tpu.memory_space<vmem>>, vector<1x96xf32>
    %40 = vector.broadcast %39 : vector<1x96xf32> to vector<16x96xf32>
    %41 = arith.addf %38, %40 : vector<16x96xf32>
    %42 = tpu.iota {dimensions = array<i32: 0>} : vector<8x8xi32>
    %43 = tpu.iota {dimensions = array<i32: 1>} : vector<8x8xi32>
    %44 = arith.cmpi sge, %42, %43 : vector<8x8xi32>
    %45 = vector.shape_cast %44 : vector<8x8xi1> to vector<1x8x8xi1>
    %46 = vector.extract_strided_slice %41 {offsets = [0, 0], sizes = [16, 32], strides = [1, 1]} : vector<16x96xf32> to vector<16x32xf32>
    %47 = vector.extract_strided_slice %41 {offsets = [0, 32], sizes = [16, 32], strides = [1, 1]} : vector<16x96xf32> to vector<16x32xf32>
    %48 = vector.extract_strided_slice %41 {offsets = [0, 64], sizes = [16, 32], strides = [1, 1]} : vector<16x96xf32> to vector<16x32xf32>
    %c0_22 = arith.constant 0 : index
    %c0_23 = arith.constant 0 : index
    %49 = vector.load %arg7[%c0_22, %c0_23] : memref<1x32xf32, #tpu.memory_space<vmem>>, vector<1x32xf32>
    %50 = arith.truncf %46 : vector<16x32xf32> to vector<16x32xbf16>
    %51 = vector.shape_cast %50 : vector<16x32xbf16> to vector<2x8x32xbf16>
    %52 = arith.truncf %47 : vector<16x32xf32> to vector<16x32xbf16>
    %53 = vector.shape_cast %52 : vector<16x32xbf16> to vector<2x8x32xbf16>
    %54 = arith.truncf %48 : vector<16x32xf32> to vector<16x32xbf16>
    %55 = vector.shape_cast %54 : vector<16x32xbf16> to vector<2x8x32xbf16>
    %cst_24 = arith.constant 0.000000e+00 : f32
    %56 = vector.broadcast %cst_24 : f32 to vector<16x32xf32>
    %57 = vector.extract_strided_slice %51 {offsets = [0, 0, 0], sizes = [2, 8, 8], strides = [1, 1, 1]} : vector<2x8x32xbf16> to vector<2x8x8xbf16>
    %58 = vector.extract_strided_slice %53 {offsets = [0, 0, 0], sizes = [2, 8, 8], strides = [1, 1, 1]} : vector<2x8x32xbf16> to vector<2x8x8xbf16>
    "tpu.trace_start"() <{level = 10 : i32, message = "btd,bsd->bts"}> : () -> ()
    %cst_25 = arith.constant dense<0.000000e+00> : vector<2x8x8xf32>
    %59 = tpu.matmul %57, %58, %cst_25 {dimension_numbers = #tpu.dot_dimension_numbers<[2], [2], [1], [1], [0, 0, 0, 1, 1, 1], [0], [0]>} : vector<2x8x8xbf16>, vector<2x8x8xbf16>, vector<2x8x8xf32> -> vector<2x8x8xf32>
    "tpu.trace_stop"() : () -> ()
    %cst_26 = arith.constant 0.353553385 : f32
    %60 = vector.broadcast %cst_26 : f32 to vector<2x8x8xf32>
    %61 = arith.mulf %59, %60 : vector<2x8x8xf32>
    %cst_27 = arith.constant -1.000000e+09 : f32
    %62 = vector.shape_cast %45 : vector<1x8x8xi1> to vector<1x8x8xi1>
    %63 = vector.broadcast %62 : vector<1x8x8xi1> to vector<2x8x8xi1>
    %64 = vector.broadcast %cst_27 : f32 to vector<2x8x8xf32>
    %65 = arith.select %63, %61, %64 : vector<2x8x8xi1>, vector<2x8x8xf32>
    %cst_28 = arith.constant dense<0xFF800000> : vector<2x8xf32>
    %66 = vector.multi_reduction <maximumf>, %65, %cst_28 [2] : vector<2x8x8xf32> to vector<2x8xf32>
    %67 = vector.shape_cast %66 : vector<2x8xf32> to vector<2x8x1xf32>
    %68 = vector.broadcast %67 : vector<2x8x1xf32> to vector<2x8x8xf32>
    %69 = arith.subf %65, %68 : vector<2x8x8xf32>
    %70 = math.exp %69 : vector<2x8x8xf32>
    %cst_29 = arith.constant dense<0.000000e+00> : vector<2x8xf32>
    %71 = vector.multi_reduction <add>, %70, %cst_29 [2] : vector<2x8x8xf32> to vector<2x8xf32>
    %72 = vector.shape_cast %71 : vector<2x8xf32> to vector<2x8x1xf32>
    %73 = tpu.reciprocal %72 {approx = true} : vector<2x8x1xf32> -> vector<2x8x1xf32>
    %74 = vector.broadcast %73 : vector<2x8x1xf32> to vector<2x8x8xf32>
    %75 = arith.mulf %70, %74 : vector<2x8x8xf32>
    %76 = arith.truncf %75 : vector<2x8x8xf32> to vector<2x8x8xbf16>
    %77 = vector.extract_strided_slice %55 {offsets = [0, 0, 0], sizes = [2, 8, 8], strides = [1, 1, 1]} : vector<2x8x32xbf16> to vector<2x8x8xbf16>
    "tpu.trace_start"() <{level = 10 : i32, message = "bts,bsd->btd"}> : () -> ()
    %cst_30 = arith.constant dense<0.000000e+00> : vector<2x8x8xf32>
    %78 = tpu.matmul %76, %77, %cst_30 {dimension_numbers = #tpu.dot_dimension_numbers<[2], [1], [1], [2], [0, 0, 0, 1, 1, 2], [0], [0]>} : vector<2x8x8xbf16>, vector<2x8x8xbf16>, vector<2x8x8xf32> -> vector<2x8x8xf32>
    "tpu.trace_stop"() : () -> ()
    %79 = vector.shape_cast %78 : vector<2x8x8xf32> to vector<16x8xf32>
    %80 = arith.truncf %79 : vector<16x8xf32> to vector<16x8xbf16>
    %c0_31 = arith.constant 0 : index
    %c0_32 = arith.constant 0 : index
    %c0_33 = arith.constant 0 : index
    %81 = vector.load %arg6[%c0_31, %c0_32, %c0_33] : memref<4x8x32xbf16, #tpu.memory_space<vmem>>, vector<1x8x32xbf16>
    %82 = vector.shape_cast %81 : vector<1x8x32xbf16> to vector<8x32xbf16>
    %cst_34 = arith.constant dense<0.000000e+00> : vector<16x32xf32>
    %83 = tpu.matmul %80, %82, %cst_34 {dimension_numbers = #tpu.dot_dimension_numbers<[1], [0], [0], [1], [0, 0, 1, 1], [], []>} : vector<16x8xbf16>, vector<8x32xbf16>, vector<16x32xf32> -> vector<16x32xf32>
    %84 = arith.addf %56, %83 : vector<16x32xf32>
    %85 = vector.extract_strided_slice %51 {offsets = [0, 0, 8], sizes = [2, 8, 8], strides = [1, 1, 1]} : vector<2x8x32xbf16> to vector<2x8x8xbf16>
    %86 = vector.extract_strided_slice %53 {offsets = [0, 0, 8], sizes = [2, 8, 8], strides = [1, 1, 1]} : vector<2x8x32xbf16> to vector<2x8x8xbf16>
    "tpu.trace_start"() <{level = 10 : i32, message = "btd,bsd->bts"}> : () -> ()
    %cst_35 = arith.constant dense<0.000000e+00> : vector<2x8x8xf32>
    %87 = tpu.matmul %85, %86, %cst_35 {dimension_numbers = #tpu.dot_dimension_numbers<[2], [2], [1], [1], [0, 0, 0, 1, 1, 1], [0], [0]>} : vector<2x8x8xbf16>, vector<2x8x8xbf16>, vector<2x8x8xf32> -> vector<2x8x8xf32>
    "tpu.trace_stop"() : () -> ()
    %cst_36 = arith.constant 0.353553385 : f32
    %88 = vector.broadcast %cst_36 : f32 to vector<2x8x8xf32>
    %89 = arith.mulf %87, %88 : vector<2x8x8xf32>
    %cst_37 = arith.constant -1.000000e+09 : f32
    %90 = vector.shape_cast %45 : vector<1x8x8xi1> to vector<1x8x8xi1>
    %91 = vector.broadcast %90 : vector<1x8x8xi1> to vector<2x8x8xi1>
    %92 = vector.broadcast %cst_37 : f32 to vector<2x8x8xf32>
    %93 = arith.select %91, %89, %92 : vector<2x8x8xi1>, vector<2x8x8xf32>
    %cst_38 = arith.constant dense<0xFF800000> : vector<2x8xf32>
    %94 = vector.multi_reduction <maximumf>, %93, %cst_38 [2] : vector<2x8x8xf32> to vector<2x8xf32>
    %95 = vector.shape_cast %94 : vector<2x8xf32> to vector<2x8x1xf32>
    %96 = vector.broadcast %95 : vector<2x8x1xf32> to vector<2x8x8xf32>
    %97 = arith.subf %93, %96 : vector<2x8x8xf32>
    %98 = math.exp %97 : vector<2x8x8xf32>
    %cst_39 = arith.constant dense<0.000000e+00> : vector<2x8xf32>
    %99 = vector.multi_reduction <add>, %98, %cst_39 [2] : vector<2x8x8xf32> to vector<2x8xf32>
    %100 = vector.shape_cast %99 : vector<2x8xf32> to vector<2x8x1xf32>
    %101 = tpu.reciprocal %100 {approx = true} : vector<2x8x1xf32> -> vector<2x8x1xf32>
    %102 = vector.broadcast %101 : vector<2x8x1xf32> to vector<2x8x8xf32>
    %103 = arith.mulf %98, %102 : vector<2x8x8xf32>
    %104 = arith.truncf %103 : vector<2x8x8xf32> to vector<2x8x8xbf16>
    %105 = vector.extract_strided_slice %55 {offsets = [0, 0, 8], sizes = [2, 8, 8], strides = [1, 1, 1]} : vector<2x8x32xbf16> to vector<2x8x8xbf16>
    "tpu.trace_start"() <{level = 10 : i32, message = "bts,bsd->btd"}> : () -> ()
    %cst_40 = arith.constant dense<0.000000e+00> : vector<2x8x8xf32>
    %106 = tpu.matmul %104, %105, %cst_40 {dimension_numbers = #tpu.dot_dimension_numbers<[2], [1], [1], [2], [0, 0, 0, 1, 1, 2], [0], [0]>} : vector<2x8x8xbf16>, vector<2x8x8xbf16>, vector<2x8x8xf32> -> vector<2x8x8xf32>
    "tpu.trace_stop"() : () -> ()
    %107 = vector.shape_cast %106 : vector<2x8x8xf32> to vector<16x8xf32>
    %108 = arith.truncf %107 : vector<16x8xf32> to vector<16x8xbf16>
    %c1 = arith.constant 1 : index
    %c0_41 = arith.constant 0 : index
    %c0_42 = arith.constant 0 : index
    %109 = vector.load %arg6[%c1, %c0_41, %c0_42] : memref<4x8x32xbf16, #tpu.memory_space<vmem>>, vector<1x8x32xbf16>
    %110 = vector.shape_cast %109 : vector<1x8x32xbf16> to vector<8x32xbf16>
    %cst_43 = arith.constant dense<0.000000e+00> : vector<16x32xf32>
    %111 = tpu.matmul %108, %110, %cst_43 {dimension_numbers = #tpu.dot_dimension_numbers<[1], [0], [0], [1], [0, 0, 1, 1], [], []>} : vector<16x8xbf16>, vector<8x32xbf16>, vector<16x32xf32> -> vector<16x32xf32>
    %112 = arith.addf %84, %111 : vector<16x32xf32>
    %113 = vector.extract_strided_slice %51 {offsets = [0, 0, 16], sizes = [2, 8, 8], strides = [1, 1, 1]} : vector<2x8x32xbf16> to vector<2x8x8xbf16>
    %114 = vector.extract_strided_slice %53 {offsets = [0, 0, 16], sizes = [2, 8, 8], strides = [1, 1, 1]} : vector<2x8x32xbf16> to vector<2x8x8xbf16>
    "tpu.trace_start"() <{level = 10 : i32, message = "btd,bsd->bts"}> : () -> ()
    %cst_44 = arith.constant dense<0.000000e+00> : vector<2x8x8xf32>
    %115 = tpu.matmul %113, %114, %cst_44 {dimension_numbers = #tpu.dot_dimension_numbers<[2], [2], [1], [1], [0, 0, 0, 1, 1, 1], [0], [0]>} : vector<2x8x8xbf16>, vector<2x8x8xbf16>, vector<2x8x8xf32> -> vector<2x8x8xf32>
    "tpu.trace_stop"() : () -> ()
    %cst_45 = arith.constant 0.353553385 : f32
    %116 = vector.broadcast %cst_45 : f32 to vector<2x8x8xf32>
    %117 = arith.mulf %115, %116 : vector<2x8x8xf32>
    %cst_46 = arith.constant -1.000000e+09 : f32
    %118 = vector.shape_cast %45 : vector<1x8x8xi1> to vector<1x8x8xi1>
    %119 = vector.broadcast %118 : vector<1x8x8xi1> to vector<2x8x8xi1>
    %120 = vector.broadcast %cst_46 : f32 to vector<2x8x8xf32>
    %121 = arith.select %119, %117, %120 : vector<2x8x8xi1>, vector<2x8x8xf32>
    %cst_47 = arith.constant dense<0xFF800000> : vector<2x8xf32>
    %122 = vector.multi_reduction <maximumf>, %121, %cst_47 [2] : vector<2x8x8xf32> to vector<2x8xf32>
    %123 = vector.shape_cast %122 : vector<2x8xf32> to vector<2x8x1xf32>
    %124 = vector.broadcast %123 : vector<2x8x1xf32> to vector<2x8x8xf32>
    %125 = arith.subf %121, %124 : vector<2x8x8xf32>
    %126 = math.exp %125 : vector<2x8x8xf32>
    %cst_48 = arith.constant dense<0.000000e+00> : vector<2x8xf32>
    %127 = vector.multi_reduction <add>, %126, %cst_48 [2] : vector<2x8x8xf32> to vector<2x8xf32>
    %128 = vector.shape_cast %127 : vector<2x8xf32> to vector<2x8x1xf32>
    %129 = tpu.reciprocal %128 {approx = true} : vector<2x8x1xf32> -> vector<2x8x1xf32>
    %130 = vector.broadcast %129 : vector<2x8x1xf32> to vector<2x8x8xf32>
    %131 = arith.mulf %126, %130 : vector<2x8x8xf32>
    %132 = arith.truncf %131 : vector<2x8x8xf32> to vector<2x8x8xbf16>
    %133 = vector.extract_strided_slice %55 {offsets = [0, 0, 16], sizes = [2, 8, 8], strides = [1, 1, 1]} : vector<2x8x32xbf16> to vector<2x8x8xbf16>
    "tpu.trace_start"() <{level = 10 : i32, message = "bts,bsd->btd"}> : () -> ()
    %cst_49 = arith.constant dense<0.000000e+00> : vector<2x8x8xf32>
    %134 = tpu.matmul %132, %133, %cst_49 {dimension_numbers = #tpu.dot_dimension_numbers<[2], [1], [1], [2], [0, 0, 0, 1, 1, 2], [0], [0]>} : vector<2x8x8xbf16>, vector<2x8x8xbf16>, vector<2x8x8xf32> -> vector<2x8x8xf32>
    "tpu.trace_stop"() : () -> ()
    %135 = vector.shape_cast %134 : vector<2x8x8xf32> to vector<16x8xf32>
    %136 = arith.truncf %135 : vector<16x8xf32> to vector<16x8xbf16>
    %c2 = arith.constant 2 : index
    %c0_50 = arith.constant 0 : index
    %c0_51 = arith.constant 0 : index
    %137 = vector.load %arg6[%c2, %c0_50, %c0_51] : memref<4x8x32xbf16, #tpu.memory_space<vmem>>, vector<1x8x32xbf16>
    %138 = vector.shape_cast %137 : vector<1x8x32xbf16> to vector<8x32xbf16>
    %cst_52 = arith.constant dense<0.000000e+00> : vector<16x32xf32>
    %139 = tpu.matmul %136, %138, %cst_52 {dimension_numbers = #tpu.dot_dimension_numbers<[1], [0], [0], [1], [0, 0, 1, 1], [], []>} : vector<16x8xbf16>, vector<8x32xbf16>, vector<16x32xf32> -> vector<16x32xf32>
    %140 = arith.addf %112, %139 : vector<16x32xf32>
    %141 = vector.extract_strided_slice %51 {offsets = [0, 0, 24], sizes = [2, 8, 8], strides = [1, 1, 1]} : vector<2x8x32xbf16> to vector<2x8x8xbf16>
    %142 = vector.extract_strided_slice %53 {offsets = [0, 0, 24], sizes = [2, 8, 8], strides = [1, 1, 1]} : vector<2x8x32xbf16> to vector<2x8x8xbf16>
    "tpu.trace_start"() <{level = 10 : i32, message = "btd,bsd->bts"}> : () -> ()
    %cst_53 = arith.constant dense<0.000000e+00> : vector<2x8x8xf32>
    %143 = tpu.matmul %141, %142, %cst_53 {dimension_numbers = #tpu.dot_dimension_numbers<[2], [2], [1], [1], [0, 0, 0, 1, 1, 1], [0], [0]>} : vector<2x8x8xbf16>, vector<2x8x8xbf16>, vector<2x8x8xf32> -> vector<2x8x8xf32>
    "tpu.trace_stop"() : () -> ()
    %cst_54 = arith.constant 0.353553385 : f32
    %144 = vector.broadcast %cst_54 : f32 to vector<2x8x8xf32>
    %145 = arith.mulf %143, %144 : vector<2x8x8xf32>
    %cst_55 = arith.constant -1.000000e+09 : f32
    %146 = vector.shape_cast %45 : vector<1x8x8xi1> to vector<1x8x8xi1>
    %147 = vector.broadcast %146 : vector<1x8x8xi1> to vector<2x8x8xi1>
    %148 = vector.broadcast %cst_55 : f32 to vector<2x8x8xf32>
    %149 = arith.select %147, %145, %148 : vector<2x8x8xi1>, vector<2x8x8xf32>
    %cst_56 = arith.constant dense<0xFF800000> : vector<2x8xf32>
    %150 = vector.multi_reduction <maximumf>, %149, %cst_56 [2] : vector<2x8x8xf32> to vector<2x8xf32>
    %151 = vector.shape_cast %150 : vector<2x8xf32> to vector<2x8x1xf32>
    %152 = vector.broadcast %151 : vector<2x8x1xf32> to vector<2x8x8xf32>
    %153 = arith.subf %149, %152 : vector<2x8x8xf32>
    %154 = math.exp %153 : vector<2x8x8xf32>
    %cst_57 = arith.constant dense<0.000000e+00> : vector<2x8xf32>
    %155 = vector.multi_reduction <add>, %154, %cst_57 [2] : vector<2x8x8xf32> to vector<2x8xf32>
    %156 = vector.shape_cast %155 : vector<2x8xf32> to vector<2x8x1xf32>
    %157 = tpu.reciprocal %156 {approx = true} : vector<2x8x1xf32> -> vector<2x8x1xf32>
    %158 = vector.broadcast %157 : vector<2x8x1xf32> to vector<2x8x8xf32>
    %159 = arith.mulf %154, %158 : vector<2x8x8xf32>
    %160 = arith.truncf %159 : vector<2x8x8xf32> to vector<2x8x8xbf16>
    %161 = vector.extract_strided_slice %55 {offsets = [0, 0, 24], sizes = [2, 8, 8], strides = [1, 1, 1]} : vector<2x8x32xbf16> to vector<2x8x8xbf16>
    "tpu.trace_start"() <{level = 10 : i32, message = "bts,bsd->btd"}> : () -> ()
    %cst_58 = arith.constant dense<0.000000e+00> : vector<2x8x8xf32>
    %162 = tpu.matmul %160, %161, %cst_58 {dimension_numbers = #tpu.dot_dimension_numbers<[2], [1], [1], [2], [0, 0, 0, 1, 1, 2], [0], [0]>} : vector<2x8x8xbf16>, vector<2x8x8xbf16>, vector<2x8x8xf32> -> vector<2x8x8xf32>
    "tpu.trace_stop"() : () -> ()
    %163 = vector.shape_cast %162 : vector<2x8x8xf32> to vector<16x8xf32>
    %164 = arith.truncf %163 : vector<16x8xf32> to vector<16x8xbf16>
    %c3 = arith.constant 3 : index
    %c0_59 = arith.constant 0 : index
    %c0_60 = arith.constant 0 : index
    %165 = vector.load %arg6[%c3, %c0_59, %c0_60] : memref<4x8x32xbf16, #tpu.memory_space<vmem>>, vector<1x8x32xbf16>
    %166 = vector.shape_cast %165 : vector<1x8x32xbf16> to vector<8x32xbf16>
    %cst_61 = arith.constant dense<0.000000e+00> : vector<16x32xf32>
    %167 = tpu.matmul %164, %166, %cst_61 {dimension_numbers = #tpu.dot_dimension_numbers<[1], [0], [0], [1], [0, 0, 1, 1], [], []>} : vector<16x8xbf16>, vector<8x32xbf16>, vector<16x32xf32> -> vector<16x32xf32>
    %168 = arith.addf %140, %167 : vector<16x32xf32>
    %169 = vector.broadcast %49 : vector<1x32xf32> to vector<16x32xf32>
    %170 = arith.addf %168, %169 : vector<16x32xf32>
    %171 = arith.addf %1, %170 : vector<16x32xf32>
    %c1_62 = arith.constant 1 : index
    %c0_63 = arith.constant 0 : index
    %172 = vector.load %arg18[%c1_62, %c0_63] : memref<3x32xf32, #tpu.memory_space<vmem>>, vector<1x32xf32>
    %173 = vector.shape_cast %172 : vector<1x32xf32> to vector<32xf32>
    %c1_64 = arith.constant 1 : index
    %c0_65 = arith.constant 0 : index
    %174 = vector.load %arg19[%c1_64, %c0_65] : memref<3x32xf32, #tpu.memory_space<vmem>>, vector<1x32xf32>
    %175 = vector.shape_cast %174 : vector<1x32xf32> to vector<32xf32>
    %cst_66 = arith.constant dense<0.000000e+00> : vector<16xf32>
    %176 = vector.multi_reduction <add>, %171, %cst_66 [1] : vector<16x32xf32> to vector<16xf32>
    %177 = vector.shape_cast %176 : vector<16xf32> to vector<16x1xf32>
    %cst_67 = arith.constant 3.200000e+01 : f32
    %178 = vector.broadcast %cst_67 : f32 to vector<16x1xf32>
    %179 = arith.divf %177, %178 : vector<16x1xf32>
    %180 = vector.broadcast %179 : vector<16x1xf32> to vector<16x32xf32>
    %181 = arith.subf %171, %180 : vector<16x32xf32>
    %182 = arith.mulf %181, %181 : vector<16x32xf32>
    %cst_68 = arith.constant dense<0.000000e+00> : vector<16xf32>
    %183 = vector.multi_reduction <add>, %182, %cst_68 [1] : vector<16x32xf32> to vector<16xf32>
    %184 = vector.shape_cast %183 : vector<16xf32> to vector<16x1xf32>
    %cst_69 = arith.constant 0.0322580636 : f32
    %185 = vector.broadcast %cst_69 : f32 to vector<16x1xf32>
    %186 = arith.mulf %184, %185 : vector<16x1xf32>
    %187 = math.sqrt %186 : vector<16x1xf32>
    %cst_70 = arith.constant 9.99999997E-7 : f32
    %188 = vector.broadcast %cst_70 : f32 to vector<16x1xf32>
    %189 = arith.addf %187, %188 : vector<16x1xf32>
    %190 = tpu.reciprocal %189 {approx = true} : vector<16x1xf32> -> vector<16x1xf32>
    %191 = vector.broadcast %179 : vector<16x1xf32> to vector<16x32xf32>
    %192 = arith.subf %171, %191 : vector<16x32xf32>
    %193 = vector.shape_cast %173 : vector<32xf32> to vector<1x32xf32>
    %194 = vector.broadcast %193 : vector<1x32xf32> to vector<16x32xf32>
    %195 = arith.mulf %194, %192 : vector<16x32xf32>
    %196 = vector.broadcast %190 : vector<16x1xf32> to vector<16x32xf32>
    %197 = arith.mulf %195, %196 : vector<16x32xf32>
    %198 = vector.shape_cast %175 : vector<32xf32> to vector<1x32xf32>
    %199 = vector.broadcast %198 : vector<1x32xf32> to vector<16x32xf32>
    %200 = arith.addf %197, %199 : vector<16x32xf32>
    %201 = arith.truncf %200 : vector<16x32xf32> to vector<16x32xbf16>
    %c0_71 = arith.constant 0 : index
    %c0_72 = arith.constant 0 : index
    %202 = vector.load %arg8[%c0_71, %c0_72] : memref<32x32xbf16, #tpu.memory_space<vmem>>, vector<32x32xbf16>
    %cst_73 = arith.constant dense<0.000000e+00> : vector<16x32xf32>
    %203 = tpu.matmul %201, %202, %cst_73 {dimension_numbers = #tpu.dot_dimension_numbers<[1], [0], [0], [1], [0, 0, 1, 1], [], []>} : vector<16x32xbf16>, vector<32x32xbf16>, vector<16x32xf32> -> vector<16x32xf32>
    %c0_74 = arith.constant 0 : index
    %c0_75 = arith.constant 0 : index
    %204 = vector.load %arg9[%c0_74, %c0_75] : memref<1x32xf32, #tpu.memory_space<vmem>>, vector<1x32xf32>
    %205 = vector.broadcast %204 : vector<1x32xf32> to vector<16x32xf32>
    %206 = arith.addf %203, %205 : vector<16x32xf32>
    %207 = arith.truncf %3 : vector<16x32xf32> to vector<16x32xbf16>
    %c0_76 = arith.constant 0 : index
    %c0_77 = arith.constant 0 : index
    %208 = vector.load %arg10[%c0_76, %c0_77] : memref<32x64xbf16, #tpu.memory_space<vmem>>, vector<32x64xbf16>
    %cst_78 = arith.constant dense<0.000000e+00> : vector<16x64xf32>
    %209 = tpu.matmul %207, %208, %cst_78 {dimension_numbers = #tpu.dot_dimension_numbers<[1], [0], [0], [1], [0, 0, 1, 1], [], []>} : vector<16x32xbf16>, vector<32x64xbf16>, vector<16x64xf32> -> vector<16x64xf32>
    %c0_79 = arith.constant 0 : index
    %c0_80 = arith.constant 0 : index
    %210 = vector.load %arg11[%c0_79, %c0_80] : memref<1x64xf32, #tpu.memory_space<vmem>>, vector<1x64xf32>
    %211 = vector.broadcast %210 : vector<1x64xf32> to vector<16x64xf32>
    %212 = arith.addf %209, %211 : vector<16x64xf32>
    %213 = vector.extract_strided_slice %212 {offsets = [0, 0], sizes = [16, 32], strides = [1, 1]} : vector<16x64xf32> to vector<16x32xf32>
    %214 = vector.extract_strided_slice %212 {offsets = [0, 32], sizes = [16, 32], strides = [1, 1]} : vector<16x64xf32> to vector<16x32xf32>
    %c0_81 = arith.constant 0 : index
    %c0_82 = arith.constant 0 : index
    %215 = vector.load %arg13[%c0_81, %c0_82] : memref<1x32xf32, #tpu.memory_space<vmem>>, vector<1x32xf32>
    %216 = arith.truncf %206 : vector<16x32xf32> to vector<16x32xbf16>
    %217 = vector.shape_cast %216 : vector<16x32xbf16> to vector<2x8x32xbf16>
    %218 = arith.truncf %213 : vector<16x32xf32> to vector<16x32xbf16>
    %219 = vector.shape_cast %218 : vector<16x32xbf16> to vector<2x8x32xbf16>
    %220 = arith.truncf %214 : vector<16x32xf32> to vector<16x32xbf16>
    %221 = vector.shape_cast %220 : vector<16x32xbf16> to vector<2x8x32xbf16>
    %cst_83 = arith.constant 0.000000e+00 : f32
    %222 = vector.broadcast %cst_83 : f32 to vector<16x32xf32>
    %223 = vector.extract_strided_slice %217 {offsets = [0, 0, 0], sizes = [2, 8, 8], strides = [1, 1, 1]} : vector<2x8x32xbf16> to vector<2x8x8xbf16>
    %224 = vector.extract_strided_slice %219 {offsets = [0, 0, 0], sizes = [2, 8, 8], strides = [1, 1, 1]} : vector<2x8x32xbf16> to vector<2x8x8xbf16>
    "tpu.trace_start"() <{level = 10 : i32, message = "btd,bsd->bts"}> : () -> ()
    %cst_84 = arith.constant dense<0.000000e+00> : vector<2x8x8xf32>
    %225 = tpu.matmul %223, %224, %cst_84 {dimension_numbers = #tpu.dot_dimension_numbers<[2], [2], [1], [1], [0, 0, 0, 1, 1, 1], [0], [0]>} : vector<2x8x8xbf16>, vector<2x8x8xbf16>, vector<2x8x8xf32> -> vector<2x8x8xf32>
    "tpu.trace_stop"() : () -> ()
    %cst_85 = arith.constant 0.353553385 : f32
    %226 = vector.broadcast %cst_85 : f32 to vector<2x8x8xf32>
    %227 = arith.mulf %225, %226 : vector<2x8x8xf32>
    %cst_86 = arith.constant -1.000000e+09 : f32
    %228 = vector.shape_cast %6 : vector<2x1x8xi1> to vector<2x1x8xi1>
    %229 = vector.broadcast %228 : vector<2x1x8xi1> to vector<2x8x8xi1>
    %230 = vector.broadcast %cst_86 : f32 to vector<2x8x8xf32>
    %231 = arith.select %229, %227, %230 : vector<2x8x8xi1>, vector<2x8x8xf32>
    %cst_87 = arith.constant dense<0xFF800000> : vector<2x8xf32>
    %232 = vector.multi_reduction <maximumf>, %231, %cst_87 [2] : vector<2x8x8xf32> to vector<2x8xf32>
    %233 = vector.shape_cast %232 : vector<2x8xf32> to vector<2x8x1xf32>
    %234 = vector.broadcast %233 : vector<2x8x1xf32> to vector<2x8x8xf32>
    %235 = arith.subf %231, %234 : vector<2x8x8xf32>
    %236 = math.exp %235 : vector<2x8x8xf32>
    %cst_88 = arith.constant dense<0.000000e+00> : vector<2x8xf32>
    %237 = vector.multi_reduction <add>, %236, %cst_88 [2] : vector<2x8x8xf32> to vector<2x8xf32>
    %238 = vector.shape_cast %237 : vector<2x8xf32> to vector<2x8x1xf32>
    %239 = tpu.reciprocal %238 {approx = true} : vector<2x8x1xf32> -> vector<2x8x1xf32>
    %240 = vector.broadcast %239 : vector<2x8x1xf32> to vector<2x8x8xf32>
    %241 = arith.mulf %236, %240 : vector<2x8x8xf32>
    %242 = arith.truncf %241 : vector<2x8x8xf32> to vector<2x8x8xbf16>
    %243 = vector.extract_strided_slice %221 {offsets = [0, 0, 0], sizes = [2, 8, 8], strides = [1, 1, 1]} : vector<2x8x32xbf16> to vector<2x8x8xbf16>
    "tpu.trace_start"() <{level = 10 : i32, message = "bts,bsd->btd"}> : () -> ()
    %cst_89 = arith.constant dense<0.000000e+00> : vector<2x8x8xf32>
    %244 = tpu.matmul %242, %243, %cst_89 {dimension_numbers = #tpu.dot_dimension_numbers<[2], [1], [1], [2], [0, 0, 0, 1, 1, 2], [0], [0]>} : vector<2x8x8xbf16>, vector<2x8x8xbf16>, vector<2x8x8xf32> -> vector<2x8x8xf32>
    "tpu.trace_stop"() : () -> ()
    %245 = vector.shape_cast %244 : vector<2x8x8xf32> to vector<16x8xf32>
    %246 = arith.truncf %245 : vector<16x8xf32> to vector<16x8xbf16>
    %c0_90 = arith.constant 0 : index
    %c0_91 = arith.constant 0 : index
    %c0_92 = arith.constant 0 : index
    %247 = vector.load %arg12[%c0_90, %c0_91, %c0_92] : memref<4x8x32xbf16, #tpu.memory_space<vmem>>, vector<1x8x32xbf16>
    %248 = vector.shape_cast %247 : vector<1x8x32xbf16> to vector<8x32xbf16>
    %cst_93 = arith.constant dense<0.000000e+00> : vector<16x32xf32>
    %249 = tpu.matmul %246, %248, %cst_93 {dimension_numbers = #tpu.dot_dimension_numbers<[1], [0], [0], [1], [0, 0, 1, 1], [], []>} : vector<16x8xbf16>, vector<8x32xbf16>, vector<16x32xf32> -> vector<16x32xf32>
    %250 = arith.addf %222, %249 : vector<16x32xf32>
    %251 = vector.extract_strided_slice %217 {offsets = [0, 0, 8], sizes = [2, 8, 8], strides = [1, 1, 1]} : vector<2x8x32xbf16> to vector<2x8x8xbf16>
    %252 = vector.extract_strided_slice %219 {offsets = [0, 0, 8], sizes = [2, 8, 8], strides = [1, 1, 1]} : vector<2x8x32xbf16> to vector<2x8x8xbf16>
    "tpu.trace_start"() <{level = 10 : i32, message = "btd,bsd->bts"}> : () -> ()
    %cst_94 = arith.constant dense<0.000000e+00> : vector<2x8x8xf32>
    %253 = tpu.matmul %251, %252, %cst_94 {dimension_numbers = #tpu.dot_dimension_numbers<[2], [2], [1], [1], [0, 0, 0, 1, 1, 1], [0], [0]>} : vector<2x8x8xbf16>, vector<2x8x8xbf16>, vector<2x8x8xf32> -> vector<2x8x8xf32>
    "tpu.trace_stop"() : () -> ()
    %cst_95 = arith.constant 0.353553385 : f32
    %254 = vector.broadcast %cst_95 : f32 to vector<2x8x8xf32>
    %255 = arith.mulf %253, %254 : vector<2x8x8xf32>
    %cst_96 = arith.constant -1.000000e+09 : f32
    %256 = vector.shape_cast %6 : vector<2x1x8xi1> to vector<2x1x8xi1>
    %257 = vector.broadcast %256 : vector<2x1x8xi1> to vector<2x8x8xi1>
    %258 = vector.broadcast %cst_96 : f32 to vector<2x8x8xf32>
    %259 = arith.select %257, %255, %258 : vector<2x8x8xi1>, vector<2x8x8xf32>
    %cst_97 = arith.constant dense<0xFF800000> : vector<2x8xf32>
    %260 = vector.multi_reduction <maximumf>, %259, %cst_97 [2] : vector<2x8x8xf32> to vector<2x8xf32>
    %261 = vector.shape_cast %260 : vector<2x8xf32> to vector<2x8x1xf32>
    %262 = vector.broadcast %261 : vector<2x8x1xf32> to vector<2x8x8xf32>
    %263 = arith.subf %259, %262 : vector<2x8x8xf32>
    %264 = math.exp %263 : vector<2x8x8xf32>
    %cst_98 = arith.constant dense<0.000000e+00> : vector<2x8xf32>
    %265 = vector.multi_reduction <add>, %264, %cst_98 [2] : vector<2x8x8xf32> to vector<2x8xf32>
    %266 = vector.shape_cast %265 : vector<2x8xf32> to vector<2x8x1xf32>
    %267 = tpu.reciprocal %266 {approx = true} : vector<2x8x1xf32> -> vector<2x8x1xf32>
    %268 = vector.broadcast %267 : vector<2x8x1xf32> to vector<2x8x8xf32>
    %269 = arith.mulf %264, %268 : vector<2x8x8xf32>
    %270 = arith.truncf %269 : vector<2x8x8xf32> to vector<2x8x8xbf16>
    %271 = vector.extract_strided_slice %221 {offsets = [0, 0, 8], sizes = [2, 8, 8], strides = [1, 1, 1]} : vector<2x8x32xbf16> to vector<2x8x8xbf16>
    "tpu.trace_start"() <{level = 10 : i32, message = "bts,bsd->btd"}> : () -> ()
    %cst_99 = arith.constant dense<0.000000e+00> : vector<2x8x8xf32>
    %272 = tpu.matmul %270, %271, %cst_99 {dimension_numbers = #tpu.dot_dimension_numbers<[2], [1], [1], [2], [0, 0, 0, 1, 1, 2], [0], [0]>} : vector<2x8x8xbf16>, vector<2x8x8xbf16>, vector<2x8x8xf32> -> vector<2x8x8xf32>
    "tpu.trace_stop"() : () -> ()
    %273 = vector.shape_cast %272 : vector<2x8x8xf32> to vector<16x8xf32>
    %274 = arith.truncf %273 : vector<16x8xf32> to vector<16x8xbf16>
    %c1_100 = arith.constant 1 : index
    %c0_101 = arith.constant 0 : index
    %c0_102 = arith.constant 0 : index
    %275 = vector.load %arg12[%c1_100, %c0_101, %c0_102] : memref<4x8x32xbf16, #tpu.memory_space<vmem>>, vector<1x8x32xbf16>
    %276 = vector.shape_cast %275 : vector<1x8x32xbf16> to vector<8x32xbf16>
    %cst_103 = arith.constant dense<0.000000e+00> : vector<16x32xf32>
    %277 = tpu.matmul %274, %276, %cst_103 {dimension_numbers = #tpu.dot_dimension_numbers<[1], [0], [0], [1], [0, 0, 1, 1], [], []>} : vector<16x8xbf16>, vector<8x32xbf16>, vector<16x32xf32> -> vector<16x32xf32>
    %278 = arith.addf %250, %277 : vector<16x32xf32>
    %279 = vector.extract_strided_slice %217 {offsets = [0, 0, 16], sizes = [2, 8, 8], strides = [1, 1, 1]} : vector<2x8x32xbf16> to vector<2x8x8xbf16>
    %280 = vector.extract_strided_slice %219 {offsets = [0, 0, 16], sizes = [2, 8, 8], strides = [1, 1, 1]} : vector<2x8x32xbf16> to vector<2x8x8xbf16>
    "tpu.trace_start"() <{level = 10 : i32, message = "btd,bsd->bts"}> : () -> ()
    %cst_104 = arith.constant dense<0.000000e+00> : vector<2x8x8xf32>
    %281 = tpu.matmul %279, %280, %cst_104 {dimension_numbers = #tpu.dot_dimension_numbers<[2], [2], [1], [1], [0, 0, 0, 1, 1, 1], [0], [0]>} : vector<2x8x8xbf16>, vector<2x8x8xbf16>, vector<2x8x8xf32> -> vector<2x8x8xf32>
    "tpu.trace_stop"() : () -> ()
    %cst_105 = arith.constant 0.353553385 : f32
    %282 = vector.broadcast %cst_105 : f32 to vector<2x8x8xf32>
    %283 = arith.mulf %281, %282 : vector<2x8x8xf32>
    %cst_106 = arith.constant -1.000000e+09 : f32
    %284 = vector.shape_cast %6 : vector<2x1x8xi1> to vector<2x1x8xi1>
    %285 = vector.broadcast %284 : vector<2x1x8xi1> to vector<2x8x8xi1>
    %286 = vector.broadcast %cst_106 : f32 to vector<2x8x8xf32>
    %287 = arith.select %285, %283, %286 : vector<2x8x8xi1>, vector<2x8x8xf32>
    %cst_107 = arith.constant dense<0xFF800000> : vector<2x8xf32>
    %288 = vector.multi_reduction <maximumf>, %287, %cst_107 [2] : vector<2x8x8xf32> to vector<2x8xf32>
    %289 = vector.shape_cast %288 : vector<2x8xf32> to vector<2x8x1xf32>
    %290 = vector.broadcast %289 : vector<2x8x1xf32> to vector<2x8x8xf32>
    %291 = arith.subf %287, %290 : vector<2x8x8xf32>
    %292 = math.exp %291 : vector<2x8x8xf32>
    %cst_108 = arith.constant dense<0.000000e+00> : vector<2x8xf32>
    %293 = vector.multi_reduction <add>, %292, %cst_108 [2] : vector<2x8x8xf32> to vector<2x8xf32>
    %294 = vector.shape_cast %293 : vector<2x8xf32> to vector<2x8x1xf32>
    %295 = tpu.reciprocal %294 {approx = true} : vector<2x8x1xf32> -> vector<2x8x1xf32>
    %296 = vector.broadcast %295 : vector<2x8x1xf32> to vector<2x8x8xf32>
    %297 = arith.mulf %292, %296 : vector<2x8x8xf32>
    %298 = arith.truncf %297 : vector<2x8x8xf32> to vector<2x8x8xbf16>
    %299 = vector.extract_strided_slice %221 {offsets = [0, 0, 16], sizes = [2, 8, 8], strides = [1, 1, 1]} : vector<2x8x32xbf16> to vector<2x8x8xbf16>
    "tpu.trace_start"() <{level = 10 : i32, message = "bts,bsd->btd"}> : () -> ()
    %cst_109 = arith.constant dense<0.000000e+00> : vector<2x8x8xf32>
    %300 = tpu.matmul %298, %299, %cst_109 {dimension_numbers = #tpu.dot_dimension_numbers<[2], [1], [1], [2], [0, 0, 0, 1, 1, 2], [0], [0]>} : vector<2x8x8xbf16>, vector<2x8x8xbf16>, vector<2x8x8xf32> -> vector<2x8x8xf32>
    "tpu.trace_stop"() : () -> ()
    %301 = vector.shape_cast %300 : vector<2x8x8xf32> to vector<16x8xf32>
    %302 = arith.truncf %301 : vector<16x8xf32> to vector<16x8xbf16>
    %c2_110 = arith.constant 2 : index
    %c0_111 = arith.constant 0 : index
    %c0_112 = arith.constant 0 : index
    %303 = vector.load %arg12[%c2_110, %c0_111, %c0_112] : memref<4x8x32xbf16, #tpu.memory_space<vmem>>, vector<1x8x32xbf16>
    %304 = vector.shape_cast %303 : vector<1x8x32xbf16> to vector<8x32xbf16>
    %cst_113 = arith.constant dense<0.000000e+00> : vector<16x32xf32>
    %305 = tpu.matmul %302, %304, %cst_113 {dimension_numbers = #tpu.dot_dimension_numbers<[1], [0], [0], [1], [0, 0, 1, 1], [], []>} : vector<16x8xbf16>, vector<8x32xbf16>, vector<16x32xf32> -> vector<16x32xf32>
    %306 = arith.addf %278, %305 : vector<16x32xf32>
    %307 = vector.extract_strided_slice %217 {offsets = [0, 0, 24], sizes = [2, 8, 8], strides = [1, 1, 1]} : vector<2x8x32xbf16> to vector<2x8x8xbf16>
    %308 = vector.extract_strided_slice %219 {offsets = [0, 0, 24], sizes = [2, 8, 8], strides = [1, 1, 1]} : vector<2x8x32xbf16> to vector<2x8x8xbf16>
    "tpu.trace_start"() <{level = 10 : i32, message = "btd,bsd->bts"}> : () -> ()
    %cst_114 = arith.constant dense<0.000000e+00> : vector<2x8x8xf32>
    %309 = tpu.matmul %307, %308, %cst_114 {dimension_numbers = #tpu.dot_dimension_numbers<[2], [2], [1], [1], [0, 0, 0, 1, 1, 1], [0], [0]>} : vector<2x8x8xbf16>, vector<2x8x8xbf16>, vector<2x8x8xf32> -> vector<2x8x8xf32>
    "tpu.trace_stop"() : () -> ()
    %cst_115 = arith.constant 0.353553385 : f32
    %310 = vector.broadcast %cst_115 : f32 to vector<2x8x8xf32>
    %311 = arith.mulf %309, %310 : vector<2x8x8xf32>
    %cst_116 = arith.constant -1.000000e+09 : f32
    %312 = vector.shape_cast %6 : vector<2x1x8xi1> to vector<2x1x8xi1>
    %313 = vector.broadcast %312 : vector<2x1x8xi1> to vector<2x8x8xi1>
    %314 = vector.broadcast %cst_116 : f32 to vector<2x8x8xf32>
    %315 = arith.select %313, %311, %314 : vector<2x8x8xi1>, vector<2x8x8xf32>
    %cst_117 = arith.constant dense<0xFF800000> : vector<2x8xf32>
    %316 = vector.multi_reduction <maximumf>, %315, %cst_117 [2] : vector<2x8x8xf32> to vector<2x8xf32>
    %317 = vector.shape_cast %316 : vector<2x8xf32> to vector<2x8x1xf32>
    %318 = vector.broadcast %317 : vector<2x8x1xf32> to vector<2x8x8xf32>
    %319 = arith.subf %315, %318 : vector<2x8x8xf32>
    %320 = math.exp %319 : vector<2x8x8xf32>
    %cst_118 = arith.constant dense<0.000000e+00> : vector<2x8xf32>
    %321 = vector.multi_reduction <add>, %320, %cst_118 [2] : vector<2x8x8xf32> to vector<2x8xf32>
    %322 = vector.shape_cast %321 : vector<2x8xf32> to vector<2x8x1xf32>
    %323 = tpu.reciprocal %322 {approx = true} : vector<2x8x1xf32> -> vector<2x8x1xf32>
    %324 = vector.broadcast %323 : vector<2x8x1xf32> to vector<2x8x8xf32>
    %325 = arith.mulf %320, %324 : vector<2x8x8xf32>
    %326 = arith.truncf %325 : vector<2x8x8xf32> to vector<2x8x8xbf16>
    %327 = vector.extract_strided_slice %221 {offsets = [0, 0, 24], sizes = [2, 8, 8], strides = [1, 1, 1]} : vector<2x8x32xbf16> to vector<2x8x8xbf16>
    "tpu.trace_start"() <{level = 10 : i32, message = "bts,bsd->btd"}> : () -> ()
    %cst_119 = arith.constant dense<0.000000e+00> : vector<2x8x8xf32>
    %328 = tpu.matmul %326, %327, %cst_119 {dimension_numbers = #tpu.dot_dimension_numbers<[2], [1], [1], [2], [0, 0, 0, 1, 1, 2], [0], [0]>} : vector<2x8x8xbf16>, vector<2x8x8xbf16>, vector<2x8x8xf32> -> vector<2x8x8xf32>
    "tpu.trace_stop"() : () -> ()
    %329 = vector.shape_cast %328 : vector<2x8x8xf32> to vector<16x8xf32>
    %330 = arith.truncf %329 : vector<16x8xf32> to vector<16x8xbf16>
    %c3_120 = arith.constant 3 : index
    %c0_121 = arith.constant 0 : index
    %c0_122 = arith.constant 0 : index
    %331 = vector.load %arg12[%c3_120, %c0_121, %c0_122] : memref<4x8x32xbf16, #tpu.memory_space<vmem>>, vector<1x8x32xbf16>
    %332 = vector.shape_cast %331 : vector<1x8x32xbf16> to vector<8x32xbf16>
    %cst_123 = arith.constant dense<0.000000e+00> : vector<16x32xf32>
    %333 = tpu.matmul %330, %332, %cst_123 {dimension_numbers = #tpu.dot_dimension_numbers<[1], [0], [0], [1], [0, 0, 1, 1], [], []>} : vector<16x8xbf16>, vector<8x32xbf16>, vector<16x32xf32> -> vector<16x32xf32>
    %334 = arith.addf %306, %333 : vector<16x32xf32>
    %335 = vector.broadcast %215 : vector<1x32xf32> to vector<16x32xf32>
    %336 = arith.addf %334, %335 : vector<16x32xf32>
    %337 = arith.addf %171, %336 : vector<16x32xf32>
    %c2_124 = arith.constant 2 : index
    %c0_125 = arith.constant 0 : index
    %338 = vector.load %arg18[%c2_124, %c0_125] : memref<3x32xf32, #tpu.memory_space<vmem>>, vector<1x32xf32>
    %339 = vector.shape_cast %338 : vector<1x32xf32> to vector<32xf32>
    %c2_126 = arith.constant 2 : index
    %c0_127 = arith.constant 0 : index
    %340 = vector.load %arg19[%c2_126, %c0_127] : memref<3x32xf32, #tpu.memory_space<vmem>>, vector<1x32xf32>
    %341 = vector.shape_cast %340 : vector<1x32xf32> to vector<32xf32>
    %cst_128 = arith.constant dense<0.000000e+00> : vector<16xf32>
    %342 = vector.multi_reduction <add>, %337, %cst_128 [1] : vector<16x32xf32> to vector<16xf32>
    %343 = vector.shape_cast %342 : vector<16xf32> to vector<16x1xf32>
    %cst_129 = arith.constant 3.200000e+01 : f32
    %344 = vector.broadcast %cst_129 : f32 to vector<16x1xf32>
    %345 = arith.divf %343, %344 : vector<16x1xf32>
    %346 = vector.broadcast %345 : vector<16x1xf32> to vector<16x32xf32>
    %347 = arith.subf %337, %346 : vector<16x32xf32>
    %348 = arith.mulf %347, %347 : vector<16x32xf32>
    %cst_130 = arith.constant dense<0.000000e+00> : vector<16xf32>
    %349 = vector.multi_reduction <add>, %348, %cst_130 [1] : vector<16x32xf32> to vector<16xf32>
    %350 = vector.shape_cast %349 : vector<16xf32> to vector<16x1xf32>
    %cst_131 = arith.constant 0.0322580636 : f32
    %351 = vector.broadcast %cst_131 : f32 to vector<16x1xf32>
    %352 = arith.mulf %350, %351 : vector<16x1xf32>
    %353 = math.sqrt %352 : vector<16x1xf32>
    %cst_132 = arith.constant 9.99999997E-7 : f32
    %354 = vector.broadcast %cst_132 : f32 to vector<16x1xf32>
    %355 = arith.addf %353, %354 : vector<16x1xf32>
    %356 = tpu.reciprocal %355 {approx = true} : vector<16x1xf32> -> vector<16x1xf32>
    %357 = vector.broadcast %345 : vector<16x1xf32> to vector<16x32xf32>
    %358 = arith.subf %337, %357 : vector<16x32xf32>
    %359 = vector.shape_cast %339 : vector<32xf32> to vector<1x32xf32>
    %360 = vector.broadcast %359 : vector<1x32xf32> to vector<16x32xf32>
    %361 = arith.mulf %360, %358 : vector<16x32xf32>
    %362 = vector.broadcast %356 : vector<16x1xf32> to vector<16x32xf32>
    %363 = arith.mulf %361, %362 : vector<16x32xf32>
    %364 = vector.shape_cast %341 : vector<32xf32> to vector<1x32xf32>
    %365 = vector.broadcast %364 : vector<1x32xf32> to vector<16x32xf32>
    %366 = arith.addf %363, %365 : vector<16x32xf32>
    %367 = arith.truncf %366 : vector<16x32xf32> to vector<16x32xbf16>
    %c0_133 = arith.constant 0 : index
    %c0_134 = arith.constant 0 : index
    %368 = vector.load %arg14[%c0_133, %c0_134] : memref<32x64xbf16, #tpu.memory_space<vmem>>, vector<32x64xbf16>
    %cst_135 = arith.constant dense<0.000000e+00> : vector<16x64xf32>
    %369 = tpu.matmul %367, %368, %cst_135 {dimension_numbers = #tpu.dot_dimension_numbers<[1], [0], [0], [1], [0, 0, 1, 1], [], []>} : vector<16x32xbf16>, vector<32x64xbf16>, vector<16x64xf32> -> vector<16x64xf32>
    %c0_136 = arith.constant 0 : index
    %c0_137 = arith.constant 0 : index
    %370 = vector.load %arg15[%c0_136, %c0_137] : memref<1x64xf32, #tpu.memory_space<vmem>>, vector<1x64xf32>
    %371 = vector.broadcast %370 : vector<1x64xf32> to vector<16x64xf32>
    %372 = arith.addf %369, %371 : vector<16x64xf32>
    %cst_138 = arith.constant 0.000000e+00 : f32
    %373 = vector.broadcast %cst_138 : f32 to vector<16x64xf32>
    %374 = arith.maximumf %372, %373 : vector<16x64xf32>
    %375 = arith.truncf %374 : vector<16x64xf32> to vector<16x64xbf16>
    %c0_139 = arith.constant 0 : index
    %c0_140 = arith.constant 0 : index
    %376 = vector.load %arg16[%c0_139, %c0_140] : memref<64x32xbf16, #tpu.memory_space<vmem>>, vector<64x32xbf16>
    %cst_141 = arith.constant dense<0.000000e+00> : vector<16x32xf32>
    %377 = tpu.matmul %375, %376, %cst_141 {dimension_numbers = #tpu.dot_dimension_numbers<[1], [0], [0], [1], [0, 0, 1, 1], [], []>} : vector<16x64xbf16>, vector<64x32xbf16>, vector<16x32xf32> -> vector<16x32xf32>
    %c0_142 = arith.constant 0 : index
    %c0_143 = arith.constant 0 : index
    %378 = vector.load %arg17[%c0_142, %c0_143] : memref<1x32xf32, #tpu.memory_space<vmem>>, vector<1x32xf32>
    %379 = vector.broadcast %378 : vector<1x32xf32> to vector<16x32xf32>
    %380 = arith.addf %377, %379 : vector<16x32xf32>
    %381 = arith.addf %337, %380 : vector<16x32xf32>
    %382 = vector.shape_cast %381 : vector<16x32xf32> to vector<2x8x32xf32>
    %c0_144 = arith.constant 0 : index
    %c0_145 = arith.constant 0 : index
    %c0_146 = arith.constant 0 : index
    %383 = vector.load %arg20[%c0_144, %c0_145, %c0_146] : memref<2x8x32xf32, #tpu.memory_space<vmem>>, vector<2x8x32xf32>
    tpu.vector_store %arg20[%c0_144, %c0_145, %c0_146], %382 {strides = array<i32>} : memref<2x8x32xf32, #tpu.memory_space<vmem>>, vector<2x8x32xf32>,
    return
  }
  func.func @transform_0(%arg0: i32) -> (i32, i32, i32) {
    %c0_i32 = arith.constant 0 : i32
    %c0_i32_0 = arith.constant 0 : i32
    %c0_i32_1 = arith.constant 0 : i32
    return %arg0, %c0_i32, %c0_i32_0 : i32, i32, i32
  }
  func.func @transform_1(%arg0: i32) -> (i32, i32, i32) {
    %c0_i32 = arith.constant 0 : i32
    %c0_i32_0 = arith.constant 0 : i32
    %c0_i32_1 = arith.constant 0 : i32
    return %arg0, %c0_i32, %c0_i32_0 : i32, i32, i32
  }
  func.func @transform_2(%arg0: i32) -> (i32, i32, i32) {
    %c0_i32 = arith.constant 0 : i32
    %c0_i32_0 = arith.constant 0 : i32
    %c0_i32_1 = arith.constant 0 : i32
    return %arg0, %c0_i32, %c0_i32_0 : i32, i32, i32
  }
  func.func @transform_3(%arg0: i32) -> (i32, i32) {
    %c0_i32 = arith.constant 0 : i32
    %c0_i32_0 = arith.constant 0 : i32
    %c0_i32_1 = arith.constant 0 : i32
    return %c0_i32, %c0_i32_0 : i32, i32
  }
  func.func @transform_4(%arg0: i32) -> (i32, i32) {
    %c0_i32 = arith.constant 0 : i32
    %c0_i32_0 = arith.constant 0 : i32
    %c0_i32_1 = arith.constant 0 : i32
    return %c0_i32, %c0_i32_0 : i32, i32
  }
  func.func @transform_5(%arg0: i32) -> (i32, i32, i32) {
    %c0_i32 = arith.constant 0 : i32
    %c0_i32_0 = arith.constant 0 : i32
    %c0_i32_1 = arith.constant 0 : i32
    %c0_i32_2 = arith.constant 0 : i32
    return %c0_i32, %c0_i32_0, %c0_i32_1 : i32, i32, i32
  }
  func.func @transform_6(%arg0: i32) -> (i32, i32) {
    %c0_i32 = arith.constant 0 : i32
    %c0_i32_0 = arith.constant 0 : i32
    %c0_i32_1 = arith.constant 0 : i32
    return %c0_i32, %c0_i32_0 : i32, i32
  }
  func.func @transform_7(%arg0: i32) -> (i32, i32) {
    %c0_i32 = arith.constant 0 : i32
    %c0_i32_0 = arith.constant 0 : i32
    %c0_i32_1 = arith.constant 0 : i32
    return %c0_i32, %c0_i32_0 : i32, i32
  }
  func.func @transform_8(%arg0: i32) -> (i32, i32) {
    %c0_i32 = arith.constant 0 : i32
    %c0_i32_0 = arith.constant 0 : i32
    %c0_i32_1 = arith.constant 0 : i32
    return %c0_i32, %c0_i32_0 : i32, i32
  }
  func.func @transform_9(%arg0: i32) -> (i32, i32) {
    %c0_i32 = arith.constant 0 : i32
    %c0_i32_0 = arith.constant 0 : i32
    %c0_i32_1 = arith.constant 0 : i32
    return %c0_i32, %c0_i32_0 : i32, i32
  }
  func.func @transform_10(%arg0: i32) -> (i32, i32) {
    %c0_i32 = arith.constant 0 : i32
    %c0_i32_0 = arith.constant 0 : i32
    %c0_i32_1 = arith.constant 0 : i32
    return %c0_i32, %c0_i32_0 : i32, i32
  }
  func.func @transform_11(%arg0: i32) -> (i32, i32, i32) {
    %c0_i32 = arith.constant 0 : i32
    %c0_i32_0 = arith.constant 0 : i32
    %c0_i32_1 = arith.constant 0 : i32
    %c0_i32_2 = arith.constant 0 : i32
    return %c0_i32, %c0_i32_0, %c0_i32_1 : i32, i32, i32
  }
  func.func @transform_12(%arg0: i32) -> (i32, i32) {
    %c0_i32 = arith.constant 0 : i32
    %c0_i32_0 = arith.constant 0 : i32
    %c0_i32_1 = arith.constant 0 : i32
    return %c0_i32, %c0_i32_0 : i32, i32
  }
  func.func @transform_13(%arg0: i32) -> (i32, i32) {
    %c0_i32 = arith.constant 0 : i32
    %c0_i32_0 = arith.constant 0 : i32
    %c0_i32_1 = arith.constant 0 : i32
    return %c0_i32, %c0_i32_0 : i32, i32
  }
  func.func @transform_14(%arg0: i32) -> (i32, i32) {
    %c0_i32 = arith.constant 0 : i32
    %c0_i32_0 = arith.constant 0 : i32
    %c0_i32_1 = arith.constant 0 : i32
    return %c0_i32, %c0_i32_0 : i32, i32
  }
  func.func @transform_15(%arg0: i32) -> (i32, i32) {
    %c0_i32 = arith.constant 0 : i32
    %c0_i32_0 = arith.constant 0 : i32
    %c0_i32_1 = arith.constant 0 : i32
    return %c0_i32, %c0_i32_0 : i32, i32
  }
  func.func @transform_16(%arg0: i32) -> (i32, i32) {
    %c0_i32 = arith.constant 0 : i32
    %c0_i32_0 = arith.constant 0 : i32
    %c0_i32_1 = arith.constant 0 : i32
    return %c0_i32, %c0_i32_0 : i32, i32
  }
  func.func @transform_17(%arg0: i32) -> (i32, i32) {
    %c0_i32 = arith.constant 0 : i32
    %c0_i32_0 = arith.constant 0 : i32
    %c0_i32_1 = arith.constant 0 : i32
    return %c0_i32, %c0_i32_0 : i32, i32
  }
  func.func @transform_18(%arg0: i32) -> (i32, i32) {
    %c0_i32 = arith.constant 0 : i32
    %c0_i32_0 = arith.constant 0 : i32
    %c0_i32_1 = arith.constant 0 : i32
    return %c0_i32, %c0_i32_0 : i32, i32
  }
  func.func @transform_19(%arg0: i32) -> (i32, i32, i32) {
    %c0_i32 = arith.constant 0 : i32
    %c0_i32_0 = arith.constant 0 : i32
    %c0_i32_1 = arith.constant 0 : i32
    return %arg0, %c0_i32, %c0_i32_0 : i32, i32, i32
  }
}

</mosaic_0001>

<llo_original>
// kernel: decoder_layer.1
$region0: #{decoder_layer.1}
  #allocation0 [shape = 'u32[]', space=smem, size = 0x4, offset = 0x4, fixed_abs, tag = 'smem constant byte address 0x4 - core index']
  #allocation1 [shape = 'u32[144,128]{1,0:T(1,128)}', space=vmem, size = 0x12000, scoped, tag = 'internal scratch']
  %s0 = inlined_call_operand.vmem [shape: f32[2,8,32], index: 0, kind: input, shape index: {}]
  %s1 = inlined_call_operand.vmem [shape: f32[2,8,32], index: 1, kind: input, shape index: {}]
  %s2 = inlined_call_operand.vmem [shape: f32[2,1,8], index: 2, kind: input, shape index: {}]
  %s3 = inlined_call_operand.vmem [shape: bf16[32,96], index: 3, kind: input, shape index: {}]
  %s4 = inlined_call_operand.vmem [shape: f32[1,96], index: 4, kind: input, shape index: {}]
  %s5 = inlined_call_operand.vmem [shape: bf16[4,8,32], index: 5, kind: input, shape index: {}]
  %s6 = inlined_call_operand.vmem [shape: f32[1,32], index: 6, kind: input, shape index: {}]
  %s7 = inlined_call_operand.vmem [shape: bf16[32,32], index: 7, kind: input, shape index: {}]
  %s8 = inlined_call_operand.vmem [shape: f32[1,32], index: 8, kind: input, shape index: {}]
  %s9 = inlined_call_operand.vmem [shape: bf16[32,64], index: 9, kind: input, shape index: {}]
  %s10 = inlined_call_operand.vmem [shape: f32[1,64], index: 10, kind: input, shape index: {}]
  %s11 = inlined_call_operand.vmem [shape: bf16[4,8,32], index: 11, kind: input, shape index: {}]
  %s12 = inlined_call_operand.vmem [shape: f32[1,32], index: 12, kind: input, shape index: {}]
  %s13 = inlined_call_operand.vmem [shape: bf16[32,64], index: 13, kind: input, shape index: {}]
  %s14 = inlined_call_operand.vmem [shape: f32[1,64], index: 14, kind: input, shape index: {}]
  %s15 = inlined_call_operand.vmem [shape: bf16[64,32], index: 15, kind: input, shape index: {}]
  %s16 = inlined_call_operand.vmem [shape: f32[1,32], index: 16, kind: input, shape index: {}]
  %s17 = inlined_call_operand.vmem [shape: f32[3,32], index: 17, kind: input, shape index: {}]
  %s18 = inlined_call_operand.vmem [shape: f32[3,32], index: 18, kind: input, shape index: {}]
  %s19 = inlined_call_operand.hbm [shape: f32[2,8,32], index: 19, kind: output, shape index: {}]
  %s20 = sld [smem:[#allocation0]]
  $region86: #{decoder_layer.1} parent=0
    _
  %s22 = ssub.s32 1, %s20
  %s23 = scalar_select 0, %s22, %s20
  $region1: #{decoder_layer.1} parent=0
    #allocation2 [shape = 'u8[8192]{0}', space=vmem, size = 0x2000, scoped, tag = 'output window, operand 0, single buffered']
    #allocation3 [shape = 's32[1]{0}', space=sflag, size = 0x4, scoped, tag = 'scoped memory for decoder_layer.1']
    %24 = vsyncpa [#allocation3], 0
    // Predicated region
    $region2: #{decoder_layer.1} parent=1 // pred_check
      _
    $region3: #{decoder_layer.1} parent=1 // pred_check_branch
      %26 = sbr.rel (0) target = $region5
    $region4: #{decoder_layer.1} parent=1 // pred_region
      _
    $region5: #{decoder_layer.1} parent=1 // pred_fallthru
      _
    // Predicated region
    $region6: #{decoder_layer.1} parent=1 // pred_check
      _
    $region7: #{decoder_layer.1} parent=1 // pred_check_branch
      %28 = sbr.rel (0) target = $region9
    $region8: #{decoder_layer.1} parent=1 // pred_region
      _
    $region9: #{decoder_layer.1} parent=1 // pred_fallthru
      _
    // Predicated region
    $region10: #{decoder_layer.1} parent=1 // pred_check
      _
    $region11: #{decoder_layer.1} parent=1 // pred_check_branch
      %30 = sbr.rel (0) target = $region13
    $region12: #{decoder_layer.1} parent=1 // pred_region
      _
    $region13: #{decoder_layer.1} parent=1 // pred_fallthru
      _
    // Predicated region
    $region14: #{decoder_layer.1} parent=1 // pred_check
      _
    $region15: #{decoder_layer.1} parent=1 // pred_check_branch
      %32 = sbr.rel (0) target = $region17
    $region16: #{decoder_layer.1} parent=1 // pred_region
      _
    $region17: #{decoder_layer.1} parent=1 // pred_fallthru
      _
    // Predicated region
    $region18: #{decoder_layer.1} parent=1 // pred_check
      _
    $region19: #{decoder_layer.1} parent=1 // pred_check_branch
      %34 = sbr.rel (0) target = $region21
    $region20: #{decoder_layer.1} parent=1 // pred_region
      _
    $region21: #{decoder_layer.1} parent=1 // pred_fallthru
      _
    // Predicated region
    $region22: #{decoder_layer.1} parent=1 // pred_check
      _
    $region23: #{decoder_layer.1} parent=1 // pred_check_branch
      %36 = sbr.rel (0) target = $region25
    $region24: #{decoder_layer.1} parent=1 // pred_region
      _
    $region25: #{decoder_layer.1} parent=1 // pred_fallthru
      _
    // Predicated region
    $region26: #{decoder_layer.1} parent=1 // pred_check
      _
    $region27: #{decoder_layer.1} parent=1 // pred_check_branch
      %38 = sbr.rel (0) target = $region29
    $region28: #{decoder_layer.1} parent=1 // pred_region
      _
    $region29: #{decoder_layer.1} parent=1 // pred_fallthru
      _
    // Predicated region
    $region30: #{decoder_layer.1} parent=1 // pred_check
      _
    $region31: #{decoder_layer.1} parent=1 // pred_check_branch
      %40 = sbr.rel (0) target = $region33
    $region32: #{decoder_layer.1} parent=1 // pred_region
      _
    $region33: #{decoder_layer.1} parent=1 // pred_fallthru
      _
    // Predicated region
    $region34: #{decoder_layer.1} parent=1 // pred_check
      _
    $region35: #{decoder_layer.1} parent=1 // pred_check_branch
      %42 = sbr.rel (0) target = $region37
    $region36: #{decoder_layer.1} parent=1 // pred_region
      _
    $region37: #{decoder_layer.1} parent=1 // pred_fallthru
      _
    // Predicated region
    $region38: #{decoder_layer.1} parent=1 // pred_check
      _
    $region39: #{decoder_layer.1} parent=1 // pred_check_branch
      %44 = sbr.rel (0) target = $region41
    $region40: #{decoder_layer.1} parent=1 // pred_region
      _
    $region41: #{decoder_layer.1} parent=1 // pred_fallthru
      _
    // Predicated region
    $region42: #{decoder_layer.1} parent=1 // pred_check
      _
    $region43: #{decoder_layer.1} parent=1 // pred_check_branch
      %46 = sbr.rel (0) target = $region45
    $region44: #{decoder_layer.1} parent=1 // pred_region
      _
    $region45: #{decoder_layer.1} parent=1 // pred_fallthru
      _
    // Predicated region
    $region46: #{decoder_layer.1} parent=1 // pred_check
      _
    $region47: #{decoder_layer.1} parent=1 // pred_check_branch
      %48 = sbr.rel (0) target = $region49
    $region48: #{decoder_layer.1} parent=1 // pred_region
      _
    $region49: #{decoder_layer.1} parent=1 // pred_fallthru
      _
    // Predicated region
    $region50: #{decoder_layer.1} parent=1 // pred_check
      _
    $region51: #{decoder_layer.1} parent=1 // pred_check_branch
      %50 = sbr.rel (0) target = $region53
    $region52: #{decoder_layer.1} parent=1 // pred_region
      _
    $region53: #{decoder_layer.1} parent=1 // pred_fallthru
      _
    // Predicated region
    $region54: #{decoder_layer.1} parent=1 // pred_check
      _
    $region55: #{decoder_layer.1} parent=1 // pred_check_branch
      %52 = sbr.rel (0) target = $region57
    $region56: #{decoder_layer.1} parent=1 // pred_region
      _
    $region57: #{decoder_layer.1} parent=1 // pred_fallthru
      _
    // Predicated region
    $region58: #{decoder_layer.1} parent=1 // pred_check
      _
    $region59: #{decoder_layer.1} parent=1 // pred_check_branch
      %54 = sbr.rel (0) target = $region61
    $region60: #{decoder_layer.1} parent=1 // pred_region
      _
    $region61: #{decoder_layer.1} parent=1 // pred_fallthru
      _
    // Predicated region
    $region62: #{decoder_layer.1} parent=1 // pred_check
      _
    $region63: #{decoder_layer.1} parent=1 // pred_check_branch
      %56 = sbr.rel (0) target = $region65
    $region64: #{decoder_layer.1} parent=1 // pred_region
      _
    $region65: #{decoder_layer.1} parent=1 // pred_fallthru
      _
    // Predicated region
    $region66: #{decoder_layer.1} parent=1 // pred_check
      _
    $region67: #{decoder_layer.1} parent=1 // pred_check_branch
      %58 = sbr.rel (0) target = $region69
    $region68: #{decoder_layer.1} parent=1 // pred_region
      _
    $region69: #{decoder_layer.1} parent=1 // pred_fallthru
      _
    // Predicated region
    $region70: #{decoder_layer.1} parent=1 // pred_check
      _
    $region71: #{decoder_layer.1} parent=1 // pred_check_branch
      %60 = sbr.rel (0) target = $region73
    $region72: #{decoder_layer.1} parent=1 // pred_region
      _
    $region73: #{decoder_layer.1} parent=1 // pred_fallthru
      _
    // Predicated region
    $region74: #{decoder_layer.1} parent=1 // pred_check
      _
    $region75: #{decoder_layer.1} parent=1 // pred_check_branch
      %62 = sbr.rel (0) target = $region77
    $region76: #{decoder_layer.1} parent=1 // pred_region
      _
    $region77: #{decoder_layer.1} parent=1 // pred_fallthru
      _
    %v64 = vld [vmem:[%s0] sm:$0xff]
    %v65 = vld [vmem:[%s0 + $0x8] sm:$0xff]
    %v66 = vld [vmem:[%s1] sm:$0xff]
    %v67 = vld [vmem:[%s1 + $0x8] sm:$0xff]
    %v68 = vld [vmem:[%s2] sm:$0x1]
    %v69 = vld [vmem:[%s2 + $0x1] sm:$0x1]
    %vm70 = vcmp.gt.f32.partialorder %v68, 0.0
    %vm71 = vcmp.gt.f32.partialorder %v69, 0.0
    %v72 = vld [vmem:[%s17] sm:$0x1]
    %v73 = vld [vmem:[%s18] sm:$0x1]
    %vm74 = vcmask 261120
    %v75 = vsel %vm74, %v64, 0.0
    %76 = vadd.xlane.f32.xlu0 %v75
    %v77 = vpop.xlane.xlu0 %76
    %v78 = vsel %vm74, %v65, 0.0
    %79 = vadd.xlane.f32.xlu0 %v78
    %v80 = vpop.xlane.xlu0 %79
    %v81 = vrcp.pop 32.0
    %v82 = vmul.f32 %v77, %v81
    %v83 = vmul.f32 %v80, %v81
    %v84 = vsub.f32 %v64, %v82
    %v85 = vsub.f32 %v65, %v83
    %v86 = vmul.f32 %v84, %v84
    %v87 = vmul.f32 %v85, %v85
    %v88 = vsel %vm74, %v86, 0.0
    %89 = vadd.xlane.f32.xlu0 %v88
    %v90 = vpop.xlane.xlu0 %89
    %v91 = vsel %vm74, %v87, 0.0
    %92 = vadd.xlane.f32.xlu0 %v91
    %v93 = vpop.xlane.xlu0 %92
    %v94 = vmul.f32 %v90, 0.032258064
    %v95 = vmul.f32 %v93, 0.032258064
    %v96 = vrsqrt.pop %v94
    %v97 = vmul.f32 %v94, %v96
    %vm98 = vcmp.eq.f32.partialorder %v94, inf
    %v99 = vsel %vm98, %v94, %v97
    %vm100 = vcmp.eq.f32.partialorder %v94, 0.0
    %v101 = vand.u32 %v94, 2147483648
    %v102 = vsel %vm100, %v101, %v99
    %v103 = vrsqrt.pop %v95
    %v104 = vmul.f32 %v95, %v103
    %vm105 = vcmp.eq.f32.partialorder %v95, inf
    %v106 = vsel %vm105, %v95, %v104
    %vm107 = vcmp.eq.f32.partialorder %v95, 0.0
    %v108 = vand.u32 %v95, 2147483648
    %v109 = vsel %vm107, %v108, %v106
    %v110 = vadd.f32 %v102, 1e-06
    %v111 = vadd.f32 %v109, 1e-06
    %v112 = vrcp.pop %v110
    %v113 = vrcp.pop %v111
    %v114 = vlaneseq
    %v115 = vshrl.u32 %v114, 7
    %v116 = vsub.s32 0, %v115
    %v117 = vrot.slane %v72, %v116
    %v118 = vmul.f32 %v117, %v84
    %v119 = vmul.f32 %v117, %v85
    %v120 = vmul.f32 %v118, %v112
    %v121 = vmul.f32 %v119, %v113
    %v122 = vlaneseq
    %v123 = vshrl.u32 %v122, 7
    %v124 = vsub.s32 0, %v123
    %v125 = vrot.slane %v73, %v124
    %v126 = vadd.f32 %v120, %v125
    %v127 = vadd.f32 %v121, %v125
    %v128 = vpack.c.bf16 %v127, %v126
    %v129 = vld [vmem:[%s3] sm:$0xf]
    %v130 = vld [vmem:[%s3 + $0x4] sm:$0xf]
    %v131 = vld [vmem:[%s3 + $0x8] sm:$0xf]
    %v132 = vld [vmem:[%s3 + $0xc] sm:$0xf]
    %v133 = vld [vmem:[%s4] sm:$0x1]
    %v135 = vlaneseq
    %v136 = vshrl.u32 %v135, 7
    %v137 = vsub.s32 0, %v136
    %v138 = vrot.slane %v133, %v137
    %v144 = vunpack.c.l.b16 %v129
    %v145 = vunpack.c.l.b16 %v130
    %v146 = vunpack.c.l.b16 %v131
    %v147 = vunpack.c.l.b16 %v132
    %v148 = vpack.c.b16 %v145, %v144
    %v149 = vpack.c.b16 %v147, %v146
    %v153 = vsel %vm74, %v128, 0
    %155 = vmatprep.subr.bf16.mxu0 0
    %156 = vmatpush1.bf16.msra.mxu0 %v148
    %157 = vmatprep.subr.bf16.mxu0 0
    %158 = vmatpush1.bf16.msra.mxu0 %v149
    %159 = vmatprep.subr.bf16.mxu0 0
    %160 = vmatpush1.bf16.msra.mxu0 0
    %161 = vmatprep.subr.bf16.mxu0 0
    %162 = vmatpush1.bf16.msra.mxu0 0
    %163 = vmatprep.subr.bf16.mxu0 0
    %164 = vmatpush1.bf16.msra.mxu0 0
    %165 = vmatprep.subr.bf16.mxu0 0
    %166 = vmatpush1.bf16.msra.mxu0 0
    %167 = vmatprep.subr.bf16.mxu0 0
    %168 = vmatpush1.bf16.msra.mxu0 0
    %169 = vmatprep.subr.bf16.mxu0 0
    %170 = vmatpush1.bf16.msra.mxu0 0
    %171 = vmatprep.subr.bf16.mxu0 0
    %172 = vmatpush1.bf16.msra.mxu0 0
    %173 = vmatprep.subr.bf16.mxu0 0
    %174 = vmatpush1.bf16.msra.mxu0 0
    %175 = vmatprep.subr.bf16.mxu0 0
    %176 = vmatpush1.bf16.msra.mxu0 0
    %177 = vmatprep.subr.bf16.mxu0 0
    %178 = vmatpush1.bf16.msra.mxu0 0
    %179 = vmatprep.subr.bf16.mxu0 0
    %180 = vmatpush1.bf16.msra.mxu0 0
    %181 = vmatprep.subr.bf16.mxu0 0
    %182 = vmatpush1.bf16.msra.mxu0 0
    %183 = vmatprep.subr.bf16.mxu0 0
    %184 = vmatpush1.bf16.msra.mxu0 0
    %185 = vmatprep.subr.bf16.mxu0 0
    %186 = vmatpush1.bf16.msra.mxu0 0
    %187 = vmatprep.mubr.bf16.mxu0 0
    %188 = vmatmul.mubr.bf16.gmra.mrb[0].mxu0 %v153
    %v189 = vpop.f32.mrb[0].mxu0
    %v190 = vadd.f32 %v138, %v189
    %v191 = vpop.f32.mrb[0].mxu0
    %v192 = vpop.f32.mrb[0].mxu0
    %v193 = vadd.f32 %v138, %v192
    %v194 = vpop.f32.mrb[0].mxu0
    %195 = vdwg.mxu0
    %v196 = vlaneseq
    %v197 = vshrl.u32 %v196, 7
    %v198 = vlaneseq
    %v199 = vand.u32 %v198, 127
    %vm200 = vcmp.ge.s32.totalorder %v197, %v199
    %v201 = vld [vmem:[%s6] sm:$0x1]
    %v202 = vpack.c.bf16 %v193, %v190
    %v204 = vunpack.c.l.b16 %v202
    %v205 = vunpack.c.h.b16 %v202
    %v206 = vpack.c.b16 %v204, %v204
    %v207 = vpack.c.b16 %v205, %v205
    %208 = vrot.lane.b32.xlu0 %v206, 96
    %v209 = vpop.permute.xlu0 %208
    %vm210 = vcmask 64512
    %v212 = vsel %vm210, %v206, 0
    %v215 = vsel %vm210, %v209, 0
    %217 = vmatprep.subr.bf16.mxu0 0
    %218 = vmatpush1.bf16.xpose.msra.mxu0 %v215
    %219 = vmatprep.subr.bf16.mxu0 0
    %220 = vmatpush1.bf16.xpose.msra.mxu0 0
    %221 = vmatprep.subr.bf16.mxu0 0
    %222 = vmatpush1.bf16.xpose.msra.mxu0 0
    %223 = vmatprep.subr.bf16.mxu0 0
    %224 = vmatpush1.bf16.xpose.msra.mxu0 0
    %225 = vmatprep.subr.bf16.mxu0 0
    %226 = vmatpush1.bf16.xpose.msra.mxu0 0
    %227 = vmatprep.subr.bf16.mxu0 0
    %228 = vmatpush1.bf16.xpose.msra.mxu0 0
    %229 = vmatprep.subr.bf16.mxu0 0
    %230 = vmatpush1.bf16.xpose.msra.mxu0 0
    %231 = vmatprep.subr.bf16.mxu0 0
    %232 = vmatpush1.bf16.xpose.msra.mxu0 0
    %233 = vmatprep.subr.bf16.mxu0 0
    %234 = vmatpush1.bf16.xpose.msra.mxu0 0
    %235 = vmatprep.subr.bf16.mxu0 0
    %236 = vmatpush1.bf16.xpose.msra.mxu0 0
    %237 = vmatprep.subr.bf16.mxu0 0
    %238 = vmatpush1.bf16.xpose.msra.mxu0 0
    %239 = vmatprep.subr.bf16.mxu0 0
    %240 = vmatpush1.bf16.xpose.msra.mxu0 0
    %241 = vmatprep.subr.bf16.mxu0 0
    %242 = vmatpush1.bf16.xpose.msra.mxu0 0
    %243 = vmatprep.subr.bf16.mxu0 0
    %244 = vmatpush1.bf16.xpose.msra.mxu0 0
    %245 = vmatprep.subr.bf16.mxu0 0
    %246 = vmatpush1.bf16.xpose.msra.mxu0 0
    %247 = vmatprep.subr.bf16.mxu0 0
    %248 = vmatpush1.bf16.xpose.msra.mxu0 0
    %249 = vmatprep.mubr.bf16.mxu0 0
    %250 = vmatmul.mubr.bf16.gmra.mrb[0].mxu0 %v212
    %v251 = vpop.f32.mrb[0].mxu0
    %v252 = vadd.f32 0.0, %v251
    %v253 = vpop.f32.mrb[0].mxu0
    %v254 = vpop.f32.mrb[0].mxu0
    %v255 = vpop.f32.mrb[0].mxu0
    %256 = vdwg.mxu0
    %257 = vrot.lane.b32.xlu0 %v207, 96
    %v258 = vpop.permute.xlu0 %257
    %v260 = vsel %vm210, %v207, 0
    %v263 = vsel %vm210, %v258, 0
    %265 = vmatprep.subr.bf16.mxu0 0
    %266 = vmatpush1.bf16.xpose.msra.mxu0 %v263
    %267 = vmatprep.subr.bf16.mxu0 0
    %268 = vmatpush1.bf16.xpose.msra.mxu0 0
    %269 = vmatprep.subr.bf16.mxu0 0
    %270 = vmatpush1.bf16.xpose.msra.mxu0 0
    %271 = vmatprep.subr.bf16.mxu0 0
    %272 = vmatpush1.bf16.xpose.msra.mxu0 0
    %273 = vmatprep.subr.bf16.mxu0 0
    %274 = vmatpush1.bf16.xpose.msra.mxu0 0
    %275 = vmatprep.subr.bf16.mxu0 0
    %276 = vmatpush1.bf16.xpose.msra.mxu0 0
    %277 = vmatprep.subr.bf16.mxu0 0
    %278 = vmatpush1.bf16.xpose.msra.mxu0 0
    %279 = vmatprep.subr.bf16.mxu0 0
    %280 = vmatpush1.bf16.xpose.msra.mxu0 0
    %281 = vmatprep.subr.bf16.mxu0 0
    %282 = vmatpush1.bf16.xpose.msra.mxu0 0
    %283 = vmatprep.subr.bf16.mxu0 0
    %284 = vmatpush1.bf16.xpose.msra.mxu0 0
    %285 = vmatprep.subr.bf16.mxu0 0
    %286 = vmatpush1.bf16.xpose.msra.mxu0 0
    %287 = vmatprep.subr.bf16.mxu0 0
    %288 = vmatpush1.bf16.xpose.msra.mxu0 0
    %289 = vmatprep.subr.bf16.mxu0 0
    %290 = vmatpush1.bf16.xpose.msra.mxu0 0
    %291 = vmatprep.subr.bf16.mxu0 0
    %292 = vmatpush1.bf16.xpose.msra.mxu0 0
    %293 = vmatprep.subr.bf16.mxu0 0
    %294 = vmatpush1.bf16.xpose.msra.mxu0 0
    %295 = vmatprep.subr.bf16.mxu0 0
    %296 = vmatpush1.bf16.xpose.msra.mxu0 0
    %297 = vmatprep.mubr.bf16.mxu0 0
    %298 = vmatmul.mubr.bf16.gmra.mrb[0].mxu0 %v260
    %v299 = vpop.f32.mrb[0].mxu0
    %v300 = vadd.f32 0.0, %v299
    %v301 = vpop.f32.mrb[0].mxu0
    %v302 = vpop.f32.mrb[0].mxu0
    %v303 = vpop.f32.mrb[0].mxu0
    %304 = vdwg.mxu0
    %v305 = vmul.f32 %v252, 0.35355338
    %v306 = vmul.f32 %v300, 0.35355338
    %v307 = vsel %vm200, 1, 0
    %vm308 = vcmp.eq.s32.totalorder %v307, 1
    %v309 = vsel %vm308, %v305, -1e+09
    %v310 = vsel %vm308, %v306, -1e+09
    %v311 = vsel %vm210, %v309, -inf
    %312 = vmax.xlane.f32.xlu0 %v311
    %v313 = vpop.xlane.xlu0 %312
    %v314 = vsel %vm210, %v310, -inf
    %315 = vmax.xlane.f32.xlu0 %v314
    %v316 = vpop.xlane.xlu0 %315
    %v317 = vsub.f32 %v309, %v313
    %v318 = vsub.f32 %v310, %v316
    %v319 = vmul.f32 %v317, 1.442695
    %v320 = vpow.pop %v319
    %v321 = vmul.f32 %v318, 1.442695
    %v322 = vpow.pop %v321
    %v323 = vsel %vm210, %v320, 0.0
    %324 = vadd.xlane.f32.xlu0 %v323
    %v325 = vpop.xlane.xlu0 %324
    %v326 = vsel %vm210, %v322, 0.0
    %327 = vadd.xlane.f32.xlu0 %v326
    %v328 = vpop.xlane.xlu0 %327
    %v329 = vrcp.pop %v325
    %v330 = vrcp.pop %v328
    %v331 = vmul.f32 %v320, %v329
    %v332 = vmul.f32 %v322, %v330
    %v333 = vpack.c.bf16 %v331, %v331
    %v334 = vpack.c.bf16 %v332, %v332
    %335 = vrot.lane.b32.xlu0 %v206, 64
    %v336 = vpop.permute.xlu0 %335
    %v338 = vsel %vm210, %v333, 0
    %vm340 = vcmask 1043456
    %v342 = vsel %vm340, %v336, 0
    %344 = vmatprep.subr.bf16.mxu0 0
    %345 = vmatpush1.bf16.msra.mxu0 %v342
    %346 = vmatprep.subr.bf16.mxu0 0
    %347 = vmatpush1.bf16.msra.mxu0 0
    %348 = vmatprep.subr.bf16.mxu0 0
    %349 = vmatpush1.bf16.msra.mxu0 0
    %350 = vmatprep.subr.bf16.mxu0 0
    %351 = vmatpush1.bf16.msra.mxu0 0
    %352 = vmatprep.subr.bf16.mxu0 0
    %353 = vmatpush1.bf16.msra.mxu0 0
    %354 = vmatprep.subr.bf16.mxu0 0
    %355 = vmatpush1.bf16.msra.mxu0 0
    %356 = vmatprep.subr.bf16.mxu0 0
    %357 = vmatpush1.bf16.msra.mxu0 0
    %358 = vmatprep.subr.bf16.mxu0 0
    %359 = vmatpush1.bf16.msra.mxu0 0
    %360 = vmatprep.subr.bf16.mxu0 0
    %361 = vmatpush1.bf16.msra.mxu0 0
    %362 = vmatprep.subr.bf16.mxu0 0
    %363 = vmatpush1.bf16.msra.mxu0 0
    %364 = vmatprep.subr.bf16.mxu0 0
    %365 = vmatpush1.bf16.msra.mxu0 0
    %366 = vmatprep.subr.bf16.mxu0 0
    %367 = vmatpush1.bf16.msra.mxu0 0
    %368 = vmatprep.subr.bf16.mxu0 0
    %369 = vmatpush1.bf16.msra.mxu0 0
    %370 = vmatprep.subr.bf16.mxu0 0
    %371 = vmatpush1.bf16.msra.mxu0 0
    %372 = vmatprep.subr.bf16.mxu0 0
    %373 = vmatpush1.bf16.msra.mxu0 0
    %374 = vmatprep.subr.bf16.mxu0 0
    %375 = vmatpush1.bf16.msra.mxu0 0
    %376 = vmatprep.mubr.bf16.mxu0 0
    %377 = vmatmul.mubr.bf16.gmra.mrb[0].mxu0 %v338
    %v378 = vpop.f32.mrb[0].mxu0
    %v379 = vadd.f32 0.0, %v378
    %v380 = vpop.f32.mrb[0].mxu0
    %v381 = vpop.f32.mrb[0].mxu0
    %v382 = vpop.f32.mrb[0].mxu0
    %383 = vdwg.mxu0
    %384 = vrot.lane.b32.xlu0 %v207, 64
    %v385 = vpop.permute.xlu0 %384
    %v387 = vsel %vm210, %v334, 0
    %v390 = vsel %vm340, %v385, 0
    %392 = vmatprep.subr.bf16.mxu0 0
    %393 = vmatpush1.bf16.msra.mxu0 %v390
    %394 = vmatprep.subr.bf16.mxu0 0
    %395 = vmatpush1.bf16.msra.mxu0 0
    %396 = vmatprep.subr.bf16.mxu0 0
    %397 = vmatpush1.bf16.msra.mxu0 0
    %398 = vmatprep.subr.bf16.mxu0 0
    %399 = vmatpush1.bf16.msra.mxu0 0
    %400 = vmatprep.subr.bf16.mxu0 0
    %401 = vmatpush1.bf16.msra.mxu0 0
    %402 = vmatprep.subr.bf16.mxu0 0
    %403 = vmatpush1.bf16.msra.mxu0 0
    %404 = vmatprep.subr.bf16.mxu0 0
    %405 = vmatpush1.bf16.msra.mxu0 0
    %406 = vmatprep.subr.bf16.mxu0 0
    %407 = vmatpush1.bf16.msra.mxu0 0
    %408 = vmatprep.subr.bf16.mxu0 0
    %409 = vmatpush1.bf16.msra.mxu0 0
    %410 = vmatprep.subr.bf16.mxu0 0
    %411 = vmatpush1.bf16.msra.mxu0 0
    %412 = vmatprep.subr.bf16.mxu0 0
    %413 = vmatpush1.bf16.msra.mxu0 0
    %414 = vmatprep.subr.bf16.mxu0 0
    %415 = vmatpush1.bf16.msra.mxu0 0
    %416 = vmatprep.subr.bf16.mxu0 0
    %417 = vmatpush1.bf16.msra.mxu0 0
    %418 = vmatprep.subr.bf16.mxu0 0
    %419 = vmatpush1.bf16.msra.mxu0 0
    %420 = vmatprep.subr.bf16.mxu0 0
    %421 = vmatpush1.bf16.msra.mxu0 0
    %422 = vmatprep.subr.bf16.mxu0 0
    %423 = vmatpush1.bf16.msra.mxu0 0
    %424 = vmatprep.mubr.bf16.mxu0 0
    %425 = vmatmul.mubr.bf16.gmra.mrb[0].mxu0 %v387
    %v426 = vpop.f32.mrb[0].mxu0
    %v427 = vadd.f32 0.0, %v426
    %v428 = vpop.f32.mrb[0].mxu0
    %v429 = vpop.f32.mrb[0].mxu0
    %v430 = vpop.f32.mrb[0].mxu0
    %431 = vdwg.mxu0
    %v432 = vpack.c.bf16 %v427, %v379
    %v433 = vld [vmem:[%s5] sm:$0xf]
    %434 = vrot.lane.b32.xlu0 %v206, 120
    %v435 = vpop.permute.xlu0 %434
    %436 = vrot.lane.b32.xlu0 %v206, 88
    %v437 = vpop.permute.xlu0 %436
    %v439 = vsel %vm210, %v435, 0
    %v442 = vsel %vm210, %v437, 0
    %444 = vmatprep.subr.bf16.mxu0 0
    %445 = vmatpush1.bf16.xpose.msra.mxu0 %v442
    %446 = vmatprep.subr.bf16.mxu0 0
    %447 = vmatpush1.bf16.xpose.msra.mxu0 0
    %448 = vmatprep.subr.bf16.mxu0 0
    %449 = vmatpush1.bf16.xpose.msra.mxu0 0
    %450 = vmatprep.subr.bf16.mxu0 0
    %451 = vmatpush1.bf16.xpose.msra.mxu0 0
    %452 = vmatprep.subr.bf16.mxu0 0
    %453 = vmatpush1.bf16.xpose.msra.mxu0 0
    %454 = vmatprep.subr.bf16.mxu0 0
    %455 = vmatpush1.bf16.xpose.msra.mxu0 0
    %456 = vmatprep.subr.bf16.mxu0 0
    %457 = vmatpush1.bf16.xpose.msra.mxu0 0
    %458 = vmatprep.subr.bf16.mxu0 0
    %459 = vmatpush1.bf16.xpose.msra.mxu0 0
    %460 = vmatprep.subr.bf16.mxu0 0
    %461 = vmatpush1.bf16.xpose.msra.mxu0 0
    %462 = vmatprep.subr.bf16.mxu0 0
    %463 = vmatpush1.bf16.xpose.msra.mxu0 0
    %464 = vmatprep.subr.bf16.mxu0 0
    %465 = vmatpush1.bf16.xpose.msra.mxu0 0
    %466 = vmatprep.subr.bf16.mxu0 0
    %467 = vmatpush1.bf16.xpose.msra.mxu0 0
    %468 = vmatprep.subr.bf16.mxu0 0
    %469 = vmatpush1.bf16.xpose.msra.mxu0 0
    %470 = vmatprep.subr.bf16.mxu0 0
    %471 = vmatpush1.bf16.xpose.msra.mxu0 0
    %472 = vmatprep.subr.bf16.mxu0 0
    %473 = vmatpush1.bf16.xpose.msra.mxu0 0
    %474 = vmatprep.subr.bf16.mxu0 0
    %475 = vmatpush1.bf16.xpose.msra.mxu0 0
    %476 = vmatprep.mubr.bf16.mxu0 0
    %477 = vmatmul.mubr.bf16.gmra.mrb[0].mxu0 %v439
    %v478 = vpop.f32.mrb[0].mxu0
    %v479 = vadd.f32 0.0, %v478
    %v480 = vpop.f32.mrb[0].mxu0
    %v481 = vpop.f32.mrb[0].mxu0
    %v482 = vpop.f32.mrb[0].mxu0
    %483 = vdwg.mxu0
    %484 = vrot.lane.b32.xlu0 %v207, 120
    %v485 = vpop.permute.xlu0 %484
    %486 = vrot.lane.b32.xlu0 %v207, 88
    %v487 = vpop.permute.xlu0 %486
    %v489 = vsel %vm210, %v485, 0
    %v492 = vsel %vm210, %v487, 0
    %494 = vmatprep.subr.bf16.mxu0 0
    %495 = vmatpush1.bf16.xpose.msra.mxu0 %v492
    %496 = vmatprep.subr.bf16.mxu0 0
    %497 = vmatpush1.bf16.xpose.msra.mxu0 0
    %498 = vmatprep.subr.bf16.mxu0 0
    %499 = vmatpush1.bf16.xpose.msra.mxu0 0
    %500 = vmatprep.subr.bf16.mxu0 0
    %501 = vmatpush1.bf16.xpose.msra.mxu0 0
    %502 = vmatprep.subr.bf16.mxu0 0
    %503 = vmatpush1.bf16.xpose.msra.mxu0 0
    %504 = vmatprep.subr.bf16.mxu0 0
    %505 = vmatpush1.bf16.xpose.msra.mxu0 0
    %506 = vmatprep.subr.bf16.mxu0 0
    %507 = vmatpush1.bf16.xpose.msra.mxu0 0
    %508 = vmatprep.subr.bf16.mxu0 0
    %509 = vmatpush1.bf16.xpose.msra.mxu0 0
    %510 = vmatprep.subr.bf16.mxu0 0
    %511 = vmatpush1.bf16.xpose.msra.mxu0 0
    %512 = vmatprep.subr.bf16.mxu0 0
    %513 = vmatpush1.bf16.xpose.msra.mxu0 0
    %514 = vmatprep.subr.bf16.mxu0 0
    %515 = vmatpush1.bf16.xpose.msra.mxu0 0
    %516 = vmatprep.subr.bf16.mxu0 0
    %517 = vmatpush1.bf16.xpose.msra.mxu0 0
    %518 = vmatprep.subr.bf16.mxu0 0
    %519 = vmatpush1.bf16.xpose.msra.mxu0 0
    %520 = vmatprep.subr.bf16.mxu0 0
    %521 = vmatpush1.bf16.xpose.msra.mxu0 0
    %522 = vmatprep.subr.bf16.mxu0 0
    %523 = vmatpush1.bf16.xpose.msra.mxu0 0
    %524 = vmatprep.subr.bf16.mxu0 0
    %525 = vmatpush1.bf16.xpose.msra.mxu0 0
    %526 = vmatprep.mubr.bf16.mxu0 0
    %527 = vmatmul.mubr.bf16.gmra.mrb[0].mxu0 %v489
    %v528 = vpop.f32.mrb[0].mxu0
    %v529 = vadd.f32 0.0, %v528
    %v530 = vpop.f32.mrb[0].mxu0
    %v531 = vpop.f32.mrb[0].mxu0
    %v532 = vpop.f32.mrb[0].mxu0
    %533 = vdwg.mxu0
    %v534 = vmul.f32 %v479, 0.35355338
    %v535 = vmul.f32 %v529, 0.35355338
    %v536 = vsel %vm308, %v534, -1e+09
    %v537 = vsel %vm308, %v535, -1e+09
    %v538 = vsel %vm210, %v536, -inf
    %539 = vmax.xlane.f32.xlu0 %v538
    %v540 = vpop.xlane.xlu0 %539
    %v541 = vsel %vm210, %v537, -inf
    %542 = vmax.xlane.f32.xlu0 %v541
    %v543 = vpop.xlane.xlu0 %542
    %v544 = vsub.f32 %v536, %v540
    %v545 = vsub.f32 %v537, %v543
    %v546 = vmul.f32 %v544, 1.442695
    %v547 = vpow.pop %v546
    %v548 = vmul.f32 %v545, 1.442695
    %v549 = vpow.pop %v548
    %v550 = vsel %vm210, %v547, 0.0
    %551 = vadd.xlane.f32.xlu0 %v550
    %v552 = vpop.xlane.xlu0 %551
    %v553 = vsel %vm210, %v549, 0.0
    %554 = vadd.xlane.f32.xlu0 %v553
    %v555 = vpop.xlane.xlu0 %554
    %v556 = vrcp.pop %v552
    %v557 = vrcp.pop %v555
    %v558 = vmul.f32 %v547, %v556
    %v559 = vmul.f32 %v549, %v557
    %v560 = vpack.c.bf16 %v558, %v558
    %v561 = vpack.c.bf16 %v559, %v559
    %562 = vrot.lane.b32.xlu0 %v206, 56
    %v563 = vpop.permute.xlu0 %562
    %v565 = vsel %vm210, %v560, 0
    %v568 = vsel %vm340, %v563, 0
    %570 = vmatprep.subr.bf16.mxu0 0
    %571 = vmatpush1.bf16.msra.mxu0 %v568
    %572 = vmatprep.subr.bf16.mxu0 0
    %573 = vmatpush1.bf16.msra.mxu0 0
    %574 = vmatprep.subr.bf16.mxu0 0
    %575 = vmatpush1.bf16.msra.mxu0 0
    %576 = vmatprep.subr.bf16.mxu0 0
    %577 = vmatpush1.bf16.msra.mxu0 0
    %578 = vmatprep.subr.bf16.mxu0 0
    %579 = vmatpush1.bf16.msra.mxu0 0
    %580 = vmatprep.subr.bf16.mxu0 0
    %581 = vmatpush1.bf16.msra.mxu0 0
    %582 = vmatprep.subr.bf16.mxu0 0
    %583 = vmatpush1.bf16.msra.mxu0 0
    %584 = vmatprep.subr.bf16.mxu0 0
    %585 = vmatpush1.bf16.msra.mxu0 0
    %586 = vmatprep.subr.bf16.mxu0 0
    %587 = vmatpush1.bf16.msra.mxu0 0
    %588 = vmatprep.subr.bf16.mxu0 0
    %589 = vmatpush1.bf16.msra.mxu0 0
    %590 = vmatprep.subr.bf16.mxu0 0
    %591 = vmatpush1.bf16.msra.mxu0 0
    %592 = vmatprep.subr.bf16.mxu0 0
    %593 = vmatpush1.bf16.msra.mxu0 0
    %594 = vmatprep.subr.bf16.mxu0 0
    %595 = vmatpush1.bf16.msra.mxu0 0
    %596 = vmatprep.subr.bf16.mxu0 0
    %597 = vmatpush1.bf16.msra.mxu0 0
    %598 = vmatprep.subr.bf16.mxu0 0
    %599 = vmatpush1.bf16.msra.mxu0 0
    %600 = vmatprep.subr.bf16.mxu0 0
    %601 = vmatpush1.bf16.msra.mxu0 0
    %602 = vmatprep.mubr.bf16.mxu0 0
    %603 = vmatmul.mubr.bf16.gmra.mrb[0].mxu0 %v565
    %v604 = vpop.f32.mrb[0].mxu0
    %v605 = vadd.f32 0.0, %v604
    %v606 = vpop.f32.mrb[0].mxu0
    %v607 = vpop.f32.mrb[0].mxu0
    %v608 = vpop.f32.mrb[0].mxu0
    %609 = vdwg.mxu0
    %610 = vrot.lane.b32.xlu0 %v207, 56
    %v611 = vpop.permute.xlu0 %610
    %v613 = vsel %vm210, %v561, 0
    %v616 = vsel %vm340, %v611, 0
    %618 = vmatprep.subr.bf16.mxu0 0
    %619 = vmatpush1.bf16.msra.mxu0 %v616
    %620 = vmatprep.subr.bf16.mxu0 0
    %621 = vmatpush1.bf16.msra.mxu0 0
    %622 = vmatprep.subr.bf16.mxu0 0
    %623 = vmatpush1.bf16.msra.mxu0 0
    %624 = vmatprep.subr.bf16.mxu0 0
    %625 = vmatpush1.bf16.msra.mxu0 0
    %626 = vmatprep.subr.bf16.mxu0 0
    %627 = vmatpush1.bf16.msra.mxu0 0
    %628 = vmatprep.subr.bf16.mxu0 0
    %629 = vmatpush1.bf16.msra.mxu0 0
    %630 = vmatprep.subr.bf16.mxu0 0
    %631 = vmatpush1.bf16.msra.mxu0 0
    %632 = vmatprep.subr.bf16.mxu0 0
    %633 = vmatpush1.bf16.msra.mxu0 0
    %634 = vmatprep.subr.bf16.mxu0 0
    %635 = vmatpush1.bf16.msra.mxu0 0
    %636 = vmatprep.subr.bf16.mxu0 0
    %637 = vmatpush1.bf16.msra.mxu0 0
    %638 = vmatprep.subr.bf16.mxu0 0
    %639 = vmatpush1.bf16.msra.mxu0 0
    %640 = vmatprep.subr.bf16.mxu0 0
    %641 = vmatpush1.bf16.msra.mxu0 0
    %642 = vmatprep.subr.bf16.mxu0 0
    %643 = vmatpush1.bf16.msra.mxu0 0
    %644 = vmatprep.subr.bf16.mxu0 0
    %645 = vmatpush1.bf16.msra.mxu0 0
    %646 = vmatprep.subr.bf16.mxu0 0
    %647 = vmatpush1.bf16.msra.mxu0 0
    %648 = vmatprep.subr.bf16.mxu0 0
    %649 = vmatpush1.bf16.msra.mxu0 0
    %650 = vmatprep.mubr.bf16.mxu0 0
    %651 = vmatmul.mubr.bf16.gmra.mrb[0].mxu0 %v613
    %v652 = vpop.f32.mrb[0].mxu0
    %v653 = vadd.f32 0.0, %v652
    %v654 = vpop.f32.mrb[0].mxu0
    %v655 = vpop.f32.mrb[0].mxu0
    %v656 = vpop.f32.mrb[0].mxu0
    %657 = vdwg.mxu0
    %v658 = vpack.c.bf16 %v653, %v605
    %s659 = scalar_lea.vmem %s5, 4
    %v660 = vld [vmem:[%s659] sm:$0xf]
    %v662 = vsel %vm210, %v658, 0
    %v665 = vsel %vm340, %v660, 0
    %667 = vmatprep.subr.bf16.mxu0 0
    %668 = vmatpush1.bf16.msra.mxu0 %v665
    %669 = vmatprep.subr.bf16.mxu0 0
    %670 = vmatpush1.bf16.msra.mxu0 0
    %671 = vmatprep.subr.bf16.mxu0 0
    %672 = vmatpush1.bf16.msra.mxu0 0
    %673 = vmatprep.subr.bf16.mxu0 0
    %674 = vmatpush1.bf16.msra.mxu0 0
    %675 = vmatprep.subr.bf16.mxu0 0
    %676 = vmatpush1.bf16.msra.mxu0 0
    %677 = vmatprep.subr.bf16.mxu0 0
    %678 = vmatpush1.bf16.msra.mxu0 0
    %679 = vmatprep.subr.bf16.mxu0 0
    %680 = vmatpush1.bf16.msra.mxu0 0
    %681 = vmatprep.subr.bf16.mxu0 0
    %682 = vmatpush1.bf16.msra.mxu0 0
    %683 = vmatprep.subr.bf16.mxu0 0
    %684 = vmatpush1.bf16.msra.mxu0 0
    %685 = vmatprep.subr.bf16.mxu0 0
    %686 = vmatpush1.bf16.msra.mxu0 0
    %687 = vmatprep.subr.bf16.mxu0 0
    %688 = vmatpush1.bf16.msra.mxu0 0
    %689 = vmatprep.subr.bf16.mxu0 0
    %690 = vmatpush1.bf16.msra.mxu0 0
    %691 = vmatprep.subr.bf16.mxu0 0
    %692 = vmatpush1.bf16.msra.mxu0 0
    %693 = vmatprep.subr.bf16.mxu0 0
    %694 = vmatpush1.bf16.msra.mxu0 0
    %695 = vmatprep.subr.bf16.mxu0 0
    %696 = vmatpush1.bf16.msra.mxu0 0
    %697 = vmatprep.subr.bf16.mxu0 0
    %698 = vmatpush1.bf16.msra.mxu0 0
    %699 = vmatprep.mubr.bf16.mxu0 0
    %700 = vmatmul.mubr.bf16.gmra.mrb[0].mxu0 %v662
    %v701 = vpop.f32.mrb[0].mxu0
    %v702 = vadd.f32 0.0, %v701
    %v703 = vpop.f32.mrb[0].mxu0
    %v704 = vpop.f32.mrb[0].mxu0
    %v705 = vadd.f32 0.0, %v704
    %v706 = vpop.f32.mrb[0].mxu0
    %707 = vdwg.mxu0
    %v709 = vsel %vm210, %v432, 0
    %v712 = vsel %vm340, %v433, 0
    %714 = vmatprep.subr.bf16.mxu0 0
    %715 = vmatpush1.bf16.msra.mxu0 %v712
    %716 = vmatprep.subr.bf16.mxu0 0
    %717 = vmatpush1.bf16.msra.mxu0 0
    %718 = vmatprep.subr.bf16.mxu0 0
    %719 = vmatpush1.bf16.msra.mxu0 0
    %720 = vmatprep.subr.bf16.mxu0 0
    %721 = vmatpush1.bf16.msra.mxu0 0
    %722 = vmatprep.subr.bf16.mxu0 0
    %723 = vmatpush1.bf16.msra.mxu0 0
    %724 = vmatprep.subr.bf16.mxu0 0
    %725 = vmatpush1.bf16.msra.mxu0 0
    %726 = vmatprep.subr.bf16.mxu0 0
    %727 = vmatpush1.bf16.msra.mxu0 0
    %728 = vmatprep.subr.bf16.mxu0 0
    %729 = vmatpush1.bf16.msra.mxu0 0
    %730 = vmatprep.subr.bf16.mxu0 0
    %731 = vmatpush1.bf16.msra.mxu0 0
    %732 = vmatprep.subr.bf16.mxu0 0
    %733 = vmatpush1.bf16.msra.mxu0 0
    %734 = vmatprep.subr.bf16.mxu0 0
    %735 = vmatpush1.bf16.msra.mxu0 0
    %736 = vmatprep.subr.bf16.mxu0 0
    %737 = vmatpush1.bf16.msra.mxu0 0
    %738 = vmatprep.subr.bf16.mxu0 0
    %739 = vmatpush1.bf16.msra.mxu0 0
    %740 = vmatprep.subr.bf16.mxu0 0
    %741 = vmatpush1.bf16.msra.mxu0 0
    %742 = vmatprep.subr.bf16.mxu0 0
    %743 = vmatpush1.bf16.msra.mxu0 0
    %744 = vmatprep.subr.bf16.mxu0 0
    %745 = vmatpush1.bf16.msra.mxu0 0
    %746 = vmatprep.mubr.bf16.mxu0 0
    %747 = vmatmul.mubr.bf16.gmra.mrb[0].mxu0 %v709
    %v748 = vpop.f32.mrb[0].mxu0
    %v749 = vadd.f32 %v702, %v748
    %v750 = vpop.f32.mrb[0].mxu0
    %v751 = vpop.f32.mrb[0].mxu0
    %v752 = vadd.f32 %v705, %v751
    %v753 = vpop.f32.mrb[0].mxu0
    %754 = vdwg.mxu0
    %755 = vrot.lane.b32.xlu0 %v206, 112
    %v756 = vpop.permute.xlu0 %755
    %757 = vrot.lane.b32.xlu0 %v206, 80
    %v758 = vpop.permute.xlu0 %757
    %v760 = vsel %vm210, %v756, 0
    %v763 = vsel %vm210, %v758, 0
    %765 = vmatprep.subr.bf16.mxu0 0
    %766 = vmatpush1.bf16.xpose.msra.mxu0 %v763
    %767 = vmatprep.subr.bf16.mxu0 0
    %768 = vmatpush1.bf16.xpose.msra.mxu0 0
    %769 = vmatprep.subr.bf16.mxu0 0
    %770 = vmatpush1.bf16.xpose.msra.mxu0 0
    %771 = vmatprep.subr.bf16.mxu0 0
    %772 = vmatpush1.bf16.xpose.msra.mxu0 0
    %773 = vmatprep.subr.bf16.mxu0 0
    %774 = vmatpush1.bf16.xpose.msra.mxu0 0
    %775 = vmatprep.subr.bf16.mxu0 0
    %776 = vmatpush1.bf16.xpose.msra.mxu0 0
    %777 = vmatprep.subr.bf16.mxu0 0
    %778 = vmatpush1.bf16.xpose.msra.mxu0 0
    %779 = vmatprep.subr.bf16.mxu0 0
    %780 = vmatpush1.bf16.xpose.msra.mxu0 0
    %781 = vmatprep.subr.bf16.mxu0 0
    %782 = vmatpush1.bf16.xpose.msra.mxu0 0
    %783 = vmatprep.subr.bf16.mxu0 0
    %784 = vmatpush1.bf16.xpose.msra.mxu0 0
    %785 = vmatprep.subr.bf16.mxu0 0
    %786 = vmatpush1.bf16.xpose.msra.mxu0 0
    %787 = vmatprep.subr.bf16.mxu0 0
    %788 = vmatpush1.bf16.xpose.msra.mxu0 0
    %789 = vmatprep.subr.bf16.mxu0 0
    %790 = vmatpush1.bf16.xpose.msra.mxu0 0
    %791 = vmatprep.subr.bf16.mxu0 0
    %792 = vmatpush1.bf16.xpose.msra.mxu0 0
    %793 = vmatprep.subr.bf16.mxu0 0
    %794 = vmatpush1.bf16.xpose.msra.mxu0 0
    %795 = vmatprep.subr.bf16.mxu0 0
    %796 = vmatpush1.bf16.xpose.msra.mxu0 0
    %797 = vmatprep.mubr.bf16.mxu0 0
    %798 = vmatmul.mubr.bf16.gmra.mrb[0].mxu0 %v760
    %v799 = vpop.f32.mrb[0].mxu0
    %v800 = vadd.f32 0.0, %v799
    %v801 = vpop.f32.mrb[0].mxu0
    %v802 = vpop.f32.mrb[0].mxu0
    %v803 = vpop.f32.mrb[0].mxu0
    %804 = vdwg.mxu0
    %805 = vrot.lane.b32.xlu0 %v207, 112
    %v806 = vpop.permute.xlu0 %805
    %807 = vrot.lane.b32.xlu0 %v207, 80
    %v808 = vpop.permute.xlu0 %807
    %v810 = vsel %vm210, %v806, 0
    %v813 = vsel %vm210, %v808, 0
    %815 = vmatprep.subr.bf16.mxu0 0
    %816 = vmatpush1.bf16.xpose.msra.mxu0 %v813
    %817 = vmatprep.subr.bf16.mxu0 0
    %818 = vmatpush1.bf16.xpose.msra.mxu0 0
    %819 = vmatprep.subr.bf16.mxu0 0
    %820 = vmatpush1.bf16.xpose.msra.mxu0 0
    %821 = vmatprep.subr.bf16.mxu0 0
    %822 = vmatpush1.bf16.xpose.msra.mxu0 0
    %823 = vmatprep.subr.bf16.mxu0 0
    %824 = vmatpush1.bf16.xpose.msra.mxu0 0
    %825 = vmatprep.subr.bf16.mxu0 0
    %826 = vmatpush1.bf16.xpose.msra.mxu0 0
    %827 = vmatprep.subr.bf16.mxu0 0
    %828 = vmatpush1.bf16.xpose.msra.mxu0 0
    %829 = vmatprep.subr.bf16.mxu0 0
    %830 = vmatpush1.bf16.xpose.msra.mxu0 0
    %831 = vmatprep.subr.bf16.mxu0 0
    %832 = vmatpush1.bf16.xpose.msra.mxu0 0
    %833 = vmatprep.subr.bf16.mxu0 0
    %834 = vmatpush1.bf16.xpose.msra.mxu0 0
    %835 = vmatprep.subr.bf16.mxu0 0
    %836 = vmatpush1.bf16.xpose.msra.mxu0 0
    %837 = vmatprep.subr.bf16.mxu0 0
    %838 = vmatpush1.bf16.xpose.msra.mxu0 0
    %839 = vmatprep.subr.bf16.mxu0 0
    %840 = vmatpush1.bf16.xpose.msra.mxu0 0
    %841 = vmatprep.subr.bf16.mxu0 0
    %842 = vmatpush1.bf16.xpose.msra.mxu0 0
    %843 = vmatprep.subr.bf16.mxu0 0
    %844 = vmatpush1.bf16.xpose.msra.mxu0 0
    %845 = vmatprep.subr.bf16.mxu0 0
    %846 = vmatpush1.bf16.xpose.msra.mxu0 0
    %847 = vmatprep.mubr.bf16.mxu0 0
    %848 = vmatmul.mubr.bf16.gmra.mrb[0].mxu0 %v810
    %v849 = vpop.f32.mrb[0].mxu0
    %v850 = vadd.f32 0.0, %v849
    %v851 = vpop.f32.mrb[0].mxu0
    %v852 = vpop.f32.mrb[0].mxu0
    %v853 = vpop.f32.mrb[0].mxu0
    %854 = vdwg.mxu0
    %v855 = vmul.f32 %v800, 0.35355338
    %v856 = vmul.f32 %v850, 0.35355338
    %v857 = vsel %vm308, %v855, -1e+09
    %v858 = vsel %vm308, %v856, -1e+09
    %v859 = vsel %vm210, %v857, -inf
    %860 = vmax.xlane.f32.xlu0 %v859
    %v861 = vpop.xlane.xlu0 %860
    %v862 = vsel %vm210, %v858, -inf
    %863 = vmax.xlane.f32.xlu0 %v862
    %v864 = vpop.xlane.xlu0 %863
    %v865 = vsub.f32 %v857, %v861
    %v866 = vsub.f32 %v858, %v864
    %v867 = vmul.f32 %v865, 1.442695
    %v868 = vpow.pop %v867
    %v869 = vmul.f32 %v866, 1.442695
    %v870 = vpow.pop %v869
    %v871 = vsel %vm210, %v868, 0.0
    %872 = vadd.xlane.f32.xlu0 %v871
    %v873 = vpop.xlane.xlu0 %872
    %v874 = vsel %vm210, %v870, 0.0
    %875 = vadd.xlane.f32.xlu0 %v874
    %v876 = vpop.xlane.xlu0 %875
    %v877 = vrcp.pop %v873
    %v878 = vrcp.pop %v876
    %v879 = vmul.f32 %v868, %v877
    %v880 = vmul.f32 %v870, %v878
    %v881 = vpack.c.bf16 %v879, %v879
    %v882 = vpack.c.bf16 %v880, %v880
    %883 = vrot.lane.b32.xlu0 %v206, 48
    %v884 = vpop.permute.xlu0 %883
    %v886 = vsel %vm210, %v881, 0
    %v889 = vsel %vm340, %v884, 0
    %891 = vmatprep.subr.bf16.mxu0 0
    %892 = vmatpush1.bf16.msra.mxu0 %v889
    %893 = vmatprep.subr.bf16.mxu0 0
    %894 = vmatpush1.bf16.msra.mxu0 0
    %895 = vmatprep.subr.bf16.mxu0 0
    %896 = vmatpush1.bf16.msra.mxu0 0
    %897 = vmatprep.subr.bf16.mxu0 0
    %898 = vmatpush1.bf16.msra.mxu0 0
    %899 = vmatprep.subr.bf16.mxu0 0
    %900 = vmatpush1.bf16.msra.mxu0 0
    %901 = vmatprep.subr.bf16.mxu0 0
    %902 = vmatpush1.bf16.msra.mxu0 0
    %903 = vmatprep.subr.bf16.mxu0 0
    %904 = vmatpush1.bf16.msra.mxu0 0
    %905 = vmatprep.subr.bf16.mxu0 0
    %906 = vmatpush1.bf16.msra.mxu0 0
    %907 = vmatprep.subr.bf16.mxu0 0
    %908 = vmatpush1.bf16.msra.mxu0 0
    %909 = vmatprep.subr.bf16.mxu0 0
    %910 = vmatpush1.bf16.msra.mxu0 0
    %911 = vmatprep.subr.bf16.mxu0 0
    %912 = vmatpush1.bf16.msra.mxu0 0
    %913 = vmatprep.subr.bf16.mxu0 0
    %914 = vmatpush1.bf16.msra.mxu0 0
    %915 = vmatprep.subr.bf16.mxu0 0
    %916 = vmatpush1.bf16.msra.mxu0 0
    %917 = vmatprep.subr.bf16.mxu0 0
    %918 = vmatpush1.bf16.msra.mxu0 0
    %919 = vmatprep.subr.bf16.mxu0 0
    %920 = vmatpush1.bf16.msra.mxu0 0
    %921 = vmatprep.subr.bf16.mxu0 0
    %922 = vmatpush1.bf16.msra.mxu0 0
    %923 = vmatprep.mubr.bf16.mxu0 0
    %924 = vmatmul.mubr.bf16.gmra.mrb[0].mxu0 %v886
    %v925 = vpop.f32.mrb[0].mxu0
    %v926 = vadd.f32 0.0, %v925
    %v927 = vpop.f32.mrb[0].mxu0
    %v928 = vpop.f32.mrb[0].mxu0
    %v929 = vpop.f32.mrb[0].mxu0
    %930 = vdwg.mxu0
    %931 = vrot.lane.b32.xlu0 %v207, 48
    %v932 = vpop.permute.xlu0 %931
    %v934 = vsel %vm210, %v882, 0
    %v937 = vsel %vm340, %v932, 0
    %939 = vmatprep.subr.bf16.mxu0 0
    %940 = vmatpush1.bf16.msra.mxu0 %v937
    %941 = vmatprep.subr.bf16.mxu0 0
    %942 = vmatpush1.bf16.msra.mxu0 0
    %943 = vmatprep.subr.bf16.mxu0 0
    %944 = vmatpush1.bf16.msra.mxu0 0
    %945 = vmatprep.subr.bf16.mxu0 0
    %946 = vmatpush1.bf16.msra.mxu0 0
    %947 = vmatprep.subr.bf16.mxu0 0
    %948 = vmatpush1.bf16.msra.mxu0 0
    %949 = vmatprep.subr.bf16.mxu0 0
    %950 = vmatpush1.bf16.msra.mxu0 0
    %951 = vmatprep.subr.bf16.mxu0 0
    %952 = vmatpush1.bf16.msra.mxu0 0
    %953 = vmatprep.subr.bf16.mxu0 0
    %954 = vmatpush1.bf16.msra.mxu0 0
    %955 = vmatprep.subr.bf16.mxu0 0
    %956 = vmatpush1.bf16.msra.mxu0 0
    %957 = vmatprep.subr.bf16.mxu0 0
    %958 = vmatpush1.bf16.msra.mxu0 0
    %959 = vmatprep.subr.bf16.mxu0 0
    %960 = vmatpush1.bf16.msra.mxu0 0
    %961 = vmatprep.subr.bf16.mxu0 0
    %962 = vmatpush1.bf16.msra.mxu0 0
    %963 = vmatprep.subr.bf16.mxu0 0
    %964 = vmatpush1.bf16.msra.mxu0 0
    %965 = vmatprep.subr.bf16.mxu0 0
    %966 = vmatpush1.bf16.msra.mxu0 0
    %967 = vmatprep.subr.bf16.mxu0 0
    %968 = vmatpush1.bf16.msra.mxu0 0
    %969 = vmatprep.subr.bf16.mxu0 0
    %970 = vmatpush1.bf16.msra.mxu0 0
    %971 = vmatprep.mubr.bf16.mxu0 0
    %972 = vmatmul.mubr.bf16.gmra.mrb[0].mxu0 %v934
    %v973 = vpop.f32.mrb[0].mxu0
    %v974 = vadd.f32 0.0, %v973
    %v975 = vpop.f32.mrb[0].mxu0
    %v976 = vpop.f32.mrb[0].mxu0
    %v977 = vpop.f32.mrb[0].mxu0
    %978 = vdwg.mxu0
    %v979 = vpack.c.bf16 %v974, %v926
    %s980 = scalar_lea.vmem %s5, 8
    %v981 = vld [vmem:[%s980] sm:$0xf]
    %v983 = vsel %vm210, %v979, 0
    %v986 = vsel %vm340, %v981, 0
    %988 = vmatprep.subr.bf16.mxu0 0
    %989 = vmatpush1.bf16.msra.mxu0 %v986
    %990 = vmatprep.subr.bf16.mxu0 0
    %991 = vmatpush1.bf16.msra.mxu0 0
    %992 = vmatprep.subr.bf16.mxu0 0
    %993 = vmatpush1.bf16.msra.mxu0 0
    %994 = vmatprep.subr.bf16.mxu0 0
    %995 = vmatpush1.bf16.msra.mxu0 0
    %996 = vmatprep.subr.bf16.mxu0 0
    %997 = vmatpush1.bf16.msra.mxu0 0
    %998 = vmatprep.subr.bf16.mxu0 0
    %999 = vmatpush1.bf16.msra.mxu0 0
    %1000 = vmatprep.subr.bf16.mxu0 0
    %1001 = vmatpush1.bf16.msra.mxu0 0
    %1002 = vmatprep.subr.bf16.mxu0 0
    %1003 = vmatpush1.bf16.msra.mxu0 0
    %1004 = vmatprep.subr.bf16.mxu0 0
    %1005 = vmatpush1.bf16.msra.mxu0 0
    %1006 = vmatprep.subr.bf16.mxu0 0
    %1007 = vmatpush1.bf16.msra.mxu0 0
    %1008 = vmatprep.subr.bf16.mxu0 0
    %1009 = vmatpush1.bf16.msra.mxu0 0
    %1010 = vmatprep.subr.bf16.mxu0 0
    %1011 = vmatpush1.bf16.msra.mxu0 0
    %1012 = vmatprep.subr.bf16.mxu0 0
    %1013 = vmatpush1.bf16.msra.mxu0 0
    %1014 = vmatprep.subr.bf16.mxu0 0
    %1015 = vmatpush1.bf16.msra.mxu0 0
    %1016 = vmatprep.subr.bf16.mxu0 0
    %1017 = vmatpush1.bf16.msra.mxu0 0
    %1018 = vmatprep.subr.bf16.mxu0 0
    %1019 = vmatpush1.bf16.msra.mxu0 0
    %1020 = vmatprep.mubr.bf16.mxu0 0
    %1021 = vmatmul.mubr.bf16.gmra.mrb[0].mxu0 %v983
    %v1022 = vpop.f32.mrb[0].mxu0
    %v1023 = vadd.f32 0.0, %v1022
    %v1024 = vpop.f32.mrb[0].mxu0
    %v1025 = vpop.f32.mrb[0].mxu0
    %v1026 = vadd.f32 0.0, %v1025
    %v1027 = vpop.f32.mrb[0].mxu0
    %1028 = vdwg.mxu0
    %v1029 = vadd.f32 %v749, %v1023
    %v1030 = vadd.f32 %v752, %v1026
    %1031 = vrot.lane.b32.xlu0 %v206, 104
    %v1032 = vpop.permute.xlu0 %1031
    %1033 = vrot.lane.b32.xlu0 %v206, 72
    %v1034 = vpop.permute.xlu0 %1033
    %v1036 = vsel %vm210, %v1032, 0
    %v1039 = vsel %vm210, %v1034, 0
    %1041 = vmatprep.subr.bf16.mxu0 0
    %1042 = vmatpush1.bf16.xpose.msra.mxu0 %v1039
    %1043 = vmatprep.subr.bf16.mxu0 0
    %1044 = vmatpush1.bf16.xpose.msra.mxu0 0
    %1045 = vmatprep.subr.bf16.mxu0 0
    %1046 = vmatpush1.bf16.xpose.msra.mxu0 0
    %1047 = vmatprep.subr.bf16.mxu0 0
    %1048 = vmatpush1.bf16.xpose.msra.mxu0 0
    %1049 = vmatprep.subr.bf16.mxu0 0
    %1050 = vmatpush1.bf16.xpose.msra.mxu0 0
    %1051 = vmatprep.subr.bf16.mxu0 0
    %1052 = vmatpush1.bf16.xpose.msra.mxu0 0
    %1053 = vmatprep.subr.bf16.mxu0 0
    %1054 = vmatpush1.bf16.xpose.msra.mxu0 0
    %1055 = vmatprep.subr.bf16.mxu0 0
    %1056 = vmatpush1.bf16.xpose.msra.mxu0 0
    %1057 = vmatprep.subr.bf16.mxu0 0
    %1058 = vmatpush1.bf16.xpose.msra.mxu0 0
    %1059 = vmatprep.subr.bf16.mxu0 0
    %1060 = vmatpush1.bf16.xpose.msra.mxu0 0
    %1061 = vmatprep.subr.bf16.mxu0 0
    %1062 = vmatpush1.bf16.xpose.msra.mxu0 0
    %1063 = vmatprep.subr.bf16.mxu0 0
    %1064 = vmatpush1.bf16.xpose.msra.mxu0 0
    %1065 = vmatprep.subr.bf16.mxu0 0
    %1066 = vmatpush1.bf16.xpose.msra.mxu0 0
    %1067 = vmatprep.subr.bf16.mxu0 0
    %1068 = vmatpush1.bf16.xpose.msra.mxu0 0
    %1069 = vmatprep.subr.bf16.mxu0 0
    %1070 = vmatpush1.bf16.xpose.msra.mxu0 0
    %1071 = vmatprep.subr.bf16.mxu0 0
    %1072 = vmatpush1.bf16.xpose.msra.mxu0 0
    %1073 = vmatprep.mubr.bf16.mxu0 0
    %1074 = vmatmul.mubr.bf16.gmra.mrb[0].mxu0 %v1036
    %v1075 = vpop.f32.mrb[0].mxu0
    %v1076 = vadd.f32 0.0, %v1075
    %v1077 = vpop.f32.mrb[0].mxu0
    %v1078 = vpop.f32.mrb[0].mxu0
    %v1079 = vpop.f32.mrb[0].mxu0
    %1080 = vdwg.mxu0
    %1081 = vrot.lane.b32.xlu0 %v207, 104
    %v1082 = vpop.permute.xlu0 %1081
    %1083 = vrot.lane.b32.xlu0 %v207, 72
    %v1084 = vpop.permute.xlu0 %1083
    %v1086 = vsel %vm210, %v1082, 0
    %v1089 = vsel %vm210, %v1084, 0
    %1091 = vmatprep.subr.bf16.mxu0 0
    %1092 = vmatpush1.bf16.xpose.msra.mxu0 %v1089
    %1093 = vmatprep.subr.bf16.mxu0 0
    %1094 = vmatpush1.bf16.xpose.msra.mxu0 0
    %1095 = vmatprep.subr.bf16.mxu0 0
    %1096 = vmatpush1.bf16.xpose.msra.mxu0 0
    %1097 = vmatprep.subr.bf16.mxu0 0
    %1098 = vmatpush1.bf16.xpose.msra.mxu0 0
    %1099 = vmatprep.subr.bf16.mxu0 0
    %1100 = vmatpush1.bf16.xpose.msra.mxu0 0
    %1101 = vmatprep.subr.bf16.mxu0 0
    %1102 = vmatpush1.bf16.xpose.msra.mxu0 0
    %1103 = vmatprep.subr.bf16.mxu0 0
    %1104 = vmatpush1.bf16.xpose.msra.mxu0 0
    %1105 = vmatprep.subr.bf16.mxu0 0
    %1106 = vmatpush1.bf16.xpose.msra.mxu0 0
    %1107 = vmatprep.subr.bf16.mxu0 0
    %1108 = vmatpush1.bf16.xpose.msra.mxu0 0
    %1109 = vmatprep.subr.bf16.mxu0 0
    %1110 = vmatpush1.bf16.xpose.msra.mxu0 0
    %1111 = vmatprep.subr.bf16.mxu0 0
    %1112 = vmatpush1.bf16.xpose.msra.mxu0 0
    %1113 = vmatprep.subr.bf16.mxu0 0
    %1114 = vmatpush1.bf16.xpose.msra.mxu0 0
    %1115 = vmatprep.subr.bf16.mxu0 0
    %1116 = vmatpush1.bf16.xpose.msra.mxu0 0
    %1117 = vmatprep.subr.bf16.mxu0 0
    %1118 = vmatpush1.bf16.xpose.msra.mxu0 0
    %1119 = vmatprep.subr.bf16.mxu0 0
    %1120 = vmatpush1.bf16.xpose.msra.mxu0 0
    %1121 = vmatprep.subr.bf16.mxu0 0
    %1122 = vmatpush1.bf16.xpose.msra.mxu0 0
    %1123 = vmatprep.mubr.bf16.mxu0 0
    %1124 = vmatmul.mubr.bf16.gmra.mrb[0].mxu0 %v1086
    %v1125 = vpop.f32.mrb[0].mxu0
    %v1126 = vadd.f32 0.0, %v1125
    %v1127 = vpop.f32.mrb[0].mxu0
    %v1128 = vpop.f32.mrb[0].mxu0
    %v1129 = vpop.f32.mrb[0].mxu0
    %1130 = vdwg.mxu0
    %v1131 = vmul.f32 %v1076, 0.35355338
    %v1132 = vmul.f32 %v1126, 0.35355338
    %v1133 = vsel %vm308, %v1131, -1e+09
    %v1134 = vsel %vm308, %v1132, -1e+09
    %v1135 = vsel %vm210, %v1133, -inf
    %1136 = vmax.xlane.f32.xlu0 %v1135
    %v1137 = vpop.xlane.xlu0 %1136
    %v1138 = vsel %vm210, %v1134, -inf
    %1139 = vmax.xlane.f32.xlu0 %v1138
    %v1140 = vpop.xlane.xlu0 %1139
    %v1141 = vsub.f32 %v1133, %v1137
    %v1142 = vsub.f32 %v1134, %v1140
    %v1143 = vmul.f32 %v1141, 1.442695
    %v1144 = vpow.pop %v1143
    %v1145 = vmul.f32 %v1142, 1.442695
    %v1146 = vpow.pop %v1145
    %v1147 = vsel %vm210, %v1144, 0.0
    %1148 = vadd.xlane.f32.xlu0 %v1147
    %v1149 = vpop.xlane.xlu0 %1148
    %v1150 = vsel %vm210, %v1146, 0.0
    %1151 = vadd.xlane.f32.xlu0 %v1150
    %v1152 = vpop.xlane.xlu0 %1151
    %v1153 = vrcp.pop %v1149
    %v1154 = vrcp.pop %v1152
    %v1155 = vmul.f32 %v1144, %v1153
    %v1156 = vmul.f32 %v1146, %v1154
    %v1157 = vpack.c.bf16 %v1155, %v1155
    %v1158 = vpack.c.bf16 %v1156, %v1156
    %1159 = vrot.lane.b32.xlu0 %v206, 40
    %v1160 = vpop.permute.xlu0 %1159
    %v1162 = vsel %vm210, %v1157, 0
    %v1165 = vsel %vm340, %v1160, 0
    %1167 = vmatprep.subr.bf16.mxu0 0
    %1168 = vmatpush1.bf16.msra.mxu0 %v1165
    %1169 = vmatprep.subr.bf16.mxu0 0
    %1170 = vmatpush1.bf16.msra.mxu0 0
    %1171 = vmatprep.subr.bf16.mxu0 0
    %1172 = vmatpush1.bf16.msra.mxu0 0
    %1173 = vmatprep.subr.bf16.mxu0 0
    %1174 = vmatpush1.bf16.msra.mxu0 0
    %1175 = vmatprep.subr.bf16.mxu0 0
    %1176 = vmatpush1.bf16.msra.mxu0 0
    %1177 = vmatprep.subr.bf16.mxu0 0
    %1178 = vmatpush1.bf16.msra.mxu0 0
    %1179 = vmatprep.subr.bf16.mxu0 0
    %1180 = vmatpush1.bf16.msra.mxu0 0
    %1181 = vmatprep.subr.bf16.mxu0 0
    %1182 = vmatpush1.bf16.msra.mxu0 0
    %1183 = vmatprep.subr.bf16.mxu0 0
    %1184 = vmatpush1.bf16.msra.mxu0 0
    %1185 = vmatprep.subr.bf16.mxu0 0
    %1186 = vmatpush1.bf16.msra.mxu0 0
    %1187 = vmatprep.subr.bf16.mxu0 0
    %1188 = vmatpush1.bf16.msra.mxu0 0
    %1189 = vmatprep.subr.bf16.mxu0 0
    %1190 = vmatpush1.bf16.msra.mxu0 0
    %1191 = vmatprep.subr.bf16.mxu0 0
    %1192 = vmatpush1.bf16.msra.mxu0 0
    %1193 = vmatprep.subr.bf16.mxu0 0
    %1194 = vmatpush1.bf16.msra.mxu0 0
    %1195 = vmatprep.subr.bf16.mxu0 0
    %1196 = vmatpush1.bf16.msra.mxu0 0
    %1197 = vmatprep.subr.bf16.mxu0 0
    %1198 = vmatpush1.bf16.msra.mxu0 0
    %1199 = vmatprep.mubr.bf16.mxu0 0
    %1200 = vmatmul.mubr.bf16.gmra.mrb[0].mxu0 %v1162
    %v1201 = vpop.f32.mrb[0].mxu0
    %v1202 = vadd.f32 0.0, %v1201
    %v1203 = vpop.f32.mrb[0].mxu0
    %v1204 = vpop.f32.mrb[0].mxu0
    %v1205 = vpop.f32.mrb[0].mxu0
    %1206 = vdwg.mxu0
    %1207 = vrot.lane.b32.xlu0 %v207, 40
    %v1208 = vpop.permute.xlu0 %1207
    %v1210 = vsel %vm210, %v1158, 0
    %v1213 = vsel %vm340, %v1208, 0
    %1215 = vmatprep.subr.bf16.mxu0 0
    %1216 = vmatpush1.bf16.msra.mxu0 %v1213
    %1217 = vmatprep.subr.bf16.mxu0 0
    %1218 = vmatpush1.bf16.msra.mxu0 0
    %1219 = vmatprep.subr.bf16.mxu0 0
    %1220 = vmatpush1.bf16.msra.mxu0 0
    %1221 = vmatprep.subr.bf16.mxu0 0
    %1222 = vmatpush1.bf16.msra.mxu0 0
    %1223 = vmatprep.subr.bf16.mxu0 0
    %1224 = vmatpush1.bf16.msra.mxu0 0
    %1225 = vmatprep.subr.bf16.mxu0 0
    %1226 = vmatpush1.bf16.msra.mxu0 0
    %1227 = vmatprep.subr.bf16.mxu0 0
    %1228 = vmatpush1.bf16.msra.mxu0 0
    %1229 = vmatprep.subr.bf16.mxu0 0
    %1230 = vmatpush1.bf16.msra.mxu0 0
    %1231 = vmatprep.subr.bf16.mxu0 0
    %1232 = vmatpush1.bf16.msra.mxu0 0
    %1233 = vmatprep.subr.bf16.mxu0 0
    %1234 = vmatpush1.bf16.msra.mxu0 0
    %1235 = vmatprep.subr.bf16.mxu0 0
    %1236 = vmatpush1.bf16.msra.mxu0 0
    %1237 = vmatprep.subr.bf16.mxu0 0
    %1238 = vmatpush1.bf16.msra.mxu0 0
    %1239 = vmatprep.subr.bf16.mxu0 0
    %1240 = vmatpush1.bf16.msra.mxu0 0
    %1241 = vmatprep.subr.bf16.mxu0 0
    %1242 = vmatpush1.bf16.msra.mxu0 0
    %1243 = vmatprep.subr.bf16.mxu0 0
    %1244 = vmatpush1.bf16.msra.mxu0 0
    %1245 = vmatprep.subr.bf16.mxu0 0
    %1246 = vmatpush1.bf16.msra.mxu0 0
    %1247 = vmatprep.mubr.bf16.mxu0 0
    %1248 = vmatmul.mubr.bf16.gmra.mrb[0].mxu0 %v1210
    %v1249 = vpop.f32.mrb[0].mxu0
    %v1250 = vadd.f32 0.0, %v1249
    %v1251 = vpop.f32.mrb[0].mxu0
    %v1252 = vpop.f32.mrb[0].mxu0
    %v1253 = vpop.f32.mrb[0].mxu0
    %1254 = vdwg.mxu0
    %v1255 = vpack.c.bf16 %v1250, %v1202
    %s1256 = scalar_lea.vmem %s5, 12
    %v1257 = vld [vmem:[%s1256] sm:$0xf]
    %v1259 = vsel %vm210, %v1255, 0
    %v1262 = vsel %vm340, %v1257, 0
    %1264 = vmatprep.subr.bf16.mxu0 0
    %1265 = vmatpush1.bf16.msra.mxu0 %v1262
    %1266 = vmatprep.subr.bf16.mxu0 0
    %1267 = vmatpush1.bf16.msra.mxu0 0
    %1268 = vmatprep.subr.bf16.mxu0 0
    %1269 = vmatpush1.bf16.msra.mxu0 0
    %1270 = vmatprep.subr.bf16.mxu0 0
    %1271 = vmatpush1.bf16.msra.mxu0 0
    %1272 = vmatprep.subr.bf16.mxu0 0
    %1273 = vmatpush1.bf16.msra.mxu0 0
    %1274 = vmatprep.subr.bf16.mxu0 0
    %1275 = vmatpush1.bf16.msra.mxu0 0
    %1276 = vmatprep.subr.bf16.mxu0 0
    %1277 = vmatpush1.bf16.msra.mxu0 0
    %1278 = vmatprep.subr.bf16.mxu0 0
    %1279 = vmatpush1.bf16.msra.mxu0 0
    %1280 = vmatprep.subr.bf16.mxu0 0
    %1281 = vmatpush1.bf16.msra.mxu0 0
    %1282 = vmatprep.subr.bf16.mxu0 0
    %1283 = vmatpush1.bf16.msra.mxu0 0
    %1284 = vmatprep.subr.bf16.mxu0 0
    %1285 = vmatpush1.bf16.msra.mxu0 0
    %1286 = vmatprep.subr.bf16.mxu0 0
    %1287 = vmatpush1.bf16.msra.mxu0 0
    %1288 = vmatprep.subr.bf16.mxu0 0
    %1289 = vmatpush1.bf16.msra.mxu0 0
    %1290 = vmatprep.subr.bf16.mxu0 0
    %1291 = vmatpush1.bf16.msra.mxu0 0
    %1292 = vmatprep.subr.bf16.mxu0 0
    %1293 = vmatpush1.bf16.msra.mxu0 0
    %1294 = vmatprep.subr.bf16.mxu0 0
    %1295 = vmatpush1.bf16.msra.mxu0 0
    %1296 = vmatprep.mubr.bf16.mxu0 0
    %1297 = vmatmul.mubr.bf16.gmra.mrb[0].mxu0 %v1259
    %v1298 = vpop.f32.mrb[0].mxu0
    %v1299 = vadd.f32 0.0, %v1298
    %v1300 = vpop.f32.mrb[0].mxu0
    %v1301 = vpop.f32.mrb[0].mxu0
    %v1302 = vadd.f32 0.0, %v1301
    %v1303 = vpop.f32.mrb[0].mxu0
    %1304 = vdwg.mxu0
    %v1305 = vadd.f32 %v1029, %v1299
    %v1306 = vadd.f32 %v1030, %v1302
    %v1308 = vlaneseq
    %v1309 = vshrl.u32 %v1308, 7
    %v1310 = vsub.s32 0, %v1309
    %v1311 = vrot.slane %v201, %v1310
    %v1313 = vadd.f32 %v1305, %v1311
    %v1314 = vadd.f32 %v1306, %v1311
    %v1315 = vadd.f32 %v64, %v1313
    %v1316 = vadd.f32 %v65, %v1314
    %v1317 = vld [vmem:[%s17 + $0x1] sm:$0x1]
    %v1318 = vld [vmem:[%s18 + $0x1] sm:$0x1]
    %v1319 = vsel %vm74, %v1315, 0.0
    %1320 = vadd.xlane.f32.xlu0 %v1319
    %v1321 = vpop.xlane.xlu0 %1320
    %v1322 = vsel %vm74, %v1316, 0.0
    %1323 = vadd.xlane.f32.xlu0 %v1322
    %v1324 = vpop.xlane.xlu0 %1323
    %v1325 = vmul.f32 %v1321, %v81
    %v1326 = vmul.f32 %v1324, %v81
    %v1327 = vsub.f32 %v1315, %v1325
    %v1328 = vsub.f32 %v1316, %v1326
    %v1329 = vmul.f32 %v1327, %v1327
    %v1330 = vmul.f32 %v1328, %v1328
    %v1331 = vsel %vm74, %v1329, 0.0
    %1332 = vadd.xlane.f32.xlu0 %v1331
    %v1333 = vpop.xlane.xlu0 %1332
    %v1334 = vsel %vm74, %v1330, 0.0
    %1335 = vadd.xlane.f32.xlu0 %v1334
    %v1336 = vpop.xlane.xlu0 %1335
    %v1337 = vmul.f32 %v1333, 0.032258064
    %v1338 = vmul.f32 %v1336, 0.032258064
    %v1339 = vrsqrt.pop %v1337
    %v1340 = vmul.f32 %v1337, %v1339
    %vm1341 = vcmp.eq.f32.partialorder %v1337, inf
    %v1342 = vsel %vm1341, %v1337, %v1340
    %vm1343 = vcmp.eq.f32.partialorder %v1337, 0.0
    %v1344 = vand.u32 %v1337, 2147483648
    %v1345 = vsel %vm1343, %v1344, %v1342
    %v1346 = vrsqrt.pop %v1338
    %v1347 = vmul.f32 %v1338, %v1346
    %vm1348 = vcmp.eq.f32.partialorder %v1338, inf
    %v1349 = vsel %vm1348, %v1338, %v1347
    %vm1350 = vcmp.eq.f32.partialorder %v1338, 0.0
    %v1351 = vand.u32 %v1338, 2147483648
    %v1352 = vsel %vm1350, %v1351, %v1349
    %v1353 = vadd.f32 %v1345, 1e-06
    %v1354 = vadd.f32 %v1352, 1e-06
    %v1355 = vrcp.pop %v1353
    %v1356 = vrcp.pop %v1354
    %v1357 = vlaneseq
    %v1358 = vshrl.u32 %v1357, 7
    %v1359 = vsub.s32 0, %v1358
    %v1360 = vrot.slane %v1317, %v1359
    %v1361 = vmul.f32 %v1360, %v1327
    %v1362 = vmul.f32 %v1360, %v1328
    %v1363 = vmul.f32 %v1361, %v1355
    %v1364 = vmul.f32 %v1362, %v1356
    %v1365 = vlaneseq
    %v1366 = vshrl.u32 %v1365, 7
    %v1367 = vsub.s32 0, %v1366
    %v1368 = vrot.slane %v1318, %v1367
    %v1369 = vadd.f32 %v1363, %v1368
    %v1370 = vadd.f32 %v1364, %v1368
    %v1371 = vpack.c.bf16 %v1370, %v1369
    %v1372 = vld [vmem:[%s7] sm:$0xf]
    %v1373 = vld [vmem:[%s7 + $0x4] sm:$0xf]
    %v1374 = vld [vmem:[%s7 + $0x8] sm:$0xf]
    %v1375 = vld [vmem:[%s7 + $0xc] sm:$0xf]
    %v1376 = vld [vmem:[%s8] sm:$0x1]
    %v1378 = vlaneseq
    %v1379 = vshrl.u32 %v1378, 7
    %v1380 = vsub.s32 0, %v1379
    %v1381 = vrot.slane %v1376, %v1380
    %v1387 = vunpack.c.l.b16 %v1372
    %v1388 = vunpack.c.l.b16 %v1373
    %v1389 = vunpack.c.l.b16 %v1374
    %v1390 = vunpack.c.l.b16 %v1375
    %v1391 = vpack.c.b16 %v1388, %v1387
    %v1392 = vpack.c.b16 %v1390, %v1389
    %v1396 = vsel %vm74, %v1371, 0
    %1398 = vmatprep.subr.bf16.mxu0 0
    %1399 = vmatpush1.bf16.msra.mxu0 %v1391
    %1400 = vmatprep.subr.bf16.mxu0 0
    %1401 = vmatpush1.bf16.msra.mxu0 %v1392
    %1402 = vmatprep.subr.bf16.mxu0 0
    %1403 = vmatpush1.bf16.msra.mxu0 0
    %1404 = vmatprep.subr.bf16.mxu0 0
    %1405 = vmatpush1.bf16.msra.mxu0 0
    %1406 = vmatprep.subr.bf16.mxu0 0
    %1407 = vmatpush1.bf16.msra.mxu0 0
    %1408 = vmatprep.subr.bf16.mxu0 0
    %1409 = vmatpush1.bf16.msra.mxu0 0
    %1410 = vmatprep.subr.bf16.mxu0 0
    %1411 = vmatpush1.bf16.msra.mxu0 0
    %1412 = vmatprep.subr.bf16.mxu0 0
    %1413 = vmatpush1.bf16.msra.mxu0 0
    %1414 = vmatprep.subr.bf16.mxu0 0
    %1415 = vmatpush1.bf16.msra.mxu0 0
    %1416 = vmatprep.subr.bf16.mxu0 0
    %1417 = vmatpush1.bf16.msra.mxu0 0
    %1418 = vmatprep.subr.bf16.mxu0 0
    %1419 = vmatpush1.bf16.msra.mxu0 0
    %1420 = vmatprep.subr.bf16.mxu0 0
    %1421 = vmatpush1.bf16.msra.mxu0 0
    %1422 = vmatprep.subr.bf16.mxu0 0
    %1423 = vmatpush1.bf16.msra.mxu0 0
    %1424 = vmatprep.subr.bf16.mxu0 0
    %1425 = vmatpush1.bf16.msra.mxu0 0
    %1426 = vmatprep.subr.bf16.mxu0 0
    %1427 = vmatpush1.bf16.msra.mxu0 0
    %1428 = vmatprep.subr.bf16.mxu0 0
    %1429 = vmatpush1.bf16.msra.mxu0 0
    %1430 = vmatprep.mubr.bf16.mxu0 0
    %1431 = vmatmul.mubr.bf16.gmra.mrb[0].mxu0 %v1396
    %v1432 = vpop.f32.mrb[0].mxu0
    %v1433 = vadd.f32 %v1381, %v1432
    %v1434 = vpop.f32.mrb[0].mxu0
    %v1435 = vpop.f32.mrb[0].mxu0
    %v1436 = vadd.f32 %v1381, %v1435
    %v1437 = vpop.f32.mrb[0].mxu0
    %1438 = vdwg.mxu0
    %v1439 = vpack.c.bf16 %v67, %v66
    %v1440 = vld [vmem:[%s9] sm:$0xf]
    %v1441 = vld [vmem:[%s9 + $0x4] sm:$0xf]
    %v1442 = vld [vmem:[%s9 + $0x8] sm:$0xf]
    %v1443 = vld [vmem:[%s9 + $0xc] sm:$0xf]
    %v1444 = vld [vmem:[%s10] sm:$0x1]
    %v1446 = vlaneseq
    %v1447 = vshrl.u32 %v1446, 7
    %v1448 = vsub.s32 0, %v1447
    %v1449 = vrot.slane %v1444, %v1448
    %v1455 = vunpack.c.l.b16 %v1440
    %v1456 = vunpack.c.l.b16 %v1441
    %v1457 = vunpack.c.l.b16 %v1442
    %v1458 = vunpack.c.l.b16 %v1443
    %v1459 = vpack.c.b16 %v1456, %v1455
    %v1460 = vpack.c.b16 %v1458, %v1457
    %v1464 = vsel %vm74, %v1439, 0
    %1466 = vmatprep.subr.bf16.mxu0 0
    %1467 = vmatpush1.bf16.msra.mxu0 %v1459
    %1468 = vmatprep.subr.bf16.mxu0 0
    %1469 = vmatpush1.bf16.msra.mxu0 %v1460
    %1470 = vmatprep.subr.bf16.mxu0 0
    %1471 = vmatpush1.bf16.msra.mxu0 0
    %1472 = vmatprep.subr.bf16.mxu0 0
    %1473 = vmatpush1.bf16.msra.mxu0 0
    %1474 = vmatprep.subr.bf16.mxu0 0
    %1475 = vmatpush1.bf16.msra.mxu0 0
    %1476 = vmatprep.subr.bf16.mxu0 0
    %1477 = vmatpush1.bf16.msra.mxu0 0
    %1478 = vmatprep.subr.bf16.mxu0 0
    %1479 = vmatpush1.bf16.msra.mxu0 0
    %1480 = vmatprep.subr.bf16.mxu0 0
    %1481 = vmatpush1.bf16.msra.mxu0 0
    %1482 = vmatprep.subr.bf16.mxu0 0
    %1483 = vmatpush1.bf16.msra.mxu0 0
    %1484 = vmatprep.subr.bf16.mxu0 0
    %1485 = vmatpush1.bf16.msra.mxu0 0
    %1486 = vmatprep.subr.bf16.mxu0 0
    %1487 = vmatpush1.bf16.msra.mxu0 0
    %1488 = vmatprep.subr.bf16.mxu0 0
    %1489 = vmatpush1.bf16.msra.mxu0 0
    %1490 = vmatprep.subr.bf16.mxu0 0
    %1491 = vmatpush1.bf16.msra.mxu0 0
    %1492 = vmatprep.subr.bf16.mxu0 0
    %1493 = vmatpush1.bf16.msra.mxu0 0
    %1494 = vmatprep.subr.bf16.mxu0 0
    %1495 = vmatpush1.bf16.msra.mxu0 0
    %1496 = vmatprep.subr.bf16.mxu0 0
    %1497 = vmatpush1.bf16.msra.mxu0 0
    %1498 = vmatprep.mubr.bf16.mxu0 0
    %1499 = vmatmul.mubr.bf16.gmra.mrb[0].mxu0 %v1464
    %v1500 = vpop.f32.mrb[0].mxu0
    %v1501 = vadd.f32 %v1449, %v1500
    %v1502 = vpop.f32.mrb[0].mxu0
    %v1503 = vpop.f32.mrb[0].mxu0
    %v1504 = vadd.f32 %v1449, %v1503
    %v1505 = vpop.f32.mrb[0].mxu0
    %1506 = vdwg.mxu0
    %v1507 = vld [vmem:[%s12] sm:$0x1]
    %v1508 = vpack.c.bf16 %v1436, %v1433
    %v1510 = vunpack.c.l.b16 %v1508
    %v1511 = vunpack.c.h.b16 %v1508
    %v1512 = vpack.c.b16 %v1510, %v1510
    %v1513 = vpack.c.b16 %v1511, %v1511
    %v1514 = vpack.c.bf16 %v1504, %v1501
    %v1516 = vunpack.c.l.b16 %v1514
    %v1517 = vunpack.c.h.b16 %v1514
    %v1518 = vpack.c.b16 %v1516, %v1516
    %v1519 = vpack.c.b16 %v1517, %v1517
    %v1521 = vsel %vm210, %v1512, 0
    %v1524 = vsel %vm210, %v1518, 0
    %1526 = vmatprep.subr.bf16.mxu0 0
    %1527 = vmatpush1.bf16.xpose.msra.mxu0 %v1524
    %1528 = vmatprep.subr.bf16.mxu0 0
    %1529 = vmatpush1.bf16.xpose.msra.mxu0 0
    %1530 = vmatprep.subr.bf16.mxu0 0
    %1531 = vmatpush1.bf16.xpose.msra.mxu0 0
    %1532 = vmatprep.subr.bf16.mxu0 0
    %1533 = vmatpush1.bf16.xpose.msra.mxu0 0
    %1534 = vmatprep.subr.bf16.mxu0 0
    %1535 = vmatpush1.bf16.xpose.msra.mxu0 0
    %1536 = vmatprep.subr.bf16.mxu0 0
    %1537 = vmatpush1.bf16.xpose.msra.mxu0 0
    %1538 = vmatprep.subr.bf16.mxu0 0
    %1539 = vmatpush1.bf16.xpose.msra.mxu0 0
    %1540 = vmatprep.subr.bf16.mxu0 0
    %1541 = vmatpush1.bf16.xpose.msra.mxu0 0
    %1542 = vmatprep.subr.bf16.mxu0 0
    %1543 = vmatpush1.bf16.xpose.msra.mxu0 0
    %1544 = vmatprep.subr.bf16.mxu0 0
    %1545 = vmatpush1.bf16.xpose.msra.mxu0 0
    %1546 = vmatprep.subr.bf16.mxu0 0
    %1547 = vmatpush1.bf16.xpose.msra.mxu0 0
    %1548 = vmatprep.subr.bf16.mxu0 0
    %1549 = vmatpush1.bf16.xpose.msra.mxu0 0
    %1550 = vmatprep.subr.bf16.mxu0 0
    %1551 = vmatpush1.bf16.xpose.msra.mxu0 0
    %1552 = vmatprep.subr.bf16.mxu0 0
    %1553 = vmatpush1.bf16.xpose.msra.mxu0 0
    %1554 = vmatprep.subr.bf16.mxu0 0
    %1555 = vmatpush1.bf16.xpose.msra.mxu0 0
    %1556 = vmatprep.subr.bf16.mxu0 0
    %1557 = vmatpush1.bf16.xpose.msra.mxu0 0
    %1558 = vmatprep.mubr.bf16.mxu0 0
    %1559 = vmatmul.mubr.bf16.gmra.mrb[0].mxu0 %v1521
    %v1560 = vpop.f32.mrb[0].mxu0
    %v1561 = vadd.f32 0.0, %v1560
    %v1562 = vpop.f32.mrb[0].mxu0
    %v1563 = vpop.f32.mrb[0].mxu0
    %v1564 = vpop.f32.mrb[0].mxu0
    %1565 = vdwg.mxu0
    %v1567 = vsel %vm210, %v1513, 0
    %v1570 = vsel %vm210, %v1519, 0
    %1572 = vmatprep.subr.bf16.mxu0 0
    %1573 = vmatpush1.bf16.xpose.msra.mxu0 %v1570
    %1574 = vmatprep.subr.bf16.mxu0 0
    %1575 = vmatpush1.bf16.xpose.msra.mxu0 0
    %1576 = vmatprep.subr.bf16.mxu0 0
    %1577 = vmatpush1.bf16.xpose.msra.mxu0 0
    %1578 = vmatprep.subr.bf16.mxu0 0
    %1579 = vmatpush1.bf16.xpose.msra.mxu0 0
    %1580 = vmatprep.subr.bf16.mxu0 0
    %1581 = vmatpush1.bf16.xpose.msra.mxu0 0
    %1582 = vmatprep.subr.bf16.mxu0 0
    %1583 = vmatpush1.bf16.xpose.msra.mxu0 0
    %1584 = vmatprep.subr.bf16.mxu0 0
    %1585 = vmatpush1.bf16.xpose.msra.mxu0 0
    %1586 = vmatprep.subr.bf16.mxu0 0
    %1587 = vmatpush1.bf16.xpose.msra.mxu0 0
    %1588 = vmatprep.subr.bf16.mxu0 0
    %1589 = vmatpush1.bf16.xpose.msra.mxu0 0
    %1590 = vmatprep.subr.bf16.mxu0 0
    %1591 = vmatpush1.bf16.xpose.msra.mxu0 0
    %1592 = vmatprep.subr.bf16.mxu0 0
    %1593 = vmatpush1.bf16.xpose.msra.mxu0 0
    %1594 = vmatprep.subr.bf16.mxu0 0
    %1595 = vmatpush1.bf16.xpose.msra.mxu0 0
    %1596 = vmatprep.subr.bf16.mxu0 0
    %1597 = vmatpush1.bf16.xpose.msra.mxu0 0
    %1598 = vmatprep.subr.bf16.mxu0 0
    %1599 = vmatpush1.bf16.xpose.msra.mxu0 0
    %1600 = vmatprep.subr.bf16.mxu0 0
    %1601 = vmatpush1.bf16.xpose.msra.mxu0 0
    %1602 = vmatprep.subr.bf16.mxu0 0
    %1603 = vmatpush1.bf16.xpose.msra.mxu0 0
    %1604 = vmatprep.mubr.bf16.mxu0 0
    %1605 = vmatmul.mubr.bf16.gmra.mrb[0].mxu0 %v1567
    %v1606 = vpop.f32.mrb[0].mxu0
    %v1607 = vadd.f32 0.0, %v1606
    %v1608 = vpop.f32.mrb[0].mxu0
    %v1609 = vpop.f32.mrb[0].mxu0
    %v1610 = vpop.f32.mrb[0].mxu0
    %1611 = vdwg.mxu0
    %v1612 = vmul.f32 %v1561, 0.35355338
    %v1613 = vmul.f32 %v1607, 0.35355338
    %v1614 = vsel %vm70, 1, 0
    %v1615 = vsel %vm71, 1, 0
    %v1616 = vlaneseq
    %v1617 = vshrl.u32 %v1616, 7
    %v1618 = vsub.s32 0, %v1617
    %v1619 = vrot.slane %v1614, %v1618
    %v1620 = vlaneseq
    %v1621 = vshrl.u32 %v1620, 7
    %v1622 = vsub.s32 0, %v1621
    %v1623 = vrot.slane %v1615, %v1622
    %vm1624 = vcmp.eq.s32.totalorder %v1619, 1
    %vm1625 = vcmp.eq.s32.totalorder %v1623, 1
    %v1626 = vsel %vm1624, %v1612, -1e+09
    %v1627 = vsel %vm1625, %v1613, -1e+09
    %v1628 = vsel %vm210, %v1626, -inf
    %1629 = vmax.xlane.f32.xlu0 %v1628
    %v1630 = vpop.xlane.xlu0 %1629
    %v1631 = vsel %vm210, %v1627, -inf
    %1632 = vmax.xlane.f32.xlu0 %v1631
    %v1633 = vpop.xlane.xlu0 %1632
    %v1634 = vsub.f32 %v1626, %v1630
    %v1635 = vsub.f32 %v1627, %v1633
    %v1636 = vmul.f32 %v1634, 1.442695
    %v1637 = vpow.pop %v1636
    %v1638 = vmul.f32 %v1635, 1.442695
    %v1639 = vpow.pop %v1638
    %v1640 = vsel %vm210, %v1637, 0.0
    %1641 = vadd.xlane.f32.xlu0 %v1640
    %v1642 = vpop.xlane.xlu0 %1641
    %v1643 = vsel %vm210, %v1639, 0.0
    %1644 = vadd.xlane.f32.xlu0 %v1643
    %v1645 = vpop.xlane.xlu0 %1644
    %v1646 = vrcp.pop %v1642
    %v1647 = vrcp.pop %v1645
    %v1648 = vmul.f32 %v1637, %v1646
    %v1649 = vmul.f32 %v1639, %v1647
    %v1650 = vpack.c.bf16 %v1648, %v1648
    %v1651 = vpack.c.bf16 %v1649, %v1649
    %1652 = vrot.lane.b32.xlu0 %v1518, 96
    %v1653 = vpop.permute.xlu0 %1652
    %v1655 = vsel %vm210, %v1650, 0
    %v1658 = vsel %vm340, %v1653, 0
    %1660 = vmatprep.subr.bf16.mxu0 0
    %1661 = vmatpush1.bf16.msra.mxu0 %v1658
    %1662 = vmatprep.subr.bf16.mxu0 0
    %1663 = vmatpush1.bf16.msra.mxu0 0
    %1664 = vmatprep.subr.bf16.mxu0 0
    %1665 = vmatpush1.bf16.msra.mxu0 0
    %1666 = vmatprep.subr.bf16.mxu0 0
    %1667 = vmatpush1.bf16.msra.mxu0 0
    %1668 = vmatprep.subr.bf16.mxu0 0
    %1669 = vmatpush1.bf16.msra.mxu0 0
    %1670 = vmatprep.subr.bf16.mxu0 0
    %1671 = vmatpush1.bf16.msra.mxu0 0
    %1672 = vmatprep.subr.bf16.mxu0 0
    %1673 = vmatpush1.bf16.msra.mxu0 0
    %1674 = vmatprep.subr.bf16.mxu0 0
    %1675 = vmatpush1.bf16.msra.mxu0 0
    %1676 = vmatprep.subr.bf16.mxu0 0
    %1677 = vmatpush1.bf16.msra.mxu0 0
    %1678 = vmatprep.subr.bf16.mxu0 0
    %1679 = vmatpush1.bf16.msra.mxu0 0
    %1680 = vmatprep.subr.bf16.mxu0 0
    %1681 = vmatpush1.bf16.msra.mxu0 0
    %1682 = vmatprep.subr.bf16.mxu0 0
    %1683 = vmatpush1.bf16.msra.mxu0 0
    %1684 = vmatprep.subr.bf16.mxu0 0
    %1685 = vmatpush1.bf16.msra.mxu0 0
    %1686 = vmatprep.subr.bf16.mxu0 0
    %1687 = vmatpush1.bf16.msra.mxu0 0
    %1688 = vmatprep.subr.bf16.mxu0 0
    %1689 = vmatpush1.bf16.msra.mxu0 0
    %1690 = vmatprep.subr.bf16.mxu0 0
    %1691 = vmatpush1.bf16.msra.mxu0 0
    %1692 = vmatprep.mubr.bf16.mxu0 0
    %1693 = vmatmul.mubr.bf16.gmra.mrb[0].mxu0 %v1655
    %v1694 = vpop.f32.mrb[0].mxu0
    %v1695 = vadd.f32 0.0, %v1694
    %v1696 = vpop.f32.mrb[0].mxu0
    %v1697 = vpop.f32.mrb[0].mxu0
    %v1698 = vpop.f32.mrb[0].mxu0
    %1699 = vdwg.mxu0
    %1700 = vrot.lane.b32.xlu0 %v1519, 96
    %v1701 = vpop.permute.xlu0 %1700
    %v1703 = vsel %vm210, %v1651, 0
    %v1706 = vsel %vm340, %v1701, 0
    %1708 = vmatprep.subr.bf16.mxu0 0
    %1709 = vmatpush1.bf16.msra.mxu0 %v1706
    %1710 = vmatprep.subr.bf16.mxu0 0
    %1711 = vmatpush1.bf16.msra.mxu0 0
    %1712 = vmatprep.subr.bf16.mxu0 0
    %1713 = vmatpush1.bf16.msra.mxu0 0
    %1714 = vmatprep.subr.bf16.mxu0 0
    %1715 = vmatpush1.bf16.msra.mxu0 0
    %1716 = vmatprep.subr.bf16.mxu0 0
    %1717 = vmatpush1.bf16.msra.mxu0 0
    %1718 = vmatprep.subr.bf16.mxu0 0
    %1719 = vmatpush1.bf16.msra.mxu0 0
    %1720 = vmatprep.subr.bf16.mxu0 0
    %1721 = vmatpush1.bf16.msra.mxu0 0
    %1722 = vmatprep.subr.bf16.mxu0 0
    %1723 = vmatpush1.bf16.msra.mxu0 0
    %1724 = vmatprep.subr.bf16.mxu0 0
    %1725 = vmatpush1.bf16.msra.mxu0 0
    %1726 = vmatprep.subr.bf16.mxu0 0
    %1727 = vmatpush1.bf16.msra.mxu0 0
    %1728 = vmatprep.subr.bf16.mxu0 0
    %1729 = vmatpush1.bf16.msra.mxu0 0
    %1730 = vmatprep.subr.bf16.mxu0 0
    %1731 = vmatpush1.bf16.msra.mxu0 0
    %1732 = vmatprep.subr.bf16.mxu0 0
    %1733 = vmatpush1.bf16.msra.mxu0 0
    %1734 = vmatprep.subr.bf16.mxu0 0
    %1735 = vmatpush1.bf16.msra.mxu0 0
    %1736 = vmatprep.subr.bf16.mxu0 0
    %1737 = vmatpush1.bf16.msra.mxu0 0
    %1738 = vmatprep.subr.bf16.mxu0 0
    %1739 = vmatpush1.bf16.msra.mxu0 0
    %1740 = vmatprep.mubr.bf16.mxu0 0
    %1741 = vmatmul.mubr.bf16.gmra.mrb[0].mxu0 %v1703
    %v1742 = vpop.f32.mrb[0].mxu0
    %v1743 = vadd.f32 0.0, %v1742
    %v1744 = vpop.f32.mrb[0].mxu0
    %v1745 = vpop.f32.mrb[0].mxu0
    %v1746 = vpop.f32.mrb[0].mxu0
    %1747 = vdwg.mxu0
    %v1748 = vpack.c.bf16 %v1743, %v1695
    %v1749 = vld [vmem:[%s11] sm:$0xf]
    %1750 = vrot.lane.b32.xlu0 %v1512, 120
    %v1751 = vpop.permute.xlu0 %1750
    %1752 = vrot.lane.b32.xlu0 %v1518, 120
    %v1753 = vpop.permute.xlu0 %1752
    %v1755 = vsel %vm210, %v1751, 0
    %v1758 = vsel %vm210, %v1753, 0
    %1760 = vmatprep.subr.bf16.mxu0 0
    %1761 = vmatpush1.bf16.xpose.msra.mxu0 %v1758
    %1762 = vmatprep.subr.bf16.mxu0 0
    %1763 = vmatpush1.bf16.xpose.msra.mxu0 0
    %1764 = vmatprep.subr.bf16.mxu0 0
    %1765 = vmatpush1.bf16.xpose.msra.mxu0 0
    %1766 = vmatprep.subr.bf16.mxu0 0
    %1767 = vmatpush1.bf16.xpose.msra.mxu0 0
    %1768 = vmatprep.subr.bf16.mxu0 0
    %1769 = vmatpush1.bf16.xpose.msra.mxu0 0
    %1770 = vmatprep.subr.bf16.mxu0 0
    %1771 = vmatpush1.bf16.xpose.msra.mxu0 0
    %1772 = vmatprep.subr.bf16.mxu0 0
    %1773 = vmatpush1.bf16.xpose.msra.mxu0 0
    %1774 = vmatprep.subr.bf16.mxu0 0
    %1775 = vmatpush1.bf16.xpose.msra.mxu0 0
    %1776 = vmatprep.subr.bf16.mxu0 0
    %1777 = vmatpush1.bf16.xpose.msra.mxu0 0
    %1778 = vmatprep.subr.bf16.mxu0 0
    %1779 = vmatpush1.bf16.xpose.msra.mxu0 0
    %1780 = vmatprep.subr.bf16.mxu0 0
    %1781 = vmatpush1.bf16.xpose.msra.mxu0 0
    %1782 = vmatprep.subr.bf16.mxu0 0
    %1783 = vmatpush1.bf16.xpose.msra.mxu0 0
    %1784 = vmatprep.subr.bf16.mxu0 0
    %1785 = vmatpush1.bf16.xpose.msra.mxu0 0
    %1786 = vmatprep.subr.bf16.mxu0 0
    %1787 = vmatpush1.bf16.xpose.msra.mxu0 0
    %1788 = vmatprep.subr.bf16.mxu0 0
    %1789 = vmatpush1.bf16.xpose.msra.mxu0 0
    %1790 = vmatprep.subr.bf16.mxu0 0
    %1791 = vmatpush1.bf16.xpose.msra.mxu0 0
    %1792 = vmatprep.mubr.bf16.mxu0 0
    %1793 = vmatmul.mubr.bf16.gmra.mrb[0].mxu0 %v1755
    %v1794 = vpop.f32.mrb[0].mxu0
    %v1795 = vadd.f32 0.0, %v1794
    %v1796 = vpop.f32.mrb[0].mxu0
    %v1797 = vpop.f32.mrb[0].mxu0
    %v1798 = vpop.f32.mrb[0].mxu0
    %1799 = vdwg.mxu0
    %1800 = vrot.lane.b32.xlu0 %v1513, 120
    %v1801 = vpop.permute.xlu0 %1800
    %1802 = vrot.lane.b32.xlu0 %v1519, 120
    %v1803 = vpop.permute.xlu0 %1802
    %v1805 = vsel %vm210, %v1801, 0
    %v1808 = vsel %vm210, %v1803, 0
    %1810 = vmatprep.subr.bf16.mxu0 0
    %1811 = vmatpush1.bf16.xpose.msra.mxu0 %v1808
    %1812 = vmatprep.subr.bf16.mxu0 0
    %1813 = vmatpush1.bf16.xpose.msra.mxu0 0
    %1814 = vmatprep.subr.bf16.mxu0 0
    %1815 = vmatpush1.bf16.xpose.msra.mxu0 0
    %1816 = vmatprep.subr.bf16.mxu0 0
    %1817 = vmatpush1.bf16.xpose.msra.mxu0 0
    %1818 = vmatprep.subr.bf16.mxu0 0
    %1819 = vmatpush1.bf16.xpose.msra.mxu0 0
    %1820 = vmatprep.subr.bf16.mxu0 0
    %1821 = vmatpush1.bf16.xpose.msra.mxu0 0
    %1822 = vmatprep.subr.bf16.mxu0 0
    %1823 = vmatpush1.bf16.xpose.msra.mxu0 0
    %1824 = vmatprep.subr.bf16.mxu0 0
    %1825 = vmatpush1.bf16.xpose.msra.mxu0 0
    %1826 = vmatprep.subr.bf16.mxu0 0
    %1827 = vmatpush1.bf16.xpose.msra.mxu0 0
    %1828 = vmatprep.subr.bf16.mxu0 0
    %1829 = vmatpush1.bf16.xpose.msra.mxu0 0
    %1830 = vmatprep.subr.bf16.mxu0 0
    %1831 = vmatpush1.bf16.xpose.msra.mxu0 0
    %1832 = vmatprep.subr.bf16.mxu0 0
    %1833 = vmatpush1.bf16.xpose.msra.mxu0 0
    %1834 = vmatprep.subr.bf16.mxu0 0
    %1835 = vmatpush1.bf16.xpose.msra.mxu0 0
    %1836 = vmatprep.subr.bf16.mxu0 0
    %1837 = vmatpush1.bf16.xpose.msra.mxu0 0
    %1838 = vmatprep.subr.bf16.mxu0 0
    %1839 = vmatpush1.bf16.xpose.msra.mxu0 0
    %1840 = vmatprep.subr.bf16.mxu0 0
    %1841 = vmatpush1.bf16.xpose.msra.mxu0 0
    %1842 = vmatprep.mubr.bf16.mxu0 0
    %1843 = vmatmul.mubr.bf16.gmra.mrb[0].mxu0 %v1805
    %v1844 = vpop.f32.mrb[0].mxu0
    %v1845 = vadd.f32 0.0, %v1844
    %v1846 = vpop.f32.mrb[0].mxu0
    %v1847 = vpop.f32.mrb[0].mxu0
    %v1848 = vpop.f32.mrb[0].mxu0
    %1849 = vdwg.mxu0
    %v1850 = vmul.f32 %v1795, 0.35355338
    %v1851 = vmul.f32 %v1845, 0.35355338
    %v1852 = vsel %vm1624, %v1850, -1e+09
    %v1853 = vsel %vm1625, %v1851, -1e+09
    %v1854 = vsel %vm210, %v1852, -inf
    %1855 = vmax.xlane.f32.xlu0 %v1854
    %v1856 = vpop.xlane.xlu0 %1855
    %v1857 = vsel %vm210, %v1853, -inf
    %1858 = vmax.xlane.f32.xlu0 %v1857
    %v1859 = vpop.xlane.xlu0 %1858
    %v1860 = vsub.f32 %v1852, %v1856
    %v1861 = vsub.f32 %v1853, %v1859
    %v1862 = vmul.f32 %v1860, 1.442695
    %v1863 = vpow.pop %v1862
    %v1864 = vmul.f32 %v1861, 1.442695
    %v1865 = vpow.pop %v1864
    %v1866 = vsel %vm210, %v1863, 0.0
    %1867 = vadd.xlane.f32.xlu0 %v1866
    %v1868 = vpop.xlane.xlu0 %1867
    %v1869 = vsel %vm210, %v1865, 0.0
    %1870 = vadd.xlane.f32.xlu0 %v1869
    %v1871 = vpop.xlane.xlu0 %1870
    %v1872 = vrcp.pop %v1868
    %v1873 = vrcp.pop %v1871
    %v1874 = vmul.f32 %v1863, %v1872
    %v1875 = vmul.f32 %v1865, %v1873
    %v1876 = vpack.c.bf16 %v1874, %v1874
    %v1877 = vpack.c.bf16 %v1875, %v1875
    %1878 = vrot.lane.b32.xlu0 %v1518, 88
    %v1879 = vpop.permute.xlu0 %1878
    %v1881 = vsel %vm210, %v1876, 0
    %v1884 = vsel %vm340, %v1879, 0
    %1886 = vmatprep.subr.bf16.mxu0 0
    %1887 = vmatpush1.bf16.msra.mxu0 %v1884
    %1888 = vmatprep.subr.bf16.mxu0 0
    %1889 = vmatpush1.bf16.msra.mxu0 0
    %1890 = vmatprep.subr.bf16.mxu0 0
    %1891 = vmatpush1.bf16.msra.mxu0 0
    %1892 = vmatprep.subr.bf16.mxu0 0
    %1893 = vmatpush1.bf16.msra.mxu0 0
    %1894 = vmatprep.subr.bf16.mxu0 0
    %1895 = vmatpush1.bf16.msra.mxu0 0
    %1896 = vmatprep.subr.bf16.mxu0 0
    %1897 = vmatpush1.bf16.msra.mxu0 0
    %1898 = vmatprep.subr.bf16.mxu0 0
    %1899 = vmatpush1.bf16.msra.mxu0 0
    %1900 = vmatprep.subr.bf16.mxu0 0
    %1901 = vmatpush1.bf16.msra.mxu0 0
    %1902 = vmatprep.subr.bf16.mxu0 0
    %1903 = vmatpush1.bf16.msra.mxu0 0
    %1904 = vmatprep.subr.bf16.mxu0 0
    %1905 = vmatpush1.bf16.msra.mxu0 0
    %1906 = vmatprep.subr.bf16.mxu0 0
    %1907 = vmatpush1.bf16.msra.mxu0 0
    %1908 = vmatprep.subr.bf16.mxu0 0
    %1909 = vmatpush1.bf16.msra.mxu0 0
    %1910 = vmatprep.subr.bf16.mxu0 0
    %1911 = vmatpush1.bf16.msra.mxu0 0
    %1912 = vmatprep.subr.bf16.mxu0 0
    %1913 = vmatpush1.bf16.msra.mxu0 0
    %1914 = vmatprep.subr.bf16.mxu0 0
    %1915 = vmatpush1.bf16.msra.mxu0 0
    %1916 = vmatprep.subr.bf16.mxu0 0
    %1917 = vmatpush1.bf16.msra.mxu0 0
    %1918 = vmatprep.mubr.bf16.mxu0 0
    %1919 = vmatmul.mubr.bf16.gmra.mrb[0].mxu0 %v1881
    %v1920 = vpop.f32.mrb[0].mxu0
    %v1921 = vadd.f32 0.0, %v1920
    %v1922 = vpop.f32.mrb[0].mxu0
    %v1923 = vpop.f32.mrb[0].mxu0
    %v1924 = vpop.f32.mrb[0].mxu0
    %1925 = vdwg.mxu0
    %1926 = vrot.lane.b32.xlu0 %v1519, 88
    %v1927 = vpop.permute.xlu0 %1926
    %v1929 = vsel %vm210, %v1877, 0
    %v1932 = vsel %vm340, %v1927, 0
    %1934 = vmatprep.subr.bf16.mxu0 0
    %1935 = vmatpush1.bf16.msra.mxu0 %v1932
    %1936 = vmatprep.subr.bf16.mxu0 0
    %1937 = vmatpush1.bf16.msra.mxu0 0
    %1938 = vmatprep.subr.bf16.mxu0 0
    %1939 = vmatpush1.bf16.msra.mxu0 0
    %1940 = vmatprep.subr.bf16.mxu0 0
    %1941 = vmatpush1.bf16.msra.mxu0 0
    %1942 = vmatprep.subr.bf16.mxu0 0
    %1943 = vmatpush1.bf16.msra.mxu0 0
    %1944 = vmatprep.subr.bf16.mxu0 0
    %1945 = vmatpush1.bf16.msra.mxu0 0
    %1946 = vmatprep.subr.bf16.mxu0 0
    %1947 = vmatpush1.bf16.msra.mxu0 0
    %1948 = vmatprep.subr.bf16.mxu0 0
    %1949 = vmatpush1.bf16.msra.mxu0 0
    %1950 = vmatprep.subr.bf16.mxu0 0
    %1951 = vmatpush1.bf16.msra.mxu0 0
    %1952 = vmatprep.subr.bf16.mxu0 0
    %1953 = vmatpush1.bf16.msra.mxu0 0
    %1954 = vmatprep.subr.bf16.mxu0 0
    %1955 = vmatpush1.bf16.msra.mxu0 0
    %1956 = vmatprep.subr.bf16.mxu0 0
    %1957 = vmatpush1.bf16.msra.mxu0 0
    %1958 = vmatprep.subr.bf16.mxu0 0
    %1959 = vmatpush1.bf16.msra.mxu0 0
    %1960 = vmatprep.subr.bf16.mxu0 0
    %1961 = vmatpush1.bf16.msra.mxu0 0
    %1962 = vmatprep.subr.bf16.mxu0 0
    %1963 = vmatpush1.bf16.msra.mxu0 0
    %1964 = vmatprep.subr.bf16.mxu0 0
    %1965 = vmatpush1.bf16.msra.mxu0 0
    %1966 = vmatprep.mubr.bf16.mxu0 0
    %1967 = vmatmul.mubr.bf16.gmra.mrb[0].mxu0 %v1929
    %v1968 = vpop.f32.mrb[0].mxu0
    %v1969 = vadd.f32 0.0, %v1968
    %v1970 = vpop.f32.mrb[0].mxu0
    %v1971 = vpop.f32.mrb[0].mxu0
    %v1972 = vpop.f32.mrb[0].mxu0
    %1973 = vdwg.mxu0
    %v1974 = vpack.c.bf16 %v1969, %v1921
    %s1975 = scalar_lea.vmem %s11, 4
    %v1976 = vld [vmem:[%s1975] sm:$0xf]
    %v1978 = vsel %vm210, %v1974, 0
    %v1981 = vsel %vm340, %v1976, 0
    %1983 = vmatprep.subr.bf16.mxu0 0
    %1984 = vmatpush1.bf16.msra.mxu0 %v1981
    %1985 = vmatprep.subr.bf16.mxu0 0
    %1986 = vmatpush1.bf16.msra.mxu0 0
    %1987 = vmatprep.subr.bf16.mxu0 0
    %1988 = vmatpush1.bf16.msra.mxu0 0
    %1989 = vmatprep.subr.bf16.mxu0 0
    %1990 = vmatpush1.bf16.msra.mxu0 0
    %1991 = vmatprep.subr.bf16.mxu0 0
    %1992 = vmatpush1.bf16.msra.mxu0 0
    %1993 = vmatprep.subr.bf16.mxu0 0
    %1994 = vmatpush1.bf16.msra.mxu0 0
    %1995 = vmatprep.subr.bf16.mxu0 0
    %1996 = vmatpush1.bf16.msra.mxu0 0
    %1997 = vmatprep.subr.bf16.mxu0 0
    %1998 = vmatpush1.bf16.msra.mxu0 0
    %1999 = vmatprep.subr.bf16.mxu0 0
    %2000 = vmatpush1.bf16.msra.mxu0 0
    %2001 = vmatprep.subr.bf16.mxu0 0
    %2002 = vmatpush1.bf16.msra.mxu0 0
    %2003 = vmatprep.subr.bf16.mxu0 0
    %2004 = vmatpush1.bf16.msra.mxu0 0
    %2005 = vmatprep.subr.bf16.mxu0 0
    %2006 = vmatpush1.bf16.msra.mxu0 0
    %2007 = vmatprep.subr.bf16.mxu0 0
    %2008 = vmatpush1.bf16.msra.mxu0 0
    %2009 = vmatprep.subr.bf16.mxu0 0
    %2010 = vmatpush1.bf16.msra.mxu0 0
    %2011 = vmatprep.subr.bf16.mxu0 0
    %2012 = vmatpush1.bf16.msra.mxu0 0
    %2013 = vmatprep.subr.bf16.mxu0 0
    %2014 = vmatpush1.bf16.msra.mxu0 0
    %2015 = vmatprep.mubr.bf16.mxu0 0
    %2016 = vmatmul.mubr.bf16.gmra.mrb[0].mxu0 %v1978
    %v2017 = vpop.f32.mrb[0].mxu0
    %v2018 = vadd.f32 0.0, %v2017
    %v2019 = vpop.f32.mrb[0].mxu0
    %v2020 = vpop.f32.mrb[0].mxu0
    %v2021 = vadd.f32 0.0, %v2020
    %v2022 = vpop.f32.mrb[0].mxu0
    %2023 = vdwg.mxu0
    %v2025 = vsel %vm210, %v1748, 0
    %v2028 = vsel %vm340, %v1749, 0
    %2030 = vmatprep.subr.bf16.mxu0 0
    %2031 = vmatpush1.bf16.msra.mxu0 %v2028
    %2032 = vmatprep.subr.bf16.mxu0 0
    %2033 = vmatpush1.bf16.msra.mxu0 0
    %2034 = vmatprep.subr.bf16.mxu0 0
    %2035 = vmatpush1.bf16.msra.mxu0 0
    %2036 = vmatprep.subr.bf16.mxu0 0
    %2037 = vmatpush1.bf16.msra.mxu0 0
    %2038 = vmatprep.subr.bf16.mxu0 0
    %2039 = vmatpush1.bf16.msra.mxu0 0
    %2040 = vmatprep.subr.bf16.mxu0 0
    %2041 = vmatpush1.bf16.msra.mxu0 0
    %2042 = vmatprep.subr.bf16.mxu0 0
    %2043 = vmatpush1.bf16.msra.mxu0 0
    %2044 = vmatprep.subr.bf16.mxu0 0
    %2045 = vmatpush1.bf16.msra.mxu0 0
    %2046 = vmatprep.subr.bf16.mxu0 0
    %2047 = vmatpush1.bf16.msra.mxu0 0
    %2048 = vmatprep.subr.bf16.mxu0 0
    %2049 = vmatpush1.bf16.msra.mxu0 0
    %2050 = vmatprep.subr.bf16.mxu0 0
    %2051 = vmatpush1.bf16.msra.mxu0 0
    %2052 = vmatprep.subr.bf16.mxu0 0
    %2053 = vmatpush1.bf16.msra.mxu0 0
    %2054 = vmatprep.subr.bf16.mxu0 0
    %2055 = vmatpush1.bf16.msra.mxu0 0
    %2056 = vmatprep.subr.bf16.mxu0 0
    %2057 = vmatpush1.bf16.msra.mxu0 0
    %2058 = vmatprep.subr.bf16.mxu0 0
    %2059 = vmatpush1.bf16.msra.mxu0 0
    %2060 = vmatprep.subr.bf16.mxu0 0
    %2061 = vmatpush1.bf16.msra.mxu0 0
    %2062 = vmatprep.mubr.bf16.mxu0 0
    %2063 = vmatmul.mubr.bf16.gmra.mrb[0].mxu0 %v2025
    %v2064 = vpop.f32.mrb[0].mxu0
    %v2065 = vadd.f32 %v2018, %v2064
    %v2066 = vpop.f32.mrb[0].mxu0
    %v2067 = vpop.f32.mrb[0].mxu0
    %v2068 = vadd.f32 %v2021, %v2067
    %v2069 = vpop.f32.mrb[0].mxu0
    %2070 = vdwg.mxu0
    %2071 = vrot.lane.b32.xlu0 %v1512, 112
    %v2072 = vpop.permute.xlu0 %2071
    %2073 = vrot.lane.b32.xlu0 %v1518, 112
    %v2074 = vpop.permute.xlu0 %2073
    %v2076 = vsel %vm210, %v2072, 0
    %v2079 = vsel %vm210, %v2074, 0
    %2081 = vmatprep.subr.bf16.mxu0 0
    %2082 = vmatpush1.bf16.xpose.msra.mxu0 %v2079
    %2083 = vmatprep.subr.bf16.mxu0 0
    %2084 = vmatpush1.bf16.xpose.msra.mxu0 0
    %2085 = vmatprep.subr.bf16.mxu0 0
    %2086 = vmatpush1.bf16.xpose.msra.mxu0 0
    %2087 = vmatprep.subr.bf16.mxu0 0
    %2088 = vmatpush1.bf16.xpose.msra.mxu0 0
    %2089 = vmatprep.subr.bf16.mxu0 0
    %2090 = vmatpush1.bf16.xpose.msra.mxu0 0
    %2091 = vmatprep.subr.bf16.mxu0 0
    %2092 = vmatpush1.bf16.xpose.msra.mxu0 0
    %2093 = vmatprep.subr.bf16.mxu0 0
    %2094 = vmatpush1.bf16.xpose.msra.mxu0 0
    %2095 = vmatprep.subr.bf16.mxu0 0
    %2096 = vmatpush1.bf16.xpose.msra.mxu0 0
    %2097 = vmatprep.subr.bf16.mxu0 0
    %2098 = vmatpush1.bf16.xpose.msra.mxu0 0
    %2099 = vmatprep.subr.bf16.mxu0 0
    %2100 = vmatpush1.bf16.xpose.msra.mxu0 0
    %2101 = vmatprep.subr.bf16.mxu0 0
    %2102 = vmatpush1.bf16.xpose.msra.mxu0 0
    %2103 = vmatprep.subr.bf16.mxu0 0
    %2104 = vmatpush1.bf16.xpose.msra.mxu0 0
    %2105 = vmatprep.subr.bf16.mxu0 0
    %2106 = vmatpush1.bf16.xpose.msra.mxu0 0
    %2107 = vmatprep.subr.bf16.mxu0 0
    %2108 = vmatpush1.bf16.xpose.msra.mxu0 0
    %2109 = vmatprep.subr.bf16.mxu0 0
    %2110 = vmatpush1.bf16.xpose.msra.mxu0 0
    %2111 = vmatprep.subr.bf16.mxu0 0
    %2112 = vmatpush1.bf16.xpose.msra.mxu0 0
    %2113 = vmatprep.mubr.bf16.mxu0 0
    %2114 = vmatmul.mubr.bf16.gmra.mrb[0].mxu0 %v2076
    %v2115 = vpop.f32.mrb[0].mxu0
    %v2116 = vadd.f32 0.0, %v2115
    %v2117 = vpop.f32.mrb[0].mxu0
    %v2118 = vpop.f32.mrb[0].mxu0
    %v2119 = vpop.f32.mrb[0].mxu0
    %2120 = vdwg.mxu0
    %2121 = vrot.lane.b32.xlu0 %v1513, 112
    %v2122 = vpop.permute.xlu0 %2121
    %2123 = vrot.lane.b32.xlu0 %v1519, 112
    %v2124 = vpop.permute.xlu0 %2123
    %v2126 = vsel %vm210, %v2122, 0
    %v2129 = vsel %vm210, %v2124, 0
    %2131 = vmatprep.subr.bf16.mxu0 0
    %2132 = vmatpush1.bf16.xpose.msra.mxu0 %v2129
    %2133 = vmatprep.subr.bf16.mxu0 0
    %2134 = vmatpush1.bf16.xpose.msra.mxu0 0
    %2135 = vmatprep.subr.bf16.mxu0 0
    %2136 = vmatpush1.bf16.xpose.msra.mxu0 0
    %2137 = vmatprep.subr.bf16.mxu0 0
    %2138 = vmatpush1.bf16.xpose.msra.mxu0 0
    %2139 = vmatprep.subr.bf16.mxu0 0
    %2140 = vmatpush1.bf16.xpose.msra.mxu0 0
    %2141 = vmatprep.subr.bf16.mxu0 0
    %2142 = vmatpush1.bf16.xpose.msra.mxu0 0
    %2143 = vmatprep.subr.bf16.mxu0 0
    %2144 = vmatpush1.bf16.xpose.msra.mxu0 0
    %2145 = vmatprep.subr.bf16.mxu0 0
    %2146 = vmatpush1.bf16.xpose.msra.mxu0 0
    %2147 = vmatprep.subr.bf16.mxu0 0
    %2148 = vmatpush1.bf16.xpose.msra.mxu0 0
    %2149 = vmatprep.subr.bf16.mxu0 0
    %2150 = vmatpush1.bf16.xpose.msra.mxu0 0
    %2151 = vmatprep.subr.bf16.mxu0 0
    %2152 = vmatpush1.bf16.xpose.msra.mxu0 0
    %2153 = vmatprep.subr.bf16.mxu0 0
    %2154 = vmatpush1.bf16.xpose.msra.mxu0 0
    %2155 = vmatprep.subr.bf16.mxu0 0
    %2156 = vmatpush1.bf16.xpose.msra.mxu0 0
    %2157 = vmatprep.subr.bf16.mxu0 0
    %2158 = vmatpush1.bf16.xpose.msra.mxu0 0
    %2159 = vmatprep.subr.bf16.mxu0 0
    %2160 = vmatpush1.bf16.xpose.msra.mxu0 0
    %2161 = vmatprep.subr.bf16.mxu0 0
    %2162 = vmatpush1.bf16.xpose.msra.mxu0 0
    %2163 = vmatprep.mubr.bf16.mxu0 0
    %2164 = vmatmul.mubr.bf16.gmra.mrb[0].mxu0 %v2126
    %v2165 = vpop.f32.mrb[0].mxu0
    %v2166 = vadd.f32 0.0, %v2165
    %v2167 = vpop.f32.mrb[0].mxu0
    %v2168 = vpop.f32.mrb[0].mxu0
    %v2169 = vpop.f32.mrb[0].mxu0
    %2170 = vdwg.mxu0
    %v2171 = vmul.f32 %v2116, 0.35355338
    %v2172 = vmul.f32 %v2166, 0.35355338
    %v2173 = vsel %vm1624, %v2171, -1e+09
    %v2174 = vsel %vm1625, %v2172, -1e+09
    %v2175 = vsel %vm210, %v2173, -inf
    %2176 = vmax.xlane.f32.xlu0 %v2175
    %v2177 = vpop.xlane.xlu0 %2176
    %v2178 = vsel %vm210, %v2174, -inf
    %2179 = vmax.xlane.f32.xlu0 %v2178
    %v2180 = vpop.xlane.xlu0 %2179
    %v2181 = vsub.f32 %v2173, %v2177
    %v2182 = vsub.f32 %v2174, %v2180
    %v2183 = vmul.f32 %v2181, 1.442695
    %v2184 = vpow.pop %v2183
    %v2185 = vmul.f32 %v2182, 1.442695
    %v2186 = vpow.pop %v2185
    %v2187 = vsel %vm210, %v2184, 0.0
    %2188 = vadd.xlane.f32.xlu0 %v2187
    %v2189 = vpop.xlane.xlu0 %2188
    %v2190 = vsel %vm210, %v2186, 0.0
    %2191 = vadd.xlane.f32.xlu0 %v2190
    %v2192 = vpop.xlane.xlu0 %2191
    %v2193 = vrcp.pop %v2189
    %v2194 = vrcp.pop %v2192
    %v2195 = vmul.f32 %v2184, %v2193
    %v2196 = vmul.f32 %v2186, %v2194
    %v2197 = vpack.c.bf16 %v2195, %v2195
    %v2198 = vpack.c.bf16 %v2196, %v2196
    %2199 = vrot.lane.b32.xlu0 %v1518, 80
    %v2200 = vpop.permute.xlu0 %2199
    %v2202 = vsel %vm210, %v2197, 0
    %v2205 = vsel %vm340, %v2200, 0
    %2207 = vmatprep.subr.bf16.mxu0 0
    %2208 = vmatpush1.bf16.msra.mxu0 %v2205
    %2209 = vmatprep.subr.bf16.mxu0 0
    %2210 = vmatpush1.bf16.msra.mxu0 0
    %2211 = vmatprep.subr.bf16.mxu0 0
    %2212 = vmatpush1.bf16.msra.mxu0 0
    %2213 = vmatprep.subr.bf16.mxu0 0
    %2214 = vmatpush1.bf16.msra.mxu0 0
    %2215 = vmatprep.subr.bf16.mxu0 0
    %2216 = vmatpush1.bf16.msra.mxu0 0
    %2217 = vmatprep.subr.bf16.mxu0 0
    %2218 = vmatpush1.bf16.msra.mxu0 0
    %2219 = vmatprep.subr.bf16.mxu0 0
    %2220 = vmatpush1.bf16.msra.mxu0 0
    %2221 = vmatprep.subr.bf16.mxu0 0
    %2222 = vmatpush1.bf16.msra.mxu0 0
    %2223 = vmatprep.subr.bf16.mxu0 0
    %2224 = vmatpush1.bf16.msra.mxu0 0
    %2225 = vmatprep.subr.bf16.mxu0 0
    %2226 = vmatpush1.bf16.msra.mxu0 0
    %2227 = vmatprep.subr.bf16.mxu0 0
    %2228 = vmatpush1.bf16.msra.mxu0 0
    %2229 = vmatprep.subr.bf16.mxu0 0
    %2230 = vmatpush1.bf16.msra.mxu0 0
    %2231 = vmatprep.subr.bf16.mxu0 0
    %2232 = vmatpush1.bf16.msra.mxu0 0
    %2233 = vmatprep.subr.bf16.mxu0 0
    %2234 = vmatpush1.bf16.msra.mxu0 0
    %2235 = vmatprep.subr.bf16.mxu0 0
    %2236 = vmatpush1.bf16.msra.mxu0 0
    %2237 = vmatprep.subr.bf16.mxu0 0
    %2238 = vmatpush1.bf16.msra.mxu0 0
    %2239 = vmatprep.mubr.bf16.mxu0 0
    %2240 = vmatmul.mubr.bf16.gmra.mrb[0].mxu0 %v2202
    %v2241 = vpop.f32.mrb[0].mxu0
    %v2242 = vadd.f32 0.0, %v2241
    %v2243 = vpop.f32.mrb[0].mxu0
    %v2244 = vpop.f32.mrb[0].mxu0
    %v2245 = vpop.f32.mrb[0].mxu0
    %2246 = vdwg.mxu0
    %2247 = vrot.lane.b32.xlu0 %v1519, 80
    %v2248 = vpop.permute.xlu0 %2247
    %v2250 = vsel %vm210, %v2198, 0
    %v2253 = vsel %vm340, %v2248, 0
    %2255 = vmatprep.subr.bf16.mxu0 0
    %2256 = vmatpush1.bf16.msra.mxu0 %v2253
    %2257 = vmatprep.subr.bf16.mxu0 0
    %2258 = vmatpush1.bf16.msra.mxu0 0
    %2259 = vmatprep.subr.bf16.mxu0 0
    %2260 = vmatpush1.bf16.msra.mxu0 0
    %2261 = vmatprep.subr.bf16.mxu0 0
    %2262 = vmatpush1.bf16.msra.mxu0 0
    %2263 = vmatprep.subr.bf16.mxu0 0
    %2264 = vmatpush1.bf16.msra.mxu0 0
    %2265 = vmatprep.subr.bf16.mxu0 0
    %2266 = vmatpush1.bf16.msra.mxu0 0
    %2267 = vmatprep.subr.bf16.mxu0 0
    %2268 = vmatpush1.bf16.msra.mxu0 0
    %2269 = vmatprep.subr.bf16.mxu0 0
    %2270 = vmatpush1.bf16.msra.mxu0 0
    %2271 = vmatprep.subr.bf16.mxu0 0
    %2272 = vmatpush1.bf16.msra.mxu0 0
    %2273 = vmatprep.subr.bf16.mxu0 0
    %2274 = vmatpush1.bf16.msra.mxu0 0
    %2275 = vmatprep.subr.bf16.mxu0 0
    %2276 = vmatpush1.bf16.msra.mxu0 0
    %2277 = vmatprep.subr.bf16.mxu0 0
    %2278 = vmatpush1.bf16.msra.mxu0 0
    %2279 = vmatprep.subr.bf16.mxu0 0
    %2280 = vmatpush1.bf16.msra.mxu0 0
    %2281 = vmatprep.subr.bf16.mxu0 0
    %2282 = vmatpush1.bf16.msra.mxu0 0
    %2283 = vmatprep.subr.bf16.mxu0 0
    %2284 = vmatpush1.bf16.msra.mxu0 0
    %2285 = vmatprep.subr.bf16.mxu0 0
    %2286 = vmatpush1.bf16.msra.mxu0 0
    %2287 = vmatprep.mubr.bf16.mxu0 0
    %2288 = vmatmul.mubr.bf16.gmra.mrb[0].mxu0 %v2250
    %v2289 = vpop.f32.mrb[0].mxu0
    %v2290 = vadd.f32 0.0, %v2289
    %v2291 = vpop.f32.mrb[0].mxu0
    %v2292 = vpop.f32.mrb[0].mxu0
    %v2293 = vpop.f32.mrb[0].mxu0
    %2294 = vdwg.mxu0
    %v2295 = vpack.c.bf16 %v2290, %v2242
    %s2296 = scalar_lea.vmem %s11, 8
    %v2297 = vld [vmem:[%s2296] sm:$0xf]
    %v2299 = vsel %vm210, %v2295, 0
    %v2302 = vsel %vm340, %v2297, 0
    %2304 = vmatprep.subr.bf16.mxu0 0
    %2305 = vmatpush1.bf16.msra.mxu0 %v2302
    %2306 = vmatprep.subr.bf16.mxu0 0
    %2307 = vmatpush1.bf16.msra.mxu0 0
    %2308 = vmatprep.subr.bf16.mxu0 0
    %2309 = vmatpush1.bf16.msra.mxu0 0
    %2310 = vmatprep.subr.bf16.mxu0 0
    %2311 = vmatpush1.bf16.msra.mxu0 0
    %2312 = vmatprep.subr.bf16.mxu0 0
    %2313 = vmatpush1.bf16.msra.mxu0 0
    %2314 = vmatprep.subr.bf16.mxu0 0
    %2315 = vmatpush1.bf16.msra.mxu0 0
    %2316 = vmatprep.subr.bf16.mxu0 0
    %2317 = vmatpush1.bf16.msra.mxu0 0
    %2318 = vmatprep.subr.bf16.mxu0 0
    %2319 = vmatpush1.bf16.msra.mxu0 0
    %2320 = vmatprep.subr.bf16.mxu0 0
    %2321 = vmatpush1.bf16.msra.mxu0 0
    %2322 = vmatprep.subr.bf16.mxu0 0
    %2323 = vmatpush1.bf16.msra.mxu0 0
    %2324 = vmatprep.subr.bf16.mxu0 0
    %2325 = vmatpush1.bf16.msra.mxu0 0
    %2326 = vmatprep.subr.bf16.mxu0 0
    %2327 = vmatpush1.bf16.msra.mxu0 0
    %2328 = vmatprep.subr.bf16.mxu0 0
    %2329 = vmatpush1.bf16.msra.mxu0 0
    %2330 = vmatprep.subr.bf16.mxu0 0
    %2331 = vmatpush1.bf16.msra.mxu0 0
    %2332 = vmatprep.subr.bf16.mxu0 0
    %2333 = vmatpush1.bf16.msra.mxu0 0
    %2334 = vmatprep.subr.bf16.mxu0 0
    %2335 = vmatpush1.bf16.msra.mxu0 0
    %2336 = vmatprep.mubr.bf16.mxu0 0
    %2337 = vmatmul.mubr.bf16.gmra.mrb[0].mxu0 %v2299
    %v2338 = vpop.f32.mrb[0].mxu0
    %v2339 = vadd.f32 0.0, %v2338
    %v2340 = vpop.f32.mrb[0].mxu0
    %v2341 = vpop.f32.mrb[0].mxu0
    %v2342 = vadd.f32 0.0, %v2341
    %v2343 = vpop.f32.mrb[0].mxu0
    %2344 = vdwg.mxu0
    %v2345 = vadd.f32 %v2065, %v2339
    %v2346 = vadd.f32 %v2068, %v2342
    %2347 = vrot.lane.b32.xlu0 %v1512, 104
    %v2348 = vpop.permute.xlu0 %2347
    %2349 = vrot.lane.b32.xlu0 %v1518, 104
    %v2350 = vpop.permute.xlu0 %2349
    %v2352 = vsel %vm210, %v2348, 0
    %v2355 = vsel %vm210, %v2350, 0
    %2357 = vmatprep.subr.bf16.mxu0 0
    %2358 = vmatpush1.bf16.xpose.msra.mxu0 %v2355
    %2359 = vmatprep.subr.bf16.mxu0 0
    %2360 = vmatpush1.bf16.xpose.msra.mxu0 0
    %2361 = vmatprep.subr.bf16.mxu0 0
    %2362 = vmatpush1.bf16.xpose.msra.mxu0 0
    %2363 = vmatprep.subr.bf16.mxu0 0
    %2364 = vmatpush1.bf16.xpose.msra.mxu0 0
    %2365 = vmatprep.subr.bf16.mxu0 0
    %2366 = vmatpush1.bf16.xpose.msra.mxu0 0
    %2367 = vmatprep.subr.bf16.mxu0 0
    %2368 = vmatpush1.bf16.xpose.msra.mxu0 0
    %2369 = vmatprep.subr.bf16.mxu0 0
    %2370 = vmatpush1.bf16.xpose.msra.mxu0 0
    %2371 = vmatprep.subr.bf16.mxu0 0
    %2372 = vmatpush1.bf16.xpose.msra.mxu0 0
    %2373 = vmatprep.subr.bf16.mxu0 0
    %2374 = vmatpush1.bf16.xpose.msra.mxu0 0
    %2375 = vmatprep.subr.bf16.mxu0 0
    %2376 = vmatpush1.bf16.xpose.msra.mxu0 0
    %2377 = vmatprep.subr.bf16.mxu0 0
    %2378 = vmatpush1.bf16.xpose.msra.mxu0 0
    %2379 = vmatprep.subr.bf16.mxu0 0
    %2380 = vmatpush1.bf16.xpose.msra.mxu0 0
    %2381 = vmatprep.subr.bf16.mxu0 0
    %2382 = vmatpush1.bf16.xpose.msra.mxu0 0
    %2383 = vmatprep.subr.bf16.mxu0 0
    %2384 = vmatpush1.bf16.xpose.msra.mxu0 0
    %2385 = vmatprep.subr.bf16.mxu0 0
    %2386 = vmatpush1.bf16.xpose.msra.mxu0 0
    %2387 = vmatprep.subr.bf16.mxu0 0
    %2388 = vmatpush1.bf16.xpose.msra.mxu0 0
    %2389 = vmatprep.mubr.bf16.mxu0 0
    %2390 = vmatmul.mubr.bf16.gmra.mrb[0].mxu0 %v2352
    %v2391 = vpop.f32.mrb[0].mxu0
    %v2392 = vadd.f32 0.0, %v2391
    %v2393 = vpop.f32.mrb[0].mxu0
    %v2394 = vpop.f32.mrb[0].mxu0
    %v2395 = vpop.f32.mrb[0].mxu0
    %2396 = vdwg.mxu0
    %2397 = vrot.lane.b32.xlu0 %v1513, 104
    %v2398 = vpop.permute.xlu0 %2397
    %2399 = vrot.lane.b32.xlu0 %v1519, 104
    %v2400 = vpop.permute.xlu0 %2399
    %v2402 = vsel %vm210, %v2398, 0
    %v2405 = vsel %vm210, %v2400, 0
    %2407 = vmatprep.subr.bf16.mxu0 0
    %2408 = vmatpush1.bf16.xpose.msra.mxu0 %v2405
    %2409 = vmatprep.subr.bf16.mxu0 0
    %2410 = vmatpush1.bf16.xpose.msra.mxu0 0
    %2411 = vmatprep.subr.bf16.mxu0 0
    %2412 = vmatpush1.bf16.xpose.msra.mxu0 0
    %2413 = vmatprep.subr.bf16.mxu0 0
    %2414 = vmatpush1.bf16.xpose.msra.mxu0 0
    %2415 = vmatprep.subr.bf16.mxu0 0
    %2416 = vmatpush1.bf16.xpose.msra.mxu0 0
    %2417 = vmatprep.subr.bf16.mxu0 0
    %2418 = vmatpush1.bf16.xpose.msra.mxu0 0
    %2419 = vmatprep.subr.bf16.mxu0 0
    %2420 = vmatpush1.bf16.xpose.msra.mxu0 0
    %2421 = vmatprep.subr.bf16.mxu0 0
    %2422 = vmatpush1.bf16.xpose.msra.mxu0 0
    %2423 = vmatprep.subr.bf16.mxu0 0
    %2424 = vmatpush1.bf16.xpose.msra.mxu0 0
    %2425 = vmatprep.subr.bf16.mxu0 0
    %2426 = vmatpush1.bf16.xpose.msra.mxu0 0
    %2427 = vmatprep.subr.bf16.mxu0 0
    %2428 = vmatpush1.bf16.xpose.msra.mxu0 0
    %2429 = vmatprep.subr.bf16.mxu0 0
    %2430 = vmatpush1.bf16.xpose.msra.mxu0 0
    %2431 = vmatprep.subr.bf16.mxu0 0
    %2432 = vmatpush1.bf16.xpose.msra.mxu0 0
    %2433 = vmatprep.subr.bf16.mxu0 0
    %2434 = vmatpush1.bf16.xpose.msra.mxu0 0
    %2435 = vmatprep.subr.bf16.mxu0 0
    %2436 = vmatpush1.bf16.xpose.msra.mxu0 0
    %2437 = vmatprep.subr.bf16.mxu0 0
    %2438 = vmatpush1.bf16.xpose.msra.mxu0 0
    %2439 = vmatprep.mubr.bf16.mxu0 0
    %2440 = vmatmul.mubr.bf16.gmra.mrb[0].mxu0 %v2402
    %v2441 = vpop.f32.mrb[0].mxu0
    %v2442 = vadd.f32 0.0, %v2441
    %v2443 = vpop.f32.mrb[0].mxu0
    %v2444 = vpop.f32.mrb[0].mxu0
    %v2445 = vpop.f32.mrb[0].mxu0
    %2446 = vdwg.mxu0
    %v2447 = vmul.f32 %v2392, 0.35355338
    %v2448 = vmul.f32 %v2442, 0.35355338
    %v2449 = vsel %vm1624, %v2447, -1e+09
    %v2450 = vsel %vm1625, %v2448, -1e+09
    %v2451 = vsel %vm210, %v2449, -inf
    %2452 = vmax.xlane.f32.xlu0 %v2451
    %v2453 = vpop.xlane.xlu0 %2452
    %v2454 = vsel %vm210, %v2450, -inf
    %2455 = vmax.xlane.f32.xlu0 %v2454
    %v2456 = vpop.xlane.xlu0 %2455
    %v2457 = vsub.f32 %v2449, %v2453
    %v2458 = vsub.f32 %v2450, %v2456
    %v2459 = vmul.f32 %v2457, 1.442695
    %v2460 = vpow.pop %v2459
    %v2461 = vmul.f32 %v2458, 1.442695
    %v2462 = vpow.pop %v2461
    %v2463 = vsel %vm210, %v2460, 0.0
    %2464 = vadd.xlane.f32.xlu0 %v2463
    %v2465 = vpop.xlane.xlu0 %2464
    %v2466 = vsel %vm210, %v2462, 0.0
    %2467 = vadd.xlane.f32.xlu0 %v2466
    %v2468 = vpop.xlane.xlu0 %2467
    %v2469 = vrcp.pop %v2465
    %v2470 = vrcp.pop %v2468
    %v2471 = vmul.f32 %v2460, %v2469
    %v2472 = vmul.f32 %v2462, %v2470
    %v2473 = vpack.c.bf16 %v2471, %v2471
    %v2474 = vpack.c.bf16 %v2472, %v2472
    %2475 = vrot.lane.b32.xlu0 %v1518, 72
    %v2476 = vpop.permute.xlu0 %2475
    %v2478 = vsel %vm210, %v2473, 0
    %v2481 = vsel %vm340, %v2476, 0
    %2483 = vmatprep.subr.bf16.mxu0 0
    %2484 = vmatpush1.bf16.msra.mxu0 %v2481
    %2485 = vmatprep.subr.bf16.mxu0 0
    %2486 = vmatpush1.bf16.msra.mxu0 0
    %2487 = vmatprep.subr.bf16.mxu0 0
    %2488 = vmatpush1.bf16.msra.mxu0 0
    %2489 = vmatprep.subr.bf16.mxu0 0
    %2490 = vmatpush1.bf16.msra.mxu0 0
    %2491 = vmatprep.subr.bf16.mxu0 0
    %2492 = vmatpush1.bf16.msra.mxu0 0
    %2493 = vmatprep.subr.bf16.mxu0 0
    %2494 = vmatpush1.bf16.msra.mxu0 0
    %2495 = vmatprep.subr.bf16.mxu0 0
    %2496 = vmatpush1.bf16.msra.mxu0 0
    %2497 = vmatprep.subr.bf16.mxu0 0
    %2498 = vmatpush1.bf16.msra.mxu0 0
    %2499 = vmatprep.subr.bf16.mxu0 0
    %2500 = vmatpush1.bf16.msra.mxu0 0
    %2501 = vmatprep.subr.bf16.mxu0 0
    %2502 = vmatpush1.bf16.msra.mxu0 0
    %2503 = vmatprep.subr.bf16.mxu0 0
    %2504 = vmatpush1.bf16.msra.mxu0 0
    %2505 = vmatprep.subr.bf16.mxu0 0
    %2506 = vmatpush1.bf16.msra.mxu0 0
    %2507 = vmatprep.subr.bf16.mxu0 0
    %2508 = vmatpush1.bf16.msra.mxu0 0
    %2509 = vmatprep.subr.bf16.mxu0 0
    %2510 = vmatpush1.bf16.msra.mxu0 0
    %2511 = vmatprep.subr.bf16.mxu0 0
    %2512 = vmatpush1.bf16.msra.mxu0 0
    %2513 = vmatprep.subr.bf16.mxu0 0
    %2514 = vmatpush1.bf16.msra.mxu0 0
    %2515 = vmatprep.mubr.bf16.mxu0 0
    %2516 = vmatmul.mubr.bf16.gmra.mrb[0].mxu0 %v2478
    %v2517 = vpop.f32.mrb[0].mxu0
    %v2518 = vadd.f32 0.0, %v2517
    %v2519 = vpop.f32.mrb[0].mxu0
    %v2520 = vpop.f32.mrb[0].mxu0
    %v2521 = vpop.f32.mrb[0].mxu0
    %2522 = vdwg.mxu0
    %2523 = vrot.lane.b32.xlu0 %v1519, 72
    %v2524 = vpop.permute.xlu0 %2523
    %v2526 = vsel %vm210, %v2474, 0
    %v2529 = vsel %vm340, %v2524, 0
    %2531 = vmatprep.subr.bf16.mxu0 0
    %2532 = vmatpush1.bf16.msra.mxu0 %v2529
    %2533 = vmatprep.subr.bf16.mxu0 0
    %2534 = vmatpush1.bf16.msra.mxu0 0
    %2535 = vmatprep.subr.bf16.mxu0 0
    %2536 = vmatpush1.bf16.msra.mxu0 0
    %2537 = vmatprep.subr.bf16.mxu0 0
    %2538 = vmatpush1.bf16.msra.mxu0 0
    %2539 = vmatprep.subr.bf16.mxu0 0
    %2540 = vmatpush1.bf16.msra.mxu0 0
    %2541 = vmatprep.subr.bf16.mxu0 0
    %2542 = vmatpush1.bf16.msra.mxu0 0
    %2543 = vmatprep.subr.bf16.mxu0 0
    %2544 = vmatpush1.bf16.msra.mxu0 0
    %2545 = vmatprep.subr.bf16.mxu0 0
    %2546 = vmatpush1.bf16.msra.mxu0 0
    %2547 = vmatprep.subr.bf16.mxu0 0
    %2548 = vmatpush1.bf16.msra.mxu0 0
    %2549 = vmatprep.subr.bf16.mxu0 0
    %2550 = vmatpush1.bf16.msra.mxu0 0
    %2551 = vmatprep.subr.bf16.mxu0 0
    %2552 = vmatpush1.bf16.msra.mxu0 0
    %2553 = vmatprep.subr.bf16.mxu0 0
    %2554 = vmatpush1.bf16.msra.mxu0 0
    %2555 = vmatprep.subr.bf16.mxu0 0
    %2556 = vmatpush1.bf16.msra.mxu0 0
    %2557 = vmatprep.subr.bf16.mxu0 0
    %2558 = vmatpush1.bf16.msra.mxu0 0
    %2559 = vmatprep.subr.bf16.mxu0 0
    %2560 = vmatpush1.bf16.msra.mxu0 0
    %2561 = vmatprep.subr.bf16.mxu0 0
    %2562 = vmatpush1.bf16.msra.mxu0 0
    %2563 = vmatprep.mubr.bf16.mxu0 0
    %2564 = vmatmul.mubr.bf16.gmra.mrb[0].mxu0 %v2526
    %v2565 = vpop.f32.mrb[0].mxu0
    %v2566 = vadd.f32 0.0, %v2565
    %v2567 = vpop.f32.mrb[0].mxu0
    %v2568 = vpop.f32.mrb[0].mxu0
    %v2569 = vpop.f32.mrb[0].mxu0
    %2570 = vdwg.mxu0
    %v2571 = vpack.c.bf16 %v2566, %v2518
    %s2572 = scalar_lea.vmem %s11, 12
    %v2573 = vld [vmem:[%s2572] sm:$0xf]
    %v2575 = vsel %vm210, %v2571, 0
    %v2578 = vsel %vm340, %v2573, 0
    %2580 = vmatprep.subr.bf16.mxu0 0
    %2581 = vmatpush1.bf16.msra.mxu0 %v2578
    %2582 = vmatprep.subr.bf16.mxu0 0
    %2583 = vmatpush1.bf16.msra.mxu0 0
    %2584 = vmatprep.subr.bf16.mxu0 0
    %2585 = vmatpush1.bf16.msra.mxu0 0
    %2586 = vmatprep.subr.bf16.mxu0 0
    %2587 = vmatpush1.bf16.msra.mxu0 0
    %2588 = vmatprep.subr.bf16.mxu0 0
    %2589 = vmatpush1.bf16.msra.mxu0 0
    %2590 = vmatprep.subr.bf16.mxu0 0
    %2591 = vmatpush1.bf16.msra.mxu0 0
    %2592 = vmatprep.subr.bf16.mxu0 0
    %2593 = vmatpush1.bf16.msra.mxu0 0
    %2594 = vmatprep.subr.bf16.mxu0 0
    %2595 = vmatpush1.bf16.msra.mxu0 0
    %2596 = vmatprep.subr.bf16.mxu0 0
    %2597 = vmatpush1.bf16.msra.mxu0 0
    %2598 = vmatprep.subr.bf16.mxu0 0
    %2599 = vmatpush1.bf16.msra.mxu0 0
    %2600 = vmatprep.subr.bf16.mxu0 0
    %2601 = vmatpush1.bf16.msra.mxu0 0
    %2602 = vmatprep.subr.bf16.mxu0 0
    %2603 = vmatpush1.bf16.msra.mxu0 0
    %2604 = vmatprep.subr.bf16.mxu0 0
    %2605 = vmatpush1.bf16.msra.mxu0 0
    %2606 = vmatprep.subr.bf16.mxu0 0
    %2607 = vmatpush1.bf16.msra.mxu0 0
    %2608 = vmatprep.subr.bf16.mxu0 0
    %2609 = vmatpush1.bf16.msra.mxu0 0
    %2610 = vmatprep.subr.bf16.mxu0 0
    %2611 = vmatpush1.bf16.msra.mxu0 0
    %2612 = vmatprep.mubr.bf16.mxu0 0
    %2613 = vmatmul.mubr.bf16.gmra.mrb[0].mxu0 %v2575
    %v2614 = vpop.f32.mrb[0].mxu0
    %v2615 = vadd.f32 0.0, %v2614
    %v2616 = vpop.f32.mrb[0].mxu0
    %v2617 = vpop.f32.mrb[0].mxu0
    %v2618 = vadd.f32 0.0, %v2617
    %v2619 = vpop.f32.mrb[0].mxu0
    %2620 = vdwg.mxu0
    %v2621 = vadd.f32 %v2345, %v2615
    %v2622 = vadd.f32 %v2346, %v2618
    %v2624 = vlaneseq
    %v2625 = vshrl.u32 %v2624, 7
    %v2626 = vsub.s32 0, %v2625
    %v2627 = vrot.slane %v1507, %v2626
    %v2629 = vadd.f32 %v2621, %v2627
    %v2630 = vadd.f32 %v2622, %v2627
    %v2631 = vadd.f32 %v1315, %v2629
    %v2632 = vadd.f32 %v1316, %v2630
    %v2633 = vld [vmem:[%s17 + $0x2] sm:$0x1]
    %v2634 = vld [vmem:[%s18 + $0x2] sm:$0x1]
    %v2635 = vsel %vm74, %v2631, 0.0
    %2636 = vadd.xlane.f32.xlu0 %v2635
    %v2637 = vpop.xlane.xlu0 %2636
    %v2638 = vsel %vm74, %v2632, 0.0
    %2639 = vadd.xlane.f32.xlu0 %v2638
    %v2640 = vpop.xlane.xlu0 %2639
    %v2641 = vmul.f32 %v2637, %v81
    %v2642 = vmul.f32 %v2640, %v81
    %v2643 = vsub.f32 %v2631, %v2641
    %v2644 = vsub.f32 %v2632, %v2642
    %v2645 = vmul.f32 %v2643, %v2643
    %v2646 = vmul.f32 %v2644, %v2644
    %v2647 = vsel %vm74, %v2645, 0.0
    %2648 = vadd.xlane.f32.xlu0 %v2647
    %v2649 = vpop.xlane.xlu0 %2648
    %v2650 = vsel %vm74, %v2646, 0.0
    %2651 = vadd.xlane.f32.xlu0 %v2650
    %v2652 = vpop.xlane.xlu0 %2651
    %v2653 = vmul.f32 %v2649, 0.032258064
    %v2654 = vmul.f32 %v2652, 0.032258064
    %v2655 = vrsqrt.pop %v2653
    %v2656 = vmul.f32 %v2653, %v2655
    %vm2657 = vcmp.eq.f32.partialorder %v2653, inf
    %v2658 = vsel %vm2657, %v2653, %v2656
    %vm2659 = vcmp.eq.f32.partialorder %v2653, 0.0
    %v2660 = vand.u32 %v2653, 2147483648
    %v2661 = vsel %vm2659, %v2660, %v2658
    %v2662 = vrsqrt.pop %v2654
    %v2663 = vmul.f32 %v2654, %v2662
    %vm2664 = vcmp.eq.f32.partialorder %v2654, inf
    %v2665 = vsel %vm2664, %v2654, %v2663
    %vm2666 = vcmp.eq.f32.partialorder %v2654, 0.0
    %v2667 = vand.u32 %v2654, 2147483648
    %v2668 = vsel %vm2666, %v2667, %v2665
    %v2669 = vadd.f32 %v2661, 1e-06
    %v2670 = vadd.f32 %v2668, 1e-06
    %v2671 = vrcp.pop %v2669
    %v2672 = vrcp.pop %v2670
    %v2673 = vlaneseq
    %v2674 = vshrl.u32 %v2673, 7
    %v2675 = vsub.s32 0, %v2674
    %v2676 = vrot.slane %v2633, %v2675
    %v2677 = vmul.f32 %v2676, %v2643
    %v2678 = vmul.f32 %v2676, %v2644
    %v2679 = vmul.f32 %v2677, %v2671
    %v2680 = vmul.f32 %v2678, %v2672
    %v2681 = vlaneseq
    %v2682 = vshrl.u32 %v2681, 7
    %v2683 = vsub.s32 0, %v2682
    %v2684 = vrot.slane %v2634, %v2683
    %v2685 = vadd.f32 %v2679, %v2684
    %v2686 = vadd.f32 %v2680, %v2684
    %v2687 = vpack.c.bf16 %v2686, %v2685
    %v2688 = vld [vmem:[%s13] sm:$0xf]
    %v2689 = vld [vmem:[%s13 + $0x4] sm:$0xf]
    %v2690 = vld [vmem:[%s13 + $0x8] sm:$0xf]
    %v2691 = vld [vmem:[%s13 + $0xc] sm:$0xf]
    %v2692 = vld [vmem:[%s14] sm:$0x1]
    %v2694 = vlaneseq
    %v2695 = vshrl.u32 %v2694, 7
    %v2696 = vsub.s32 0, %v2695
    %v2697 = vrot.slane %v2692, %v2696
    %v2703 = vunpack.c.l.b16 %v2688
    %v2704 = vunpack.c.l.b16 %v2689
    %v2705 = vunpack.c.l.b16 %v2690
    %v2706 = vunpack.c.l.b16 %v2691
    %v2707 = vpack.c.b16 %v2704, %v2703
    %v2708 = vpack.c.b16 %v2706, %v2705
    %v2712 = vsel %vm74, %v2687, 0
    %2714 = vmatprep.subr.bf16.mxu0 0
    %2715 = vmatpush1.bf16.msra.mxu0 %v2707
    %2716 = vmatprep.subr.bf16.mxu0 0
    %2717 = vmatpush1.bf16.msra.mxu0 %v2708
    %2718 = vmatprep.subr.bf16.mxu0 0
    %2719 = vmatpush1.bf16.msra.mxu0 0
    %2720 = vmatprep.subr.bf16.mxu0 0
    %2721 = vmatpush1.bf16.msra.mxu0 0
    %2722 = vmatprep.subr.bf16.mxu0 0
    %2723 = vmatpush1.bf16.msra.mxu0 0
    %2724 = vmatprep.subr.bf16.mxu0 0
    %2725 = vmatpush1.bf16.msra.mxu0 0
    %2726 = vmatprep.subr.bf16.mxu0 0
    %2727 = vmatpush1.bf16.msra.mxu0 0
    %2728 = vmatprep.subr.bf16.mxu0 0
    %2729 = vmatpush1.bf16.msra.mxu0 0
    %2730 = vmatprep.subr.bf16.mxu0 0
    %2731 = vmatpush1.bf16.msra.mxu0 0
    %2732 = vmatprep.subr.bf16.mxu0 0
    %2733 = vmatpush1.bf16.msra.mxu0 0
    %2734 = vmatprep.subr.bf16.mxu0 0
    %2735 = vmatpush1.bf16.msra.mxu0 0
    %2736 = vmatprep.subr.bf16.mxu0 0
    %2737 = vmatpush1.bf16.msra.mxu0 0
    %2738 = vmatprep.subr.bf16.mxu0 0
    %2739 = vmatpush1.bf16.msra.mxu0 0
    %2740 = vmatprep.subr.bf16.mxu0 0
    %2741 = vmatpush1.bf16.msra.mxu0 0
    %2742 = vmatprep.subr.bf16.mxu0 0
    %2743 = vmatpush1.bf16.msra.mxu0 0
    %2744 = vmatprep.subr.bf16.mxu0 0
    %2745 = vmatpush1.bf16.msra.mxu0 0
    %2746 = vmatprep.mubr.bf16.mxu0 0
    %2747 = vmatmul.mubr.bf16.gmra.mrb[0].mxu0 %v2712
    %v2748 = vpop.f32.mrb[0].mxu0
    %v2749 = vadd.f32 %v2697, %v2748
    %v2750 = vpop.f32.mrb[0].mxu0
    %v2751 = vpop.f32.mrb[0].mxu0
    %v2752 = vadd.f32 %v2697, %v2751
    %v2753 = vpop.f32.mrb[0].mxu0
    %2754 = vdwg.mxu0
    %v2755 = vmax.f32 %v2749, 0.0
    %v2756 = vmax.f32 %v2752, 0.0
    %v2757 = vpack.c.bf16 %v2756, %v2755
    %v2758 = vld [vmem:[%s15] sm:$0xf]
    %v2759 = vld [vmem:[%s15 + $0x4] sm:$0xf]
    %v2760 = vld [vmem:[%s15 + $0x8] sm:$0xf]
    %v2761 = vld [vmem:[%s15 + $0xc] sm:$0xf]
    %v2762 = vld [vmem:[%s15 + $0x10] sm:$0xf]
    %v2763 = vld [vmem:[%s15 + $0x14] sm:$0xf]
    %v2764 = vld [vmem:[%s15 + $0x18] sm:$0xf]
    %v2765 = vld [vmem:[%s15 + $0x1c] sm:$0xf]
    %v2766 = vld [vmem:[%s16] sm:$0x1]
    %v2768 = vlaneseq
    %v2769 = vshrl.u32 %v2768, 7
    %v2770 = vsub.s32 0, %v2769
    %v2771 = vrot.slane %v2766, %v2770
    %v2781 = vunpack.c.l.b16 %v2758
    %v2782 = vunpack.c.l.b16 %v2759
    %v2783 = vunpack.c.l.b16 %v2760
    %v2784 = vunpack.c.l.b16 %v2761
    %v2785 = vunpack.c.l.b16 %v2762
    %v2786 = vunpack.c.l.b16 %v2763
    %v2787 = vunpack.c.l.b16 %v2764
    %v2788 = vunpack.c.l.b16 %v2765
    %v2789 = vpack.c.b16 %v2782, %v2781
    %v2790 = vpack.c.b16 %v2784, %v2783
    %v2791 = vpack.c.b16 %v2786, %v2785
    %v2792 = vpack.c.b16 %v2788, %v2787
    %vm2797 = vcmask 523264
    %v2799 = vsel %vm2797, %v2757, 0
    %2801 = vmatprep.subr.bf16.mxu0 0
    %2802 = vmatpush1.bf16.msra.mxu0 %v2789
    %2803 = vmatprep.subr.bf16.mxu0 0
    %2804 = vmatpush1.bf16.msra.mxu0 %v2790
    %2805 = vmatprep.subr.bf16.mxu0 0
    %2806 = vmatpush1.bf16.msra.mxu0 %v2791
    %2807 = vmatprep.subr.bf16.mxu0 0
    %2808 = vmatpush1.bf16.msra.mxu0 %v2792
    %2809 = vmatprep.subr.bf16.mxu0 0
    %2810 = vmatpush1.bf16.msra.mxu0 0
    %2811 = vmatprep.subr.bf16.mxu0 0
    %2812 = vmatpush1.bf16.msra.mxu0 0
    %2813 = vmatprep.subr.bf16.mxu0 0
    %2814 = vmatpush1.bf16.msra.mxu0 0
    %2815 = vmatprep.subr.bf16.mxu0 0
    %2816 = vmatpush1.bf16.msra.mxu0 0
    %2817 = vmatprep.subr.bf16.mxu0 0
    %2818 = vmatpush1.bf16.msra.mxu0 0
    %2819 = vmatprep.subr.bf16.mxu0 0
    %2820 = vmatpush1.bf16.msra.mxu0 0
    %2821 = vmatprep.subr.bf16.mxu0 0
    %2822 = vmatpush1.bf16.msra.mxu0 0
    %2823 = vmatprep.subr.bf16.mxu0 0
    %2824 = vmatpush1.bf16.msra.mxu0 0
    %2825 = vmatprep.subr.bf16.mxu0 0
    %2826 = vmatpush1.bf16.msra.mxu0 0
    %2827 = vmatprep.subr.bf16.mxu0 0
    %2828 = vmatpush1.bf16.msra.mxu0 0
    %2829 = vmatprep.subr.bf16.mxu0 0
    %2830 = vmatpush1.bf16.msra.mxu0 0
    %2831 = vmatprep.subr.bf16.mxu0 0
    %2832 = vmatpush1.bf16.msra.mxu0 0
    %2833 = vmatprep.mubr.bf16.mxu0 0
    %2834 = vmatmul.mubr.bf16.gmra.mrb[0].mxu0 %v2799
    %v2835 = vpop.f32.mrb[0].mxu0
    %v2836 = vadd.f32 %v2771, %v2835
    %v2837 = vpop.f32.mrb[0].mxu0
    %v2838 = vpop.f32.mrb[0].mxu0
    %v2839 = vadd.f32 %v2771, %v2838
    %v2840 = vpop.f32.mrb[0].mxu0
    %2841 = vdwg.mxu0
    %v2842 = vadd.f32 %v2631, %v2836
    %v2843 = vadd.f32 %v2632, %v2839
    %2844 = vst.msk [vmem:[#allocation2] sm:$0xff] %vm74, %v2842
    %2845 = vst.msk [vmem:[#allocation2 + $0x8] sm:$0xff] %vm74, %v2843
    // Predicated region
    $region78: #{decoder_layer.1} parent=1 // pred_check
      _
    $region79: #{decoder_layer.1} parent=1 // pred_check_branch
      %2847 = sbr.rel (0) target = $region81
    $region80: #{decoder_layer.1} parent=1 // pred_region
      %s2849 = ssub.s32 256, 256
      %2850 = vsyncadd [#allocation3], %s2849
      %s2851 = sshll.u32 [#allocation2], 4
      %s2852 = int_to_ptr.vmem [resolvable:$true] %s2851
      %2857 = dma.vmem_to_hbm [thread:$0]  %s2852, 256, %s19, [#allocation3], 128, 128, 8
    $region81: #{decoder_layer.1} parent=1 // pred_fallthru
      _
    // Predicated region
    $region82: #{decoder_layer.1} parent=1 // pred_check
      _
    $region83: #{decoder_layer.1} parent=1 // pred_check_branch
      %2859 = sbr.rel (0) target = $region85
    $region84: #{decoder_layer.1} parent=1 // pred_region
      %2860 = dma.done [#allocation3], 256
    $region85: #{decoder_layer.1} parent=1 // pred_fallthru
      _
    %2861 = vsyncpa [#allocation3], 1

</llo_original>
